<compile_context>
chip_gen: v7x
topology: tpu7x:2x2x1
jax: 0.10.0
libtpu: 0.0.40
codegen_flags: <defaults>
</compile_context>

<pallas_src>
import math
from functools import reduce

import numpy as np
import jax
import jax.numpy as jnp
from jax.experimental import pallas as pl
from jax.experimental.pallas import tpu as pltpu

BN_EPS = 1e-3   # effdet BatchNorm eps

# 3x3 tap offsets excluding the center; used identically by the wrapper (masks)
# and the kernel (roll shifts).  PyTorch/lax tap index k = (dh+1)*3 + (dw+1).
OFFS = ((-1, -1), (-1, 0), (-1, 1), (0, -1), (0, 1), (1, -1), (1, 0), (1, 1))


def _border_masks(H, W):
    """(8, H*W) f32 masks zeroing taps that fall outside the image borders."""
    pos = np.arange(H * W)
    hh, ww = pos // W, pos % W
    rows = []
    for dh, dw in OFFS:
        m = np.ones(H * W, dtype=bool)
        if dh < 0:
            m &= hh >= -dh
        if dh > 0:
            m &= hh < H - dh
        if dw < 0:
            m &= ww >= -dw
        if dw > 0:
            m &= ww < W - dw
        rows.append(m)
    return np.stack(rows).astype(np.float32)


def _make_kernel(R, T, level_ws):
    """Fused kernel: R separable-conv+BN+SiLU repeats + predict, on one lane tile."""
    distinct_ws = sorted(set(level_ws))

    def kernel(lvl_ref, x_ref, mask_ref, dw_ref, pwf_ref, shift_ref,
               pwp_ref, biasp_ref, out_ref):
        # lvl_ref   : SMEM (n_tiles,)      level id of each tile (scalar prefetch)
        # x_ref     : VMEM (C, T)          activations (channels x lane tile)
        # mask_ref  : VMEM (8, T)          precomputed border masks (f32 0/1)
        # dw_ref    : VMEM (C, (R+1)*9)    depthwise weights, col = conv*9 + tap
        # pwf_ref   : VMEM (R, C, C)       pointwise weights, BN scale folded (this level)
        # shift_ref : VMEM (R, C, 1)       folded BN shift (this level)
        # pwp_ref   : VMEM (Cpad, C)       predict pointwise weight (zero padded)
        # biasp_ref : VMEM (Cpad, 1)       predict bias (zero padded)
        # out_ref   : VMEM (Cpad, T)       prediction tile (lane dense, sublane dense)
        x = x_ref[...]
        masks = mask_ref[...]

        def run(Wl):  # Wl is a Python int -> all roll shifts are static
            def depthwise3x3(act, ci):
                base = ci * 9
                out = act * dw_ref[:, base + 4:base + 5]            # center tap
                for mi, (dh, dw) in enumerate(OFFS):
                    k = (dh + 1) * 3 + (dw + 1)
                    shift = (-(dh * Wl + dw)) % T                   # static, >= 0
                    tap = pltpu.roll(act, shift=shift, axis=1)      # XLU lane rotate
                    tap = tap * masks[mi:mi + 1, :]                 # zero-pad borders
                    out = out + tap * dw_ref[:, base + k:base + k + 1]
                return out

            act = x
            for r in range(R):
                y = depthwise3x3(act, r)
                z = jnp.dot(pwf_ref[r], y, preferred_element_type=jnp.float32)  # MXU
                z = z + shift_ref[r]                                 # folded BN shift
                act = z * jax.nn.sigmoid(z)                          # SiLU / Swish
            # predict: depthwise + pointwise + bias, no BN / act
            y = depthwise3x3(act, R)
            z = jnp.dot(pwp_ref[...], y, preferred_element_type=jnp.float32)
            out_ref[...] = (z + biasp_ref[...]).astype(out_ref.dtype)

        if len(distinct_ws) == 1:
            run(distinct_ws[0])                                      # no branching
        else:
            lvl = lvl_ref[pl.program_id(0)]
            for wv in distinct_ws:
                cond = None
                for l, lw in enumerate(level_ws):
                    if lw != wv:
                        continue
                    c = lvl == l
                    cond = c if cond is None else jnp.logical_or(cond, c)
                pl.when(cond)(lambda wv=wv: run(wv))

    return kernel


def headnet_forward(xs_nchw, params):
    """xs_nchw: list of per-level (B, C, H, W) features. Returns list of
    (B, num_outputs*num_anchors, H, W) predictions — same semantics as HeadNet.forward."""
    R, C, _ = params["pw_rep"].shape
    Cpred = params["pw_pred"].shape[0]
    Cpad = ((Cpred + 7) // 8) * 8                     # dense sublane tile for the store
    B = xs_nchw[0].shape[0]
    hw = [(int(x.shape[2]), int(x.shape[3])) for x in xs_nchw]
    Ss = [h * w for h, w in hw]
    L = len(xs_nchw)
    for x in xs_nchw:
        assert x.shape[0] == B and x.shape[1] == C

    # Lane-tile size: multiple of 128 (lane dense) and of every level's S, so a
    # tile always holds whole images of a single level (rolls never need a halo).
    T = reduce(math.lcm, Ss + [128])
    for S in Ss:
        if (B * S) % T != 0:
            raise ValueError(
                f"level size B*S={B * S} not a multiple of tile T={T}; "
                "pad levels to a common S or add halo tiling")

    # ---- tiny parameter prep (O(L*R*C*C), done once by XLA) ----
    # depthwise weights (repeats + predict) packed as one 2-D (C, (R+1)*9) block
    dw_all = jnp.concatenate([params["dw_rep"], params["dw_pred"][None]], axis=0)  # (R+1,C,3,3)
    dw_packed = jnp.transpose(dw_all.reshape(R + 1, C, 9), (1, 0, 2)).reshape(C, (R + 1) * 9)

    # fold BN scale into the pointwise weight rows (per level); keep the shift
    inv_std = jax.lax.rsqrt(params["bn_var"] + BN_EPS)              # (R, L, C)
    scale = params["bn_gamma"] * inv_std                            # (R, L, C)
    shift = params["bn_beta"] - params["bn_mean"] * scale           # (R, L, C)
    pw_fold = params["pw_rep"][None] * jnp.transpose(scale, (1, 0, 2))[:, :, :, None]  # (L,R,C,C)
    shift_arr = jnp.transpose(shift, (1, 0, 2))[..., None].astype(jnp.float32)         # (L,R,C,1)

    # predict weights, zero-padded Cpred -> Cpad
    pwp_pad = jnp.zeros((Cpad, C), jnp.float32).at[:Cpred].set(params["pw_pred"])
    bias_pad = jnp.zeros((Cpad, 1), jnp.float32).at[:Cpred, 0].set(params["bias_pred"])

    # ---- concatenate all (level, image) slabs on the lane axis ----
    x_parts, m_parts, lvl_list = [], [], []
    for l, x in enumerate(xs_nchw):
        (H, W), S = hw[l], Ss[l]
        xl = jnp.transpose(x.reshape(B, C, S), (1, 0, 2)).reshape(C, B * S)
        x_parts.append(xl.astype(jnp.float32))
        m_parts.append(np.tile(_border_masks(H, W), (1, B)))         # per-image masks
        lvl_list.extend([l] * ((B * S) // T))
    x_cat = jnp.concatenate(x_parts, axis=1)                         # (C, N_total)
    masks = jnp.asarray(np.concatenate(m_parts, axis=1))             # (8, N_total)
    lvl_arr = jnp.asarray(np.asarray(lvl_list, np.int32))            # (n_tiles,)
    n_tiles = len(lvl_list)
    N_total = x_cat.shape[1]

    kernel = _make_kernel(R, T, tuple(w for (_, w) in hw))
    out = pl.pallas_call(
        kernel,
        out_shape=jax.ShapeDtypeStruct((Cpad, N_total), jnp.float32),
        grid_spec=pltpu.PrefetchScalarGridSpec(
            num_scalar_prefetch=1,
            grid=(n_tiles,),
            in_specs=[
                pl.BlockSpec((C, T), lambda i, lvl: (0, i)),                   # activations
                pl.BlockSpec((8, T), lambda i, lvl: (0, i)),                   # border masks
                pl.BlockSpec((C, (R + 1) * 9), lambda i, lvl: (0, 0)),         # dw weights
                pl.BlockSpec((None, R, C, C), lambda i, lvl: (lvl[i], 0, 0, 0)),  # pw (BN folded)
                pl.BlockSpec((None, R, C, 1), lambda i, lvl: (lvl[i], 0, 0, 0)),  # BN shift
                pl.BlockSpec((Cpad, C), lambda i, lvl: (0, 0)),                # predict pw
                pl.BlockSpec((Cpad, 1), lambda i, lvl: (0, 0)),                # predict bias
            ],
            out_specs=pl.BlockSpec((Cpad, T), lambda i, lvl: (0, i)),
        ),
        compiler_params=pltpu.CompilerParams(
            dimension_semantics=("parallel",),
            vmem_limit_bytes=32 * 1024 * 1024,
        ),
    )(lvl_arr, x_cat, masks, dw_packed, pw_fold, shift_arr, pwp_pad, bias_pad)

    # split back into per-level NCHW predictions
    outs, off = [], 0
    for l in range(L):
        (H, W), S = hw[l], Ss[l]
        seg = out[:Cpred, off:off + B * S]
        outs.append(jnp.transpose(seg.reshape(Cpred, B, S), (1, 0, 2)).reshape(B, Cpred, H, W))
        off += B * S
    return outs


def _reference(xs_nchw, params):
    """Pure-JAX (XLA conv) reference of the same HeadNet instantiation, NCHW."""
    R = params["pw_rep"].shape[0]
    dn = ("NCHW", "OIHW", "NCHW")
    outs = []
    for level, x in enumerate(xs_nchw):
        C = x.shape[1]
        a = x.astype(jnp.float32)
        for r in range(R):
            dw_k = params["dw_rep"][r][:, None, :, :]
            a = jax.lax.conv_general_dilated(a, dw_k, (1, 1), "SAME",
                                             dimension_numbers=dn,
                                             feature_group_count=C)
            pw_k = params["pw_rep"][r][:, :, None, None]
            a = jax.lax.conv_general_dilated(a, pw_k, (1, 1), "SAME",
                                             dimension_numbers=dn)
            inv_std = jax.lax.rsqrt(params["bn_var"][r, level] + BN_EPS)
            scale = params["bn_gamma"][r, level] * inv_std
            shift = params["bn_beta"][r, level] - params["bn_mean"][r, level] * scale
            a = a * scale[None, :, None, None] + shift[None, :, None, None]
            a = a * jax.nn.sigmoid(a)
        dw_k = params["dw_pred"][:, None, :, :]
        a = jax.lax.conv_general_dilated(a, dw_k, (1, 1), "SAME",
                                         dimension_numbers=dn, feature_group_count=C)
        pw_k = params["pw_pred"][:, :, None, None]
        a = jax.lax.conv_general_dilated(a, pw_k, (1, 1), "SAME",
                                         dimension_numbers=dn)
        a = a + params["bias_pred"][None, :, None, None]
        outs.append(a)
    return outs


def _init_params(key, C, Cpred, R, L):
    ks = jax.random.split(key, 9)

    def n(k, shape, s=0.2):
        return s * jax.random.normal(k, shape, jnp.float32)

    return {
        "dw_rep": n(ks[0], (R, C, 3, 3)),                # shared depthwise 3x3 (repeats)
        "pw_rep": n(ks[1], (R, C, C)),                   # shared pointwise (Cout, Cin)
        "bn_gamma": 1.0 + n(ks[2], (R, L, C), 0.1),      # per-repeat, per-level BN
        "bn_beta": n(ks[3], (R, L, C), 0.1),
        "bn_mean": n(ks[4], (R, L, C), 0.1),
        "bn_var": jax.random.uniform(ks[5], (R, L, C), jnp.float32, 0.5, 1.5),
        "dw_pred": n(ks[6], (C, 3, 3)),                  # predict depthwise
        "pw_pred": n(ks[7], (Cpred, C)),                 # predict pointwise
        "bias_pred": n(ks[8], (Cpred,), 0.1),            # predict bias
    }


if __name__ == "__main__":
    B, C = 2, 32                 # batch, fpn_channels
    R = 3                        # box_class_repeats
    NUM_ANCHORS = 9              # len(aspect_ratios)=3 * num_scales=3
    NUM_OUTPUTS = 4              # e.g. box head
    CPRED = NUM_ANCHORS * NUM_OUTPUTS
    LEVEL_SHAPES = [(16, 16), (8, 16)]   # per-image S multiples of 128 -> lane-dense tiles
    L = len(LEVEL_SHAPES)

    key = jax.random.PRNGKey(0)
    kfeat, kparam = jax.random.split(key)
    feat_keys = jax.random.split(kfeat, L)
    xs = [jax.random.normal(feat_keys[i], (B, C, h, w), jnp.float32)
          for i, (h, w) in enumerate(LEVEL_SHAPES)]
    params = _init_params(kparam, C, CPRED, R, L)

    outs = headnet_forward(xs, params)
    outs = jax.block_until_ready(outs)

    refs = _reference(xs, params)
    for lvl, (o, ref) in enumerate(zip(outs, refs)):
        assert o.shape == (B, CPRED) + LEVEL_SHAPES[lvl], o.shape
        if not jnp.allclose(o, ref, rtol=2e-3, atol=2e-3):
            err = float(jnp.max(jnp.abs(o - ref)))
            raise AssertionError(f"Pallas HeadNet mismatch at level {lvl}: max abs err {err}")

    print("KERNEL_OK")
</pallas_src>

<mosaic_0001>
module attributes {stable_mosaic.version = 11 : i64} {
  func.func @kernel(%arg0: i32, %arg1: memref<3xi32, #tpu.memory_space<smem>>, %arg2: memref<32x256xf32, #tpu.memory_space<vmem>>, %arg3: memref<8x256xf32, #tpu.memory_space<vmem>>, %arg4: memref<32x36xf32, #tpu.memory_space<vmem>>, %arg5: memref<1x3x32x32xf32, #tpu.memory_space<vmem>>, %arg6: memref<1x3x32x1xf32, #tpu.memory_space<vmem>>, %arg7: memref<40x32xf32, #tpu.memory_space<vmem>>, %arg8: memref<40x1xf32, #tpu.memory_space<vmem>>, %arg9: memref<40x256xf32, #tpu.memory_space<vmem>>) attributes {dimension_semantics = [#tpu.dimension_semantics<parallel>], iteration_bounds = array<i64: 3>, scalar_prefetch = 1 : i64, scratch_operands = 0 : i64, tpu.core_type = #tpu.core_type<tc>, window_params = [{transform_indices = @transform_0, window_bounds = array<i64: 32, 256>}, {transform_indices = @transform_1, window_bounds = array<i64: 8, 256>}, {pipeline_mode = #tpu.pipeline_mode<synchronous>, transform_indices = @transform_2, window_bounds = array<i64: 32, 36>}, {transform_indices = @transform_3, window_bounds = array<i64: 1, 3, 32, 32>}, {transform_indices = @transform_4, window_bounds = array<i64: 1, 3, 32, 1>}, {pipeline_mode = #tpu.pipeline_mode<synchronous>, transform_indices = @transform_5, window_bounds = array<i64: 40, 32>}, {pipeline_mode = #tpu.pipeline_mode<synchronous>, transform_indices = @transform_6, window_bounds = array<i64: 40, 1>}, {transform_indices = @transform_7, window_bounds = array<i64: 40, 256>}]} {
    %c0 = arith.constant 0 : index
    %c0_0 = arith.constant 0 : index
    %0 = vector.load %arg2[%c0, %c0_0] : memref<32x256xf32, #tpu.memory_space<vmem>>, vector<32x256xf32>
    %c0_1 = arith.constant 0 : index
    %c0_2 = arith.constant 0 : index
    %1 = vector.load %arg3[%c0_1, %c0_2] : memref<8x256xf32, #tpu.memory_space<vmem>>, vector<8x256xf32>
    %c0_3 = arith.constant 0 : index
    %c4 = arith.constant 4 : index
    %2 = vector.load %arg4[%c0_3, %c4] : memref<32x36xf32, #tpu.memory_space<vmem>>, vector<32x1xf32>
    %3 = vector.broadcast %2 : vector<32x1xf32> to vector<32x256xf32>
    %4 = arith.mulf %0, %3 : vector<32x256xf32>
    %c17_i32 = arith.constant 17 : i32
    %5 = tpu.dynamic_rotate %0 by %c17_i32 dim 1 : vector<32x256xf32>, i32 -> vector<32x256xf32>
    %6 = vector.extract_strided_slice %1 {offsets = [0, 0], sizes = [1, 256], strides = [1, 1]} : vector<8x256xf32> to vector<1x256xf32>
    %7 = vector.broadcast %6 : vector<1x256xf32> to vector<32x256xf32>
    %8 = arith.mulf %5, %7 : vector<32x256xf32>
    %c0_4 = arith.constant 0 : index
    %c0_5 = arith.constant 0 : index
    %9 = vector.load %arg4[%c0_4, %c0_5] : memref<32x36xf32, #tpu.memory_space<vmem>>, vector<32x1xf32>
    %10 = vector.broadcast %9 : vector<32x1xf32> to vector<32x256xf32>
    %11 = arith.mulf %8, %10 : vector<32x256xf32>
    %12 = arith.addf %4, %11 : vector<32x256xf32>
    %c16_i32 = arith.constant 16 : i32
    %13 = tpu.dynamic_rotate %0 by %c16_i32 dim 1 : vector<32x256xf32>, i32 -> vector<32x256xf32>
    %14 = vector.extract_strided_slice %1 {offsets = [1, 0], sizes = [1, 256], strides = [1, 1]} : vector<8x256xf32> to vector<1x256xf32>
    %15 = vector.broadcast %14 : vector<1x256xf32> to vector<32x256xf32>
    %16 = arith.mulf %13, %15 : vector<32x256xf32>
    %c0_6 = arith.constant 0 : index
    %c1 = arith.constant 1 : index
    %17 = vector.load %arg4[%c0_6, %c1] : memref<32x36xf32, #tpu.memory_space<vmem>>, vector<32x1xf32>
    %18 = vector.broadcast %17 : vector<32x1xf32> to vector<32x256xf32>
    %19 = arith.mulf %16, %18 : vector<32x256xf32>
    %20 = arith.addf %12, %19 : vector<32x256xf32>
    %c15_i32 = arith.constant 15 : i32
    %21 = tpu.dynamic_rotate %0 by %c15_i32 dim 1 : vector<32x256xf32>, i32 -> vector<32x256xf32>
    %22 = vector.extract_strided_slice %1 {offsets = [2, 0], sizes = [1, 256], strides = [1, 1]} : vector<8x256xf32> to vector<1x256xf32>
    %23 = vector.broadcast %22 : vector<1x256xf32> to vector<32x256xf32>
    %24 = arith.mulf %21, %23 : vector<32x256xf32>
    %c0_7 = arith.constant 0 : index
    %c2 = arith.constant 2 : index
    %25 = vector.load %arg4[%c0_7, %c2] : memref<32x36xf32, #tpu.memory_space<vmem>>, vector<32x1xf32>
    %26 = vector.broadcast %25 : vector<32x1xf32> to vector<32x256xf32>
    %27 = arith.mulf %24, %26 : vector<32x256xf32>
    %28 = arith.addf %20, %27 : vector<32x256xf32>
    %c1_i32 = arith.constant 1 : i32
    %29 = tpu.dynamic_rotate %0 by %c1_i32 dim 1 : vector<32x256xf32>, i32 -> vector<32x256xf32>
    %30 = vector.extract_strided_slice %1 {offsets = [3, 0], sizes = [1, 256], strides = [1, 1]} : vector<8x256xf32> to vector<1x256xf32>
    %31 = vector.broadcast %30 : vector<1x256xf32> to vector<32x256xf32>
    %32 = arith.mulf %29, %31 : vector<32x256xf32>
    %c0_8 = arith.constant 0 : index
    %c3 = arith.constant 3 : index
    %33 = vector.load %arg4[%c0_8, %c3] : memref<32x36xf32, #tpu.memory_space<vmem>>, vector<32x1xf32>
    %34 = vector.broadcast %33 : vector<32x1xf32> to vector<32x256xf32>
    %35 = arith.mulf %32, %34 : vector<32x256xf32>
    %36 = arith.addf %28, %35 : vector<32x256xf32>
    %c255_i32 = arith.constant 255 : i32
    %37 = tpu.dynamic_rotate %0 by %c255_i32 dim 1 : vector<32x256xf32>, i32 -> vector<32x256xf32>
    %38 = vector.extract_strided_slice %1 {offsets = [4, 0], sizes = [1, 256], strides = [1, 1]} : vector<8x256xf32> to vector<1x256xf32>
    %39 = vector.broadcast %38 : vector<1x256xf32> to vector<32x256xf32>
    %40 = arith.mulf %37, %39 : vector<32x256xf32>
    %c0_9 = arith.constant 0 : index
    %c5 = arith.constant 5 : index
    %41 = vector.load %arg4[%c0_9, %c5] : memref<32x36xf32, #tpu.memory_space<vmem>>, vector<32x1xf32>
    %42 = vector.broadcast %41 : vector<32x1xf32> to vector<32x256xf32>
    %43 = arith.mulf %40, %42 : vector<32x256xf32>
    %44 = arith.addf %36, %43 : vector<32x256xf32>
    %c241_i32 = arith.constant 241 : i32
    %45 = tpu.dynamic_rotate %0 by %c241_i32 dim 1 : vector<32x256xf32>, i32 -> vector<32x256xf32>
    %46 = vector.extract_strided_slice %1 {offsets = [5, 0], sizes = [1, 256], strides = [1, 1]} : vector<8x256xf32> to vector<1x256xf32>
    %47 = vector.broadcast %46 : vector<1x256xf32> to vector<32x256xf32>
    %48 = arith.mulf %45, %47 : vector<32x256xf32>
    %c0_10 = arith.constant 0 : index
    %c6 = arith.constant 6 : index
    %49 = vector.load %arg4[%c0_10, %c6] : memref<32x36xf32, #tpu.memory_space<vmem>>, vector<32x1xf32>
    %50 = vector.broadcast %49 : vector<32x1xf32> to vector<32x256xf32>
    %51 = arith.mulf %48, %50 : vector<32x256xf32>
    %52 = arith.addf %44, %51 : vector<32x256xf32>
    %c240_i32 = arith.constant 240 : i32
    %53 = tpu.dynamic_rotate %0 by %c240_i32 dim 1 : vector<32x256xf32>, i32 -> vector<32x256xf32>
    %54 = vector.extract_strided_slice %1 {offsets = [6, 0], sizes = [1, 256], strides = [1, 1]} : vector<8x256xf32> to vector<1x256xf32>
    %55 = vector.broadcast %54 : vector<1x256xf32> to vector<32x256xf32>
    %56 = arith.mulf %53, %55 : vector<32x256xf32>
    %c0_11 = arith.constant 0 : index
    %c7 = arith.constant 7 : index
    %57 = vector.load %arg4[%c0_11, %c7] : memref<32x36xf32, #tpu.memory_space<vmem>>, vector<32x1xf32>
    %58 = vector.broadcast %57 : vector<32x1xf32> to vector<32x256xf32>
    %59 = arith.mulf %56, %58 : vector<32x256xf32>
    %60 = arith.addf %52, %59 : vector<32x256xf32>
    %c239_i32 = arith.constant 239 : i32
    %61 = tpu.dynamic_rotate %0 by %c239_i32 dim 1 : vector<32x256xf32>, i32 -> vector<32x256xf32>
    %62 = vector.extract_strided_slice %1 {offsets = [7, 0], sizes = [1, 256], strides = [1, 1]} : vector<8x256xf32> to vector<1x256xf32>
    %63 = vector.broadcast %62 : vector<1x256xf32> to vector<32x256xf32>
    %64 = arith.mulf %61, %63 : vector<32x256xf32>
    %c0_12 = arith.constant 0 : index
    %c8 = arith.constant 8 : index
    %65 = vector.load %arg4[%c0_12, %c8] : memref<32x36xf32, #tpu.memory_space<vmem>>, vector<32x1xf32>
    %66 = vector.broadcast %65 : vector<32x1xf32> to vector<32x256xf32>
    %67 = arith.mulf %64, %66 : vector<32x256xf32>
    %68 = arith.addf %60, %67 : vector<32x256xf32>
    %c0_13 = arith.constant 0 : index
    %c0_14 = arith.constant 0 : index
    %c0_15 = arith.constant 0 : index
    %c0_16 = arith.constant 0 : index
    %69 = vector.load %arg5[%c0_13, %c0_14, %c0_15, %c0_16] : memref<1x3x32x32xf32, #tpu.memory_space<vmem>>, vector<1x1x32x32xf32>
    %70 = vector.shape_cast %69 : vector<1x1x32x32xf32> to vector<32x32xf32>
    %cst = arith.constant dense<0.000000e+00> : vector<32x256xf32>
    %71 = tpu.matmul %70, %68, %cst {dimension_numbers = #tpu.dot_dimension_numbers<[1], [0], [0], [1], [0, 0, 1, 1], [], []>} : vector<32x32xf32>, vector<32x256xf32>, vector<32x256xf32> -> vector<32x256xf32>
    %c0_17 = arith.constant 0 : index
    %c0_18 = arith.constant 0 : index
    %c0_19 = arith.constant 0 : index
    %c0_20 = arith.constant 0 : index
    %72 = vector.load %arg6[%c0_17, %c0_18, %c0_19, %c0_20] : memref<1x3x32x1xf32, #tpu.memory_space<vmem>>, vector<1x1x32x1xf32>
    %73 = vector.shape_cast %72 : vector<1x1x32x1xf32> to vector<32x1xf32>
    %74 = vector.broadcast %73 : vector<32x1xf32> to vector<32x256xf32>
    %75 = arith.addf %71, %74 : vector<32x256xf32>
    %76 = arith.negf %75 : vector<32x256xf32>
    %77 = math.exp %76 : vector<32x256xf32>
    %cst_21 = arith.constant 1.000000e+00 : f32
    %78 = vector.broadcast %cst_21 : f32 to vector<32x256xf32>
    %79 = arith.addf %78, %77 : vector<32x256xf32>
    %80 = arith.divf %78, %79 : vector<32x256xf32>
    %81 = arith.mulf %75, %80 : vector<32x256xf32>
    %c0_22 = arith.constant 0 : index
    %c13 = arith.constant 13 : index
    %82 = vector.load %arg4[%c0_22, %c13] : memref<32x36xf32, #tpu.memory_space<vmem>>, vector<32x1xf32>
    %83 = vector.broadcast %82 : vector<32x1xf32> to vector<32x256xf32>
    %84 = arith.mulf %81, %83 : vector<32x256xf32>
    %c17_i32_23 = arith.constant 17 : i32
    %85 = tpu.dynamic_rotate %81 by %c17_i32_23 dim 1 : vector<32x256xf32>, i32 -> vector<32x256xf32>
    %86 = vector.extract_strided_slice %1 {offsets = [0, 0], sizes = [1, 256], strides = [1, 1]} : vector<8x256xf32> to vector<1x256xf32>
    %87 = vector.broadcast %86 : vector<1x256xf32> to vector<32x256xf32>
    %88 = arith.mulf %85, %87 : vector<32x256xf32>
    %c0_24 = arith.constant 0 : index
    %c9 = arith.constant 9 : index
    %89 = vector.load %arg4[%c0_24, %c9] : memref<32x36xf32, #tpu.memory_space<vmem>>, vector<32x1xf32>
    %90 = vector.broadcast %89 : vector<32x1xf32> to vector<32x256xf32>
    %91 = arith.mulf %88, %90 : vector<32x256xf32>
    %92 = arith.addf %84, %91 : vector<32x256xf32>
    %c16_i32_25 = arith.constant 16 : i32
    %93 = tpu.dynamic_rotate %81 by %c16_i32_25 dim 1 : vector<32x256xf32>, i32 -> vector<32x256xf32>
    %94 = vector.extract_strided_slice %1 {offsets = [1, 0], sizes = [1, 256], strides = [1, 1]} : vector<8x256xf32> to vector<1x256xf32>
    %95 = vector.broadcast %94 : vector<1x256xf32> to vector<32x256xf32>
    %96 = arith.mulf %93, %95 : vector<32x256xf32>
    %c0_26 = arith.constant 0 : index
    %c10 = arith.constant 10 : index
    %97 = vector.load %arg4[%c0_26, %c10] : memref<32x36xf32, #tpu.memory_space<vmem>>, vector<32x1xf32>
    %98 = vector.broadcast %97 : vector<32x1xf32> to vector<32x256xf32>
    %99 = arith.mulf %96, %98 : vector<32x256xf32>
    %100 = arith.addf %92, %99 : vector<32x256xf32>
    %c15_i32_27 = arith.constant 15 : i32
    %101 = tpu.dynamic_rotate %81 by %c15_i32_27 dim 1 : vector<32x256xf32>, i32 -> vector<32x256xf32>
    %102 = vector.extract_strided_slice %1 {offsets = [2, 0], sizes = [1, 256], strides = [1, 1]} : vector<8x256xf32> to vector<1x256xf32>
    %103 = vector.broadcast %102 : vector<1x256xf32> to vector<32x256xf32>
    %104 = arith.mulf %101, %103 : vector<32x256xf32>
    %c0_28 = arith.constant 0 : index
    %c11 = arith.constant 11 : index
    %105 = vector.load %arg4[%c0_28, %c11] : memref<32x36xf32, #tpu.memory_space<vmem>>, vector<32x1xf32>
    %106 = vector.broadcast %105 : vector<32x1xf32> to vector<32x256xf32>
    %107 = arith.mulf %104, %106 : vector<32x256xf32>
    %108 = arith.addf %100, %107 : vector<32x256xf32>
    %c1_i32_29 = arith.constant 1 : i32
    %109 = tpu.dynamic_rotate %81 by %c1_i32_29 dim 1 : vector<32x256xf32>, i32 -> vector<32x256xf32>
    %110 = vector.extract_strided_slice %1 {offsets = [3, 0], sizes = [1, 256], strides = [1, 1]} : vector<8x256xf32> to vector<1x256xf32>
    %111 = vector.broadcast %110 : vector<1x256xf32> to vector<32x256xf32>
    %112 = arith.mulf %109, %111 : vector<32x256xf32>
    %c0_30 = arith.constant 0 : index
    %c12 = arith.constant 12 : index
    %113 = vector.load %arg4[%c0_30, %c12] : memref<32x36xf32, #tpu.memory_space<vmem>>, vector<32x1xf32>
    %114 = vector.broadcast %113 : vector<32x1xf32> to vector<32x256xf32>
    %115 = arith.mulf %112, %114 : vector<32x256xf32>
    %116 = arith.addf %108, %115 : vector<32x256xf32>
    %c255_i32_31 = arith.constant 255 : i32
    %117 = tpu.dynamic_rotate %81 by %c255_i32_31 dim 1 : vector<32x256xf32>, i32 -> vector<32x256xf32>
    %118 = vector.extract_strided_slice %1 {offsets = [4, 0], sizes = [1, 256], strides = [1, 1]} : vector<8x256xf32> to vector<1x256xf32>
    %119 = vector.broadcast %118 : vector<1x256xf32> to vector<32x256xf32>
    %120 = arith.mulf %117, %119 : vector<32x256xf32>
    %c0_32 = arith.constant 0 : index
    %c14 = arith.constant 14 : index
    %121 = vector.load %arg4[%c0_32, %c14] : memref<32x36xf32, #tpu.memory_space<vmem>>, vector<32x1xf32>
    %122 = vector.broadcast %121 : vector<32x1xf32> to vector<32x256xf32>
    %123 = arith.mulf %120, %122 : vector<32x256xf32>
    %124 = arith.addf %116, %123 : vector<32x256xf32>
    %c241_i32_33 = arith.constant 241 : i32
    %125 = tpu.dynamic_rotate %81 by %c241_i32_33 dim 1 : vector<32x256xf32>, i32 -> vector<32x256xf32>
    %126 = vector.extract_strided_slice %1 {offsets = [5, 0], sizes = [1, 256], strides = [1, 1]} : vector<8x256xf32> to vector<1x256xf32>
    %127 = vector.broadcast %126 : vector<1x256xf32> to vector<32x256xf32>
    %128 = arith.mulf %125, %127 : vector<32x256xf32>
    %c0_34 = arith.constant 0 : index
    %c15 = arith.constant 15 : index
    %129 = vector.load %arg4[%c0_34, %c15] : memref<32x36xf32, #tpu.memory_space<vmem>>, vector<32x1xf32>
    %130 = vector.broadcast %129 : vector<32x1xf32> to vector<32x256xf32>
    %131 = arith.mulf %128, %130 : vector<32x256xf32>
    %132 = arith.addf %124, %131 : vector<32x256xf32>
    %c240_i32_35 = arith.constant 240 : i32
    %133 = tpu.dynamic_rotate %81 by %c240_i32_35 dim 1 : vector<32x256xf32>, i32 -> vector<32x256xf32>
    %134 = vector.extract_strided_slice %1 {offsets = [6, 0], sizes = [1, 256], strides = [1, 1]} : vector<8x256xf32> to vector<1x256xf32>
    %135 = vector.broadcast %134 : vector<1x256xf32> to vector<32x256xf32>
    %136 = arith.mulf %133, %135 : vector<32x256xf32>
    %c0_36 = arith.constant 0 : index
    %c16 = arith.constant 16 : index
    %137 = vector.load %arg4[%c0_36, %c16] : memref<32x36xf32, #tpu.memory_space<vmem>>, vector<32x1xf32>
    %138 = vector.broadcast %137 : vector<32x1xf32> to vector<32x256xf32>
    %139 = arith.mulf %136, %138 : vector<32x256xf32>
    %140 = arith.addf %132, %139 : vector<32x256xf32>
    %c239_i32_37 = arith.constant 239 : i32
    %141 = tpu.dynamic_rotate %81 by %c239_i32_37 dim 1 : vector<32x256xf32>, i32 -> vector<32x256xf32>
    %142 = vector.extract_strided_slice %1 {offsets = [7, 0], sizes = [1, 256], strides = [1, 1]} : vector<8x256xf32> to vector<1x256xf32>
    %143 = vector.broadcast %142 : vector<1x256xf32> to vector<32x256xf32>
    %144 = arith.mulf %141, %143 : vector<32x256xf32>
    %c0_38 = arith.constant 0 : index
    %c17 = arith.constant 17 : index
    %145 = vector.load %arg4[%c0_38, %c17] : memref<32x36xf32, #tpu.memory_space<vmem>>, vector<32x1xf32>
    %146 = vector.broadcast %145 : vector<32x1xf32> to vector<32x256xf32>
    %147 = arith.mulf %144, %146 : vector<32x256xf32>
    %148 = arith.addf %140, %147 : vector<32x256xf32>
    %c0_39 = arith.constant 0 : index
    %c1_40 = arith.constant 1 : index
    %c0_41 = arith.constant 0 : index
    %c0_42 = arith.constant 0 : index
    %149 = vector.load %arg5[%c0_39, %c1_40, %c0_41, %c0_42] : memref<1x3x32x32xf32, #tpu.memory_space<vmem>>, vector<1x1x32x32xf32>
    %150 = vector.shape_cast %149 : vector<1x1x32x32xf32> to vector<32x32xf32>
    %cst_43 = arith.constant dense<0.000000e+00> : vector<32x256xf32>
    %151 = tpu.matmul %150, %148, %cst_43 {dimension_numbers = #tpu.dot_dimension_numbers<[1], [0], [0], [1], [0, 0, 1, 1], [], []>} : vector<32x32xf32>, vector<32x256xf32>, vector<32x256xf32> -> vector<32x256xf32>
    %c0_44 = arith.constant 0 : index
    %c1_45 = arith.constant 1 : index
    %c0_46 = arith.constant 0 : index
    %c0_47 = arith.constant 0 : index
    %152 = vector.load %arg6[%c0_44, %c1_45, %c0_46, %c0_47] : memref<1x3x32x1xf32, #tpu.memory_space<vmem>>, vector<1x1x32x1xf32>
    %153 = vector.shape_cast %152 : vector<1x1x32x1xf32> to vector<32x1xf32>
    %154 = vector.broadcast %153 : vector<32x1xf32> to vector<32x256xf32>
    %155 = arith.addf %151, %154 : vector<32x256xf32>
    %156 = arith.negf %155 : vector<32x256xf32>
    %157 = math.exp %156 : vector<32x256xf32>
    %cst_48 = arith.constant 1.000000e+00 : f32
    %158 = vector.broadcast %cst_48 : f32 to vector<32x256xf32>
    %159 = arith.addf %158, %157 : vector<32x256xf32>
    %160 = arith.divf %158, %159 : vector<32x256xf32>
    %161 = arith.mulf %155, %160 : vector<32x256xf32>
    %c0_49 = arith.constant 0 : index
    %c22 = arith.constant 22 : index
    %162 = vector.load %arg4[%c0_49, %c22] : memref<32x36xf32, #tpu.memory_space<vmem>>, vector<32x1xf32>
    %163 = vector.broadcast %162 : vector<32x1xf32> to vector<32x256xf32>
    %164 = arith.mulf %161, %163 : vector<32x256xf32>
    %c17_i32_50 = arith.constant 17 : i32
    %165 = tpu.dynamic_rotate %161 by %c17_i32_50 dim 1 : vector<32x256xf32>, i32 -> vector<32x256xf32>
    %166 = vector.extract_strided_slice %1 {offsets = [0, 0], sizes = [1, 256], strides = [1, 1]} : vector<8x256xf32> to vector<1x256xf32>
    %167 = vector.broadcast %166 : vector<1x256xf32> to vector<32x256xf32>
    %168 = arith.mulf %165, %167 : vector<32x256xf32>
    %c0_51 = arith.constant 0 : index
    %c18 = arith.constant 18 : index
    %169 = vector.load %arg4[%c0_51, %c18] : memref<32x36xf32, #tpu.memory_space<vmem>>, vector<32x1xf32>
    %170 = vector.broadcast %169 : vector<32x1xf32> to vector<32x256xf32>
    %171 = arith.mulf %168, %170 : vector<32x256xf32>
    %172 = arith.addf %164, %171 : vector<32x256xf32>
    %c16_i32_52 = arith.constant 16 : i32
    %173 = tpu.dynamic_rotate %161 by %c16_i32_52 dim 1 : vector<32x256xf32>, i32 -> vector<32x256xf32>
    %174 = vector.extract_strided_slice %1 {offsets = [1, 0], sizes = [1, 256], strides = [1, 1]} : vector<8x256xf32> to vector<1x256xf32>
    %175 = vector.broadcast %174 : vector<1x256xf32> to vector<32x256xf32>
    %176 = arith.mulf %173, %175 : vector<32x256xf32>
    %c0_53 = arith.constant 0 : index
    %c19 = arith.constant 19 : index
    %177 = vector.load %arg4[%c0_53, %c19] : memref<32x36xf32, #tpu.memory_space<vmem>>, vector<32x1xf32>
    %178 = vector.broadcast %177 : vector<32x1xf32> to vector<32x256xf32>
    %179 = arith.mulf %176, %178 : vector<32x256xf32>
    %180 = arith.addf %172, %179 : vector<32x256xf32>
    %c15_i32_54 = arith.constant 15 : i32
    %181 = tpu.dynamic_rotate %161 by %c15_i32_54 dim 1 : vector<32x256xf32>, i32 -> vector<32x256xf32>
    %182 = vector.extract_strided_slice %1 {offsets = [2, 0], sizes = [1, 256], strides = [1, 1]} : vector<8x256xf32> to vector<1x256xf32>
    %183 = vector.broadcast %182 : vector<1x256xf32> to vector<32x256xf32>
    %184 = arith.mulf %181, %183 : vector<32x256xf32>
    %c0_55 = arith.constant 0 : index
    %c20 = arith.constant 20 : index
    %185 = vector.load %arg4[%c0_55, %c20] : memref<32x36xf32, #tpu.memory_space<vmem>>, vector<32x1xf32>
    %186 = vector.broadcast %185 : vector<32x1xf32> to vector<32x256xf32>
    %187 = arith.mulf %184, %186 : vector<32x256xf32>
    %188 = arith.addf %180, %187 : vector<32x256xf32>
    %c1_i32_56 = arith.constant 1 : i32
    %189 = tpu.dynamic_rotate %161 by %c1_i32_56 dim 1 : vector<32x256xf32>, i32 -> vector<32x256xf32>
    %190 = vector.extract_strided_slice %1 {offsets = [3, 0], sizes = [1, 256], strides = [1, 1]} : vector<8x256xf32> to vector<1x256xf32>
    %191 = vector.broadcast %190 : vector<1x256xf32> to vector<32x256xf32>
    %192 = arith.mulf %189, %191 : vector<32x256xf32>
    %c0_57 = arith.constant 0 : index
    %c21 = arith.constant 21 : index
    %193 = vector.load %arg4[%c0_57, %c21] : memref<32x36xf32, #tpu.memory_space<vmem>>, vector<32x1xf32>
    %194 = vector.broadcast %193 : vector<32x1xf32> to vector<32x256xf32>
    %195 = arith.mulf %192, %194 : vector<32x256xf32>
    %196 = arith.addf %188, %195 : vector<32x256xf32>
    %c255_i32_58 = arith.constant 255 : i32
    %197 = tpu.dynamic_rotate %161 by %c255_i32_58 dim 1 : vector<32x256xf32>, i32 -> vector<32x256xf32>
    %198 = vector.extract_strided_slice %1 {offsets = [4, 0], sizes = [1, 256], strides = [1, 1]} : vector<8x256xf32> to vector<1x256xf32>
    %199 = vector.broadcast %198 : vector<1x256xf32> to vector<32x256xf32>
    %200 = arith.mulf %197, %199 : vector<32x256xf32>
    %c0_59 = arith.constant 0 : index
    %c23 = arith.constant 23 : index
    %201 = vector.load %arg4[%c0_59, %c23] : memref<32x36xf32, #tpu.memory_space<vmem>>, vector<32x1xf32>
    %202 = vector.broadcast %201 : vector<32x1xf32> to vector<32x256xf32>
    %203 = arith.mulf %200, %202 : vector<32x256xf32>
    %204 = arith.addf %196, %203 : vector<32x256xf32>
    %c241_i32_60 = arith.constant 241 : i32
    %205 = tpu.dynamic_rotate %161 by %c241_i32_60 dim 1 : vector<32x256xf32>, i32 -> vector<32x256xf32>
    %206 = vector.extract_strided_slice %1 {offsets = [5, 0], sizes = [1, 256], strides = [1, 1]} : vector<8x256xf32> to vector<1x256xf32>
    %207 = vector.broadcast %206 : vector<1x256xf32> to vector<32x256xf32>
    %208 = arith.mulf %205, %207 : vector<32x256xf32>
    %c0_61 = arith.constant 0 : index
    %c24 = arith.constant 24 : index
    %209 = vector.load %arg4[%c0_61, %c24] : memref<32x36xf32, #tpu.memory_space<vmem>>, vector<32x1xf32>
    %210 = vector.broadcast %209 : vector<32x1xf32> to vector<32x256xf32>
    %211 = arith.mulf %208, %210 : vector<32x256xf32>
    %212 = arith.addf %204, %211 : vector<32x256xf32>
    %c240_i32_62 = arith.constant 240 : i32
    %213 = tpu.dynamic_rotate %161 by %c240_i32_62 dim 1 : vector<32x256xf32>, i32 -> vector<32x256xf32>
    %214 = vector.extract_strided_slice %1 {offsets = [6, 0], sizes = [1, 256], strides = [1, 1]} : vector<8x256xf32> to vector<1x256xf32>
    %215 = vector.broadcast %214 : vector<1x256xf32> to vector<32x256xf32>
    %216 = arith.mulf %213, %215 : vector<32x256xf32>
    %c0_63 = arith.constant 0 : index
    %c25 = arith.constant 25 : index
    %217 = vector.load %arg4[%c0_63, %c25] : memref<32x36xf32, #tpu.memory_space<vmem>>, vector<32x1xf32>
    %218 = vector.broadcast %217 : vector<32x1xf32> to vector<32x256xf32>
    %219 = arith.mulf %216, %218 : vector<32x256xf32>
    %220 = arith.addf %212, %219 : vector<32x256xf32>
    %c239_i32_64 = arith.constant 239 : i32
    %221 = tpu.dynamic_rotate %161 by %c239_i32_64 dim 1 : vector<32x256xf32>, i32 -> vector<32x256xf32>
    %222 = vector.extract_strided_slice %1 {offsets = [7, 0], sizes = [1, 256], strides = [1, 1]} : vector<8x256xf32> to vector<1x256xf32>
    %223 = vector.broadcast %222 : vector<1x256xf32> to vector<32x256xf32>
    %224 = arith.mulf %221, %223 : vector<32x256xf32>
    %c0_65 = arith.constant 0 : index
    %c26 = arith.constant 26 : index
    %225 = vector.load %arg4[%c0_65, %c26] : memref<32x36xf32, #tpu.memory_space<vmem>>, vector<32x1xf32>
    %226 = vector.broadcast %225 : vector<32x1xf32> to vector<32x256xf32>
    %227 = arith.mulf %224, %226 : vector<32x256xf32>
    %228 = arith.addf %220, %227 : vector<32x256xf32>
    %c0_66 = arith.constant 0 : index
    %c2_67 = arith.constant 2 : index
    %c0_68 = arith.constant 0 : index
    %c0_69 = arith.constant 0 : index
    %229 = vector.load %arg5[%c0_66, %c2_67, %c0_68, %c0_69] : memref<1x3x32x32xf32, #tpu.memory_space<vmem>>, vector<1x1x32x32xf32>
    %230 = vector.shape_cast %229 : vector<1x1x32x32xf32> to vector<32x32xf32>
    %cst_70 = arith.constant dense<0.000000e+00> : vector<32x256xf32>
    %231 = tpu.matmul %230, %228, %cst_70 {dimension_numbers = #tpu.dot_dimension_numbers<[1], [0], [0], [1], [0, 0, 1, 1], [], []>} : vector<32x32xf32>, vector<32x256xf32>, vector<32x256xf32> -> vector<32x256xf32>
    %c0_71 = arith.constant 0 : index
    %c2_72 = arith.constant 2 : index
    %c0_73 = arith.constant 0 : index
    %c0_74 = arith.constant 0 : index
    %232 = vector.load %arg6[%c0_71, %c2_72, %c0_73, %c0_74] : memref<1x3x32x1xf32, #tpu.memory_space<vmem>>, vector<1x1x32x1xf32>
    %233 = vector.shape_cast %232 : vector<1x1x32x1xf32> to vector<32x1xf32>
    %234 = vector.broadcast %233 : vector<32x1xf32> to vector<32x256xf32>
    %235 = arith.addf %231, %234 : vector<32x256xf32>
    %236 = arith.negf %235 : vector<32x256xf32>
    %237 = math.exp %236 : vector<32x256xf32>
    %cst_75 = arith.constant 1.000000e+00 : f32
    %238 = vector.broadcast %cst_75 : f32 to vector<32x256xf32>
    %239 = arith.addf %238, %237 : vector<32x256xf32>
    %240 = arith.divf %238, %239 : vector<32x256xf32>
    %241 = arith.mulf %235, %240 : vector<32x256xf32>
    %c0_76 = arith.constant 0 : index
    %c31 = arith.constant 31 : index
    %242 = vector.load %arg4[%c0_76, %c31] : memref<32x36xf32, #tpu.memory_space<vmem>>, vector<32x1xf32>
    %243 = vector.broadcast %242 : vector<32x1xf32> to vector<32x256xf32>
    %244 = arith.mulf %241, %243 : vector<32x256xf32>
    %c17_i32_77 = arith.constant 17 : i32
    %245 = tpu.dynamic_rotate %241 by %c17_i32_77 dim 1 : vector<32x256xf32>, i32 -> vector<32x256xf32>
    %246 = vector.extract_strided_slice %1 {offsets = [0, 0], sizes = [1, 256], strides = [1, 1]} : vector<8x256xf32> to vector<1x256xf32>
    %247 = vector.broadcast %246 : vector<1x256xf32> to vector<32x256xf32>
    %248 = arith.mulf %245, %247 : vector<32x256xf32>
    %c0_78 = arith.constant 0 : index
    %c27 = arith.constant 27 : index
    %249 = vector.load %arg4[%c0_78, %c27] : memref<32x36xf32, #tpu.memory_space<vmem>>, vector<32x1xf32>
    %250 = vector.broadcast %249 : vector<32x1xf32> to vector<32x256xf32>
    %251 = arith.mulf %248, %250 : vector<32x256xf32>
    %252 = arith.addf %244, %251 : vector<32x256xf32>
    %c16_i32_79 = arith.constant 16 : i32
    %253 = tpu.dynamic_rotate %241 by %c16_i32_79 dim 1 : vector<32x256xf32>, i32 -> vector<32x256xf32>
    %254 = vector.extract_strided_slice %1 {offsets = [1, 0], sizes = [1, 256], strides = [1, 1]} : vector<8x256xf32> to vector<1x256xf32>
    %255 = vector.broadcast %254 : vector<1x256xf32> to vector<32x256xf32>
    %256 = arith.mulf %253, %255 : vector<32x256xf32>
    %c0_80 = arith.constant 0 : index
    %c28 = arith.constant 28 : index
    %257 = vector.load %arg4[%c0_80, %c28] : memref<32x36xf32, #tpu.memory_space<vmem>>, vector<32x1xf32>
    %258 = vector.broadcast %257 : vector<32x1xf32> to vector<32x256xf32>
    %259 = arith.mulf %256, %258 : vector<32x256xf32>
    %260 = arith.addf %252, %259 : vector<32x256xf32>
    %c15_i32_81 = arith.constant 15 : i32
    %261 = tpu.dynamic_rotate %241 by %c15_i32_81 dim 1 : vector<32x256xf32>, i32 -> vector<32x256xf32>
    %262 = vector.extract_strided_slice %1 {offsets = [2, 0], sizes = [1, 256], strides = [1, 1]} : vector<8x256xf32> to vector<1x256xf32>
    %263 = vector.broadcast %262 : vector<1x256xf32> to vector<32x256xf32>
    %264 = arith.mulf %261, %263 : vector<32x256xf32>
    %c0_82 = arith.constant 0 : index
    %c29 = arith.constant 29 : index
    %265 = vector.load %arg4[%c0_82, %c29] : memref<32x36xf32, #tpu.memory_space<vmem>>, vector<32x1xf32>
    %266 = vector.broadcast %265 : vector<32x1xf32> to vector<32x256xf32>
    %267 = arith.mulf %264, %266 : vector<32x256xf32>
    %268 = arith.addf %260, %267 : vector<32x256xf32>
    %c1_i32_83 = arith.constant 1 : i32
    %269 = tpu.dynamic_rotate %241 by %c1_i32_83 dim 1 : vector<32x256xf32>, i32 -> vector<32x256xf32>
    %270 = vector.extract_strided_slice %1 {offsets = [3, 0], sizes = [1, 256], strides = [1, 1]} : vector<8x256xf32> to vector<1x256xf32>
    %271 = vector.broadcast %270 : vector<1x256xf32> to vector<32x256xf32>
    %272 = arith.mulf %269, %271 : vector<32x256xf32>
    %c0_84 = arith.constant 0 : index
    %c30 = arith.constant 30 : index
    %273 = vector.load %arg4[%c0_84, %c30] : memref<32x36xf32, #tpu.memory_space<vmem>>, vector<32x1xf32>
    %274 = vector.broadcast %273 : vector<32x1xf32> to vector<32x256xf32>
    %275 = arith.mulf %272, %274 : vector<32x256xf32>
    %276 = arith.addf %268, %275 : vector<32x256xf32>
    %c255_i32_85 = arith.constant 255 : i32
    %277 = tpu.dynamic_rotate %241 by %c255_i32_85 dim 1 : vector<32x256xf32>, i32 -> vector<32x256xf32>
    %278 = vector.extract_strided_slice %1 {offsets = [4, 0], sizes = [1, 256], strides = [1, 1]} : vector<8x256xf32> to vector<1x256xf32>
    %279 = vector.broadcast %278 : vector<1x256xf32> to vector<32x256xf32>
    %280 = arith.mulf %277, %279 : vector<32x256xf32>
    %c0_86 = arith.constant 0 : index
    %c32 = arith.constant 32 : index
    %281 = vector.load %arg4[%c0_86, %c32] : memref<32x36xf32, #tpu.memory_space<vmem>>, vector<32x1xf32>
    %282 = vector.broadcast %281 : vector<32x1xf32> to vector<32x256xf32>
    %283 = arith.mulf %280, %282 : vector<32x256xf32>
    %284 = arith.addf %276, %283 : vector<32x256xf32>
    %c241_i32_87 = arith.constant 241 : i32
    %285 = tpu.dynamic_rotate %241 by %c241_i32_87 dim 1 : vector<32x256xf32>, i32 -> vector<32x256xf32>
    %286 = vector.extract_strided_slice %1 {offsets = [5, 0], sizes = [1, 256], strides = [1, 1]} : vector<8x256xf32> to vector<1x256xf32>
    %287 = vector.broadcast %286 : vector<1x256xf32> to vector<32x256xf32>
    %288 = arith.mulf %285, %287 : vector<32x256xf32>
    %c0_88 = arith.constant 0 : index
    %c33 = arith.constant 33 : index
    %289 = vector.load %arg4[%c0_88, %c33] : memref<32x36xf32, #tpu.memory_space<vmem>>, vector<32x1xf32>
    %290 = vector.broadcast %289 : vector<32x1xf32> to vector<32x256xf32>
    %291 = arith.mulf %288, %290 : vector<32x256xf32>
    %292 = arith.addf %284, %291 : vector<32x256xf32>
    %c240_i32_89 = arith.constant 240 : i32
    %293 = tpu.dynamic_rotate %241 by %c240_i32_89 dim 1 : vector<32x256xf32>, i32 -> vector<32x256xf32>
    %294 = vector.extract_strided_slice %1 {offsets = [6, 0], sizes = [1, 256], strides = [1, 1]} : vector<8x256xf32> to vector<1x256xf32>
    %295 = vector.broadcast %294 : vector<1x256xf32> to vector<32x256xf32>
    %296 = arith.mulf %293, %295 : vector<32x256xf32>
    %c0_90 = arith.constant 0 : index
    %c34 = arith.constant 34 : index
    %297 = vector.load %arg4[%c0_90, %c34] : memref<32x36xf32, #tpu.memory_space<vmem>>, vector<32x1xf32>
    %298 = vector.broadcast %297 : vector<32x1xf32> to vector<32x256xf32>
    %299 = arith.mulf %296, %298 : vector<32x256xf32>
    %300 = arith.addf %292, %299 : vector<32x256xf32>
    %c239_i32_91 = arith.constant 239 : i32
    %301 = tpu.dynamic_rotate %241 by %c239_i32_91 dim 1 : vector<32x256xf32>, i32 -> vector<32x256xf32>
    %302 = vector.extract_strided_slice %1 {offsets = [7, 0], sizes = [1, 256], strides = [1, 1]} : vector<8x256xf32> to vector<1x256xf32>
    %303 = vector.broadcast %302 : vector<1x256xf32> to vector<32x256xf32>
    %304 = arith.mulf %301, %303 : vector<32x256xf32>
    %c0_92 = arith.constant 0 : index
    %c35 = arith.constant 35 : index
    %305 = vector.load %arg4[%c0_92, %c35] : memref<32x36xf32, #tpu.memory_space<vmem>>, vector<32x1xf32>
    %306 = vector.broadcast %305 : vector<32x1xf32> to vector<32x256xf32>
    %307 = arith.mulf %304, %306 : vector<32x256xf32>
    %308 = arith.addf %300, %307 : vector<32x256xf32>
    %c0_93 = arith.constant 0 : index
    %c0_94 = arith.constant 0 : index
    %309 = vector.load %arg7[%c0_93, %c0_94] : memref<40x32xf32, #tpu.memory_space<vmem>>, vector<40x32xf32>
    %cst_95 = arith.constant dense<0.000000e+00> : vector<40x256xf32>
    %310 = tpu.matmul %309, %308, %cst_95 {dimension_numbers = #tpu.dot_dimension_numbers<[1], [0], [0], [1], [0, 0, 1, 1], [], []>} : vector<40x32xf32>, vector<32x256xf32>, vector<40x256xf32> -> vector<40x256xf32>
    %c0_96 = arith.constant 0 : index
    %c0_97 = arith.constant 0 : index
    %311 = vector.load %arg8[%c0_96, %c0_97] : memref<40x1xf32, #tpu.memory_space<vmem>>, vector<40x1xf32>
    %312 = vector.broadcast %311 : vector<40x1xf32> to vector<40x256xf32>
    %313 = arith.addf %310, %312 : vector<40x256xf32>
    %c0_98 = arith.constant 0 : index
    %c0_99 = arith.constant 0 : index
    %314 = vector.load %arg9[%c0_98, %c0_99] : memref<40x256xf32, #tpu.memory_space<vmem>>, vector<40x256xf32>
    tpu.vector_store %arg9[%c0_98, %c0_99], %313 {strides = array<i32>} : memref<40x256xf32, #tpu.memory_space<vmem>>, vector<40x256xf32>,
    return
  }
  func.func @transform_0(%arg0: i32, %arg1: memref<3xi32, #tpu.memory_space<smem>>) -> (i32, i32) {
    %c0_i32 = arith.constant 0 : i32
    %c0_i32_0 = arith.constant 0 : i32
    return %c0_i32, %arg0 : i32, i32
  }
  func.func @transform_1(%arg0: i32, %arg1: memref<3xi32, #tpu.memory_space<smem>>) -> (i32, i32) {
    %c0_i32 = arith.constant 0 : i32
    %c0_i32_0 = arith.constant 0 : i32
    return %c0_i32, %arg0 : i32, i32
  }
  func.func @transform_2(%arg0: i32, %arg1: memref<3xi32, #tpu.memory_space<smem>>) -> (i32, i32) {
    %c0_i32 = arith.constant 0 : i32
    %c0_i32_0 = arith.constant 0 : i32
    %c0_i32_1 = arith.constant 0 : i32
    return %c0_i32, %c0_i32_0 : i32, i32
  }
  func.func @transform_3(%arg0: i32, %arg1: memref<3xi32, #tpu.memory_space<smem>>) -> (i32, i32, i32, i32) {
    %0 = arith.index_cast %arg0 : i32 to index
    %1 = memref.load %arg1[%0] : memref<3xi32, #tpu.memory_space<smem>>
    %c0_i32 = arith.constant 0 : i32
    %c0_i32_0 = arith.constant 0 : i32
    %c0_i32_1 = arith.constant 0 : i32
    %c0_i32_2 = arith.constant 0 : i32
    return %1, %c0_i32, %c0_i32_0, %c0_i32_1 : i32, i32, i32, i32
  }
  func.func @transform_4(%arg0: i32, %arg1: memref<3xi32, #tpu.memory_space<smem>>) -> (i32, i32, i32, i32) {
    %0 = arith.index_cast %arg0 : i32 to index
    %1 = memref.load %arg1[%0] : memref<3xi32, #tpu.memory_space<smem>>
    %c0_i32 = arith.constant 0 : i32
    %c0_i32_0 = arith.constant 0 : i32
    %c0_i32_1 = arith.constant 0 : i32
    %c0_i32_2 = arith.constant 0 : i32
    return %1, %c0_i32, %c0_i32_0, %c0_i32_1 : i32, i32, i32, i32
  }
  func.func @transform_5(%arg0: i32, %arg1: memref<3xi32, #tpu.memory_space<smem>>) -> (i32, i32) {
    %c0_i32 = arith.constant 0 : i32
    %c0_i32_0 = arith.constant 0 : i32
    %c0_i32_1 = arith.constant 0 : i32
    return %c0_i32, %c0_i32_0 : i32, i32
  }
  func.func @transform_6(%arg0: i32, %arg1: memref<3xi32, #tpu.memory_space<smem>>) -> (i32, i32) {
    %c0_i32 = arith.constant 0 : i32
    %c0_i32_0 = arith.constant 0 : i32
    %c0_i32_1 = arith.constant 0 : i32
    return %c0_i32, %c0_i32_0 : i32, i32
  }
  func.func @transform_7(%arg0: i32, %arg1: memref<3xi32, #tpu.memory_space<smem>>) -> (i32, i32) {
    %c0_i32 = arith.constant 0 : i32
    %c0_i32_0 = arith.constant 0 : i32
    return %c0_i32, %arg0 : i32, i32
  }
}

</mosaic_0001>

<llo_original>
// kernel: tpu_custom_call.1
$region0: #{tpu_custom_call.1}
  #allocation0 [shape = 'u32[]', space=smem, size = 0x4, offset = 0x4, fixed_abs, tag = 'smem constant byte address 0x4 - core index']
  #allocation1 [shape = 'u32[144,128]{1,0:T(1,128)}', space=vmem, size = 0x12000, scoped, tag = 'internal scratch']
  #allocation2 [shape = 's32[1]{0}', space=sflag, size = 0x4, scoped, tag = 'scoped memory for tpu_custom_call.1']
  #allocation3 [shape = 'u8[512]{0}', space=smem, size = 0x200, scoped, tag = 'prefetched SMEM operand 0']
  %s0 = inlined_call_operand.vmem [shape: s32[3], index: 0, kind: input, shape index: {}]
  %s1 = inlined_call_operand.vmem [shape: f32[32,768], index: 1, kind: input, shape index: {}]
  %s2 = inlined_call_operand.vmem [shape: f32[8,768], index: 2, kind: input, shape index: {}]
  %s3 = inlined_call_operand.vmem [shape: f32[32,36], index: 3, kind: input, shape index: {}]
  %s4 = inlined_call_operand.hbm [shape: f32[2,3,32,32], index: 4, kind: input, shape index: {}]
  %s5 = inlined_call_operand.vmem [shape: f32[2,3,32,1], index: 5, kind: input, shape index: {}]
  %s6 = inlined_call_operand.vmem [shape: f32[40,32], index: 6, kind: input, shape index: {}]
  %s7 = inlined_call_operand.vmem [shape: f32[40,1], index: 7, kind: input, shape index: {}]
  %s8 = inlined_call_operand.hbm [shape: f32[40,768], index: 8, kind: output, shape index: {}]
  %s9 = sld [smem:[#allocation0]]
  $region88: #{tpu_custom_call.1} parent=0
    _
  %s11 = ssub.s32 1, %s9
  %s12 = scalar_select 0, %s11, %s9
  %s13 = sshll.u32 %s0, 4
  %s14 = int_to_ptr.vmem [resolvable:$true] %s13
  %16 = dma.vmem_to_smem %s14, 16, [#allocation3], [#allocation2]
  %17 = dma.done [#allocation2], 16
  %18 = sfence
  $region1: #{tpu_custom_call.1} parent=0
    #allocation4 [shape = 'u8[65536]{0}', space=vmem, size = 0x10000, scoped, tag = 'input window, operand 1']
    #allocation5 [shape = 'u8[98304]{0}', space=vmem, size = 0x18000, scoped, tag = 'input window, operand 4']
    #allocation6 [shape = 's32[2]{0}', space=sflag, size = 0x8, scoped, tag = 'scoped memory for tpu_custom_call.1']
    #allocation7 [shape = 's32[2]{0}', space=sflag, size = 0x8, scoped, tag = 'scoped memory for tpu_custom_call.1']
    #allocation8 [shape = 'u8[81920]{0}', space=vmem, size = 0x14000, scoped, tag = 'output window, operand 0']
    %19 = vsyncpa [#allocation6], 0
    %s20 = scalar_lea.sflag [#allocation6], 1
    %21 = vsyncpa %s20, 0
    %22 = vsyncpa [#allocation7], 0
    %s23 = scalar_lea.sflag [#allocation7], 1
    %24 = vsyncpa %s23, 0
    loop: start=0, step=1, limit=5
    $region2: #{tpu_custom_call.1} parent=1 // loop_pre_header
      _
    $region3: #{tpu_custom_call.1} parent=1 // loop_header
      %s26 = sphi 0, %s30
      %p27 = scmp.ge.s32.totalorder %s26, 5
      %s36 = sphi 0, %s38
      %s39 = sphi 0, %s36
      %s40 = sphi 0, %s39
      %s56 = sphi 0, %s40
      %s62 = sphi 0, %s64
      %s65 = sphi 0, %s62
      %s66 = sphi 0, %s65
      %s82 = sphi 0, %s66
      %s86 = sphi 0, %s86
      %s88 = sphi 0, %s86
      %s89 = sphi 0, %s88
      %s103 = sphi 0, %s89
      %s111 = sphi 0, %s113
      %s114 = sphi 0, %s111
      %s115 = sphi 0, %s114
      %s131 = sphi 0, %s115
      %s139 = sphi 0, %s141
      %s142 = sphi 0, %s139
      %s143 = sphi 0, %s142
      %s159 = sphi 0, %s143
      %s163 = sphi 0, %s163
      %s165 = sphi 0, %s163
      %s166 = sphi 0, %s165
      %s180 = sphi 0, %s166
      %s184 = sphi 0, %s184
      %s186 = sphi 0, %s184
      %s187 = sphi 0, %s186
      %s201 = sphi 0, %s187
      %s207 = sphi 0, %s209
      %s210 = sphi 0, %s207
      %s211 = sphi 0, %s210
      %s227 = sphi 0, %s211
    $region4: #{tpu_custom_call.1} parent=1 // loop_header_branch
      %29 = sbr.rel (%p27) target = $region8
    $region5: #{tpu_custom_call.1} parent=1 // loop_body
      %s31 = ssub.s32 %s26, 1
      %s32 = ssub.s32 %s26, 2
      %s33 = sadd.s32 %s26, 1
      %s34 = ssub.s32 %s26, %s33
      %p35 = scmp.eq.s32.totalorder %s34, 0
      %s37 = sadd.s32 %s36, 1
      %s38 = scalar_select %p35, %s36, %s37
      %p41 = pneg %p35
      %p42 = scmp.eq.s32.totalorder %s26, 2
      %p43 = por %p41, %p42
      %p44 = scmp.ne.s32.totalorder %s36, %s39
      %p45 = scmp.eq.s32.totalorder %s26, 0
      %p46 = por %p44, %p45
      %p47 = scmp.ne.s32.totalorder %s36, %s39
      %p48 = scmp.eq.s32.totalorder %s31, 2
      %p49 = por %p47, %p48
      %p50 = scmp.ne.s32.totalorder %s39, %s40
      %p51 = scmp.eq.s32.totalorder %s31, 0
      %p52 = por %p50, %p51
      %p53 = scmp.ne.s32.totalorder %s39, %s40
      %p54 = scmp.eq.s32.totalorder %s32, 2
      %p55 = por %p53, %p54
      %p57 = scmp.ne.s32.totalorder %s40, %s56
      %p58 = scmp.eq.s32.totalorder %s32, 0
      %p59 = por %p57, %p58
      %s60 = ssub.s32 %s26, %s33
      %p61 = scmp.eq.s32.totalorder %s60, 0
      %s63 = sadd.s32 %s62, 1
      %s64 = scalar_select %p61, %s62, %s63
      %p67 = pneg %p61
      %p68 = scmp.eq.s32.totalorder %s26, 2
      %p69 = por %p67, %p68
      %p70 = scmp.ne.s32.totalorder %s62, %s65
      %p71 = scmp.eq.s32.totalorder %s26, 0
      %p72 = por %p70, %p71
      %p73 = scmp.ne.s32.totalorder %s62, %s65
      %p74 = scmp.eq.s32.totalorder %s31, 2
      %p75 = por %p73, %p74
      %p76 = scmp.ne.s32.totalorder %s65, %s66
      %p77 = scmp.eq.s32.totalorder %s31, 0
      %p78 = por %p76, %p77
      %p79 = scmp.ne.s32.totalorder %s65, %s66
      %p80 = scmp.eq.s32.totalorder %s32, 2
      %p81 = por %p79, %p80
      %p83 = scmp.ne.s32.totalorder %s66, %s82
      %p84 = scmp.eq.s32.totalorder %s32, 0
      %p85 = por %p83, %p84
      %s87 = sadd.s32 %s86, 1
      %p90 = scmp.eq.s32.totalorder %s26, 2
      %p91 = scmp.ne.s32.totalorder %s86, %s88
      %p92 = scmp.eq.s32.totalorder %s26, 0
      %p93 = por %p91, %p92
      %p94 = scmp.ne.s32.totalorder %s86, %s88
      %p95 = scmp.eq.s32.totalorder %s31, 2
      %p96 = por %p94, %p95
      %p97 = scmp.ne.s32.totalorder %s88, %s89
      %p98 = scmp.eq.s32.totalorder %s31, 0
      %p99 = por %p97, %p98
      %p100 = scmp.ne.s32.totalorder %s88, %s89
      %p101 = scmp.eq.s32.totalorder %s32, 2
      %p102 = por %p100, %p101
      %p104 = scmp.ne.s32.totalorder %s89, %s103
      %p105 = scmp.eq.s32.totalorder %s32, 0
      %p106 = por %p104, %p105
      %s107 = sld [smem:[#allocation3 + %s26]]
      %s108 = sld [smem:[#allocation3 + %s33]]
      %s109 = ssub.s32 %s107, %s108
      %p110 = scmp.eq.s32.totalorder %s109, 0
      %s112 = sadd.s32 %s111, 1
      %s113 = scalar_select %p110, %s111, %s112
      %p116 = pneg %p110
      %p117 = scmp.eq.s32.totalorder %s26, 2
      %p118 = por %p116, %p117
      %p119 = scmp.ne.s32.totalorder %s111, %s114
      %p120 = scmp.eq.s32.totalorder %s26, 0
      %p121 = por %p119, %p120
      %p122 = scmp.ne.s32.totalorder %s111, %s114
      %p123 = scmp.eq.s32.totalorder %s31, 2
      %p124 = por %p122, %p123
      %p125 = scmp.ne.s32.totalorder %s114, %s115
      %p126 = scmp.eq.s32.totalorder %s31, 0
      %p127 = por %p125, %p126
      %p128 = scmp.ne.s32.totalorder %s114, %s115
      %p129 = scmp.eq.s32.totalorder %s32, 2
      %p130 = por %p128, %p129
      %p132 = scmp.ne.s32.totalorder %s115, %s131
      %p133 = scmp.eq.s32.totalorder %s32, 0
      %p134 = por %p132, %p133
      %s135 = sld [smem:[#allocation3 + %s26]]
      %s136 = sld [smem:[#allocation3 + %s33]]
      %s137 = ssub.s32 %s135, %s136
      %p138 = scmp.eq.s32.totalorder %s137, 0
      %s140 = sadd.s32 %s139, 1
      %s141 = scalar_select %p138, %s139, %s140
      %p144 = pneg %p138
      %p145 = scmp.eq.s32.totalorder %s26, 2
      %p146 = por %p144, %p145
      %p147 = scmp.ne.s32.totalorder %s139, %s142
      %p148 = scmp.eq.s32.totalorder %s26, 0
      %p149 = por %p147, %p148
      %p150 = scmp.ne.s32.totalorder %s139, %s142
      %p151 = scmp.eq.s32.totalorder %s31, 2
      %p152 = por %p150, %p151
      %p153 = scmp.ne.s32.totalorder %s142, %s143
      %p154 = scmp.eq.s32.totalorder %s31, 0
      %p155 = por %p153, %p154
      %p156 = scmp.ne.s32.totalorder %s142, %s143
      %p157 = scmp.eq.s32.totalorder %s32, 2
      %p158 = por %p156, %p157
      %p160 = scmp.ne.s32.totalorder %s143, %s159
      %p161 = scmp.eq.s32.totalorder %s32, 0
      %p162 = por %p160, %p161
      %s164 = sadd.s32 %s163, 1
      %p167 = scmp.eq.s32.totalorder %s26, 2
      %p168 = scmp.ne.s32.totalorder %s163, %s165
      %p169 = scmp.eq.s32.totalorder %s26, 0
      %p170 = por %p168, %p169
      %p171 = scmp.ne.s32.totalorder %s163, %s165
      %p172 = scmp.eq.s32.totalorder %s31, 2
      %p173 = por %p171, %p172
      %p174 = scmp.ne.s32.totalorder %s165, %s166
      %p175 = scmp.eq.s32.totalorder %s31, 0
      %p176 = por %p174, %p175
      %p177 = scmp.ne.s32.totalorder %s165, %s166
      %p178 = scmp.eq.s32.totalorder %s32, 2
      %p179 = por %p177, %p178
      %p181 = scmp.ne.s32.totalorder %s166, %s180
      %p182 = scmp.eq.s32.totalorder %s32, 0
      %p183 = por %p181, %p182
      %s185 = sadd.s32 %s184, 1
      %p188 = scmp.eq.s32.totalorder %s26, 2
      %p189 = scmp.ne.s32.totalorder %s184, %s186
      %p190 = scmp.eq.s32.totalorder %s26, 0
      %p191 = por %p189, %p190
      %p192 = scmp.ne.s32.totalorder %s184, %s186
      %p193 = scmp.eq.s32.totalorder %s31, 2
      %p194 = por %p192, %p193
      %p195 = scmp.ne.s32.totalorder %s186, %s187
      %p196 = scmp.eq.s32.totalorder %s31, 0
      %p197 = por %p195, %p196
      %p198 = scmp.ne.s32.totalorder %s186, %s187
      %p199 = scmp.eq.s32.totalorder %s32, 2
      %p200 = por %p198, %p199
      %p202 = scmp.ne.s32.totalorder %s187, %s201
      %p203 = scmp.eq.s32.totalorder %s32, 0
      %p204 = por %p202, %p203
      %s205 = ssub.s32 %s26, %s33
      %p206 = scmp.eq.s32.totalorder %s205, 0
      %s208 = sadd.s32 %s207, 1
      %s209 = scalar_select %p206, %s207, %s208
      %p212 = pneg %p206
      %p213 = scmp.eq.s32.totalorder %s26, 2
      %p214 = por %p212, %p213
      %p215 = scmp.ne.s32.totalorder %s207, %s210
      %p216 = scmp.eq.s32.totalorder %s26, 0
      %p217 = por %p215, %p216
      %p218 = scmp.ne.s32.totalorder %s207, %s210
      %p219 = scmp.eq.s32.totalorder %s31, 2
      %p220 = por %p218, %p219
      %p221 = scmp.ne.s32.totalorder %s210, %s211
      %p222 = scmp.eq.s32.totalorder %s31, 0
      %p223 = por %p221, %p222
      %p224 = scmp.ne.s32.totalorder %s210, %s211
      %p225 = scmp.eq.s32.totalorder %s32, 2
      %p226 = por %p224, %p225
      %p228 = scmp.ne.s32.totalorder %s211, %s227
      %p229 = scmp.eq.s32.totalorder %s32, 0
      %p230 = por %p228, %p229
      %p231 = scmp.le.s32.totalorder 1, %s26
      %p232 = scmp.lt.s32.totalorder %s26, 4
      %p233 = pnand %p231, %p232
      %p234 = pneg %p233
      // Predicated region
      $region9: #{tpu_custom_call.1} parent=5 // pred_check
        _
      $region10: #{tpu_custom_call.1} parent=5 // pred_check_branch
        %236 = sbr.rel (%p233) target = $region12
      $region11: #{tpu_custom_call.1} parent=5 // pred_region
        %s237 = ssub.s32 %s26, 1
        // Predicated region
        $region13: #{tpu_custom_call.1} parent=11 // pred_check
          %p238 = pneg %p99
        $region14: #{tpu_custom_call.1} parent=11 // pred_check_branch
          %240 = sbr.rel (%p238) target = $region16
        $region15: #{tpu_custom_call.1} parent=11 // pred_region
          _
        $region16: #{tpu_custom_call.1} parent=11 // pred_fallthru
          _
        // Predicated region
        $region17: #{tpu_custom_call.1} parent=11 // pred_check
          %p241 = pneg %p176
        $region18: #{tpu_custom_call.1} parent=11 // pred_check_branch
          %243 = sbr.rel (%p241) target = $region20
        $region19: #{tpu_custom_call.1} parent=11 // pred_region
          _
        $region20: #{tpu_custom_call.1} parent=11 // pred_fallthru
          _
        // Predicated region
        $region21: #{tpu_custom_call.1} parent=11 // pred_check
          %p244 = pneg %p197
        $region22: #{tpu_custom_call.1} parent=11 // pred_check_branch
          %246 = sbr.rel (%p244) target = $region24
        $region23: #{tpu_custom_call.1} parent=11 // pred_region
          _
        $region24: #{tpu_custom_call.1} parent=11 // pred_fallthru
          _
      $region12: #{tpu_custom_call.1} parent=5 // pred_fallthru
        _
      %p247 = scmp.lt.s32.totalorder %s26, 3
      // Predicated region
      $region25: #{tpu_custom_call.1} parent=5 // pred_check
        %p248 = pneg %p247
      $region26: #{tpu_custom_call.1} parent=5 // pred_check_branch
        %250 = sbr.rel (%p248) target = $region28
      $region27: #{tpu_custom_call.1} parent=5 // pred_region
        // Predicated region
        $region29: #{tpu_custom_call.1} parent=27 // pred_check
          %p251 = pneg %p46
        $region30: #{tpu_custom_call.1} parent=27 // pred_check_branch
          %253 = sbr.rel (%p251) target = $region32
        $region31: #{tpu_custom_call.1} parent=27 // pred_region
          %s254 = sand.u32 %s36, 1
          %s255 = sand.u32 %s36, 1
          %s256 = smul.addr %s255, 64
          %s257 = scalar_lea.vmem [#allocation4], %s256
          %s258 = smul.u32 2, %s26
          %s259 = smul.addr %s258, 8
          %s260 = scalar_lea.vmem %s1, %s259
          // Predicated region
          $region33: #{tpu_custom_call.1} parent=31 // pred_check
            _
          $region34: #{tpu_custom_call.1} parent=31 // pred_check_branch
            %262 = sbr.rel (0) target = $region36
          $region35: #{tpu_custom_call.1} parent=31 // pred_region
            // Predicated region
            $region37: #{tpu_custom_call.1} parent=35 // pred_check
              _
            $region38: #{tpu_custom_call.1} parent=35 // pred_check_branch
              %264 = sbr.rel (0) target = $region40
            $region39: #{tpu_custom_call.1} parent=35 // pred_region
              loop: start=0, step=1, limit=1
              $region41: #{tpu_custom_call.1} parent=39 // loop_pre_header
                _
              $region42: #{tpu_custom_call.1} parent=39 // loop_header
                %s266 = sphi 0, %s270
                %p267 = scmp.ge.s32.totalorder %s266, 1
                %s271 = sphi %s260, %s260
                %s272 = sphi %s257, %s257
              $region43: #{tpu_custom_call.1} parent=39 // loop_header_branch
                %269 = sbr.rel (%p267) target = $region47
              $region44: #{tpu_custom_call.1} parent=39 // loop_body
                %v273 = vld [vmem:[%s271] sm:$0xff]
                %274 = vst [vmem:[%s272] sm:$0xff] %v273
                %v275 = vld [vmem:[%s271 + $0x8] sm:$0xff]
                %276 = vst [vmem:[%s272 + $0x8] sm:$0xff] %v275
                %v277 = vld [vmem:[%s271 + $0x30] sm:$0xff]
                %278 = vst [vmem:[%s272 + $0x10] sm:$0xff] %v277
                %v279 = vld [vmem:[%s271 + $0x38] sm:$0xff]
                %280 = vst [vmem:[%s272 + $0x18] sm:$0xff] %v279
                %v281 = vld [vmem:[%s271 + $0x60] sm:$0xff]
                %282 = vst [vmem:[%s272 + $0x20] sm:$0xff] %v281
                %v283 = vld [vmem:[%s271 + $0x68] sm:$0xff]
                %284 = vst [vmem:[%s272 + $0x28] sm:$0xff] %v283
                %v285 = vld [vmem:[%s271 + $0x90] sm:$0xff]
                %286 = vst [vmem:[%s272 + $0x30] sm:$0xff] %v285
                %v287 = vld [vmem:[%s271 + $0x98] sm:$0xff]
                %288 = vst [vmem:[%s272 + $0x38] sm:$0xff] %v287
              $region45: #{tpu_custom_call.1} parent=39 // loop_footer
                %s270 = sadd.s32 1, %s266
              $region46: #{tpu_custom_call.1} parent=39 // loop_footer_branch
                %265 = sbr.rel target = $region42
              $region47: #{tpu_custom_call.1} parent=39 // loop_exit
                _
            $region40: #{tpu_custom_call.1} parent=35 // pred_fallthru
              _
            // Predicated region
            $region48: #{tpu_custom_call.1} parent=35 // pred_check
              _
            $region49: #{tpu_custom_call.1} parent=35 // pred_check_branch
              %290 = sbr.rel target = $region51
            $region50: #{tpu_custom_call.1} parent=35 // pred_region
              _
            $region51: #{tpu_custom_call.1} parent=35 // pred_fallthru
              _
          $region36: #{tpu_custom_call.1} parent=31 // pred_fallthru
            _
          %291 = vnop
        $region32: #{tpu_custom_call.1} parent=27 // pred_fallthru
          _
        // Predicated region
        $region52: #{tpu_custom_call.1} parent=27 // pred_check
          %p292 = pneg %p72
        $region53: #{tpu_custom_call.1} parent=27 // pred_check_branch
          %294 = sbr.rel (%p292) target = $region55
        $region54: #{tpu_custom_call.1} parent=27 // pred_region
          %s295 = smul.u32 2, %s26
          %p296 = scmp.lt.s32.totalorder %s295, 5
          %s297 = scalar_select %p296, %s295, 5
          %s298 = smul.addr %s297, 8
          %s299 = scalar_lea.vmem %s2, %s298
          %s300 = smul.u32 2, %s26
        $region55: #{tpu_custom_call.1} parent=27 // pred_fallthru
          _
        // Predicated region
        $region56: #{tpu_custom_call.1} parent=27 // pred_check
          %p301 = pneg %p121
        $region57: #{tpu_custom_call.1} parent=27 // pred_check_branch
          %303 = sbr.rel (%p301) target = $region59
        $region58: #{tpu_custom_call.1} parent=27 // pred_region
          %s304 = sand.u32 %s111, 1
          %s305 = scalar_lea.sflag [#allocation6], %s304
          %s306 = sand.u32 %s111, 1
          %s307 = smul.addr %s306, 96
          %s308 = scalar_lea.vmem [#allocation5], %s307
          %s309 = sld [smem:[#allocation3 + %s26]]
          %s311 = ssub.s32 1536, 1536
          %312 = vsyncadd %s305, %s311
          %s313 = smul.addr %s309, 12
          %s314 = smul.addr %s313, 128
          %s315 = scalar_lea.hbm %s4, %s314
          %s316 = sshll.u32 %s308, 4
          %s317 = int_to_ptr.vmem [resolvable:$true] %s316
          %322 = dma.hbm_to_vmem [thread:$0]  %s315, 1536, %s317, %s305, 128, 128, 8
        $region59: #{tpu_custom_call.1} parent=27 // pred_fallthru
          _
        // Predicated region
        $region60: #{tpu_custom_call.1} parent=27 // pred_check
          %p323 = pneg %p149
        $region61: #{tpu_custom_call.1} parent=27 // pred_check_branch
          %325 = sbr.rel (%p323) target = $region63
        $region62: #{tpu_custom_call.1} parent=27 // pred_region
          %s326 = sld [smem:[#allocation3 + %s26]]
          %p327 = scmp.lt.s32.totalorder %s326, 1
          %s328 = scalar_select %p327, %s326, 1
          %s329 = smul.addr %s328, 12
          %s330 = smul.addr %s329, 8
          %s331 = scalar_lea.vmem %s5, %s330
          %s332 = sld [smem:[#allocation3 + %s26]]
        $region63: #{tpu_custom_call.1} parent=27 // pred_fallthru
          _
      $region28: #{tpu_custom_call.1} parent=5 // pred_fallthru
        _
      %p333 = scmp.le.s32.totalorder 1, %s26
      %p334 = scmp.lt.s32.totalorder %s26, 4
      %p335 = pnand %p333, %p334
      %p336 = pneg %p335
      // Predicated region
      $region64: #{tpu_custom_call.1} parent=5 // pred_check
        _
      $region65: #{tpu_custom_call.1} parent=5 // pred_check_branch
        %338 = sbr.rel (%p335) target = $region67
      $region66: #{tpu_custom_call.1} parent=5 // pred_region
        %s339 = ssub.s32 %s26, 1
        %s340 = sand.u32 %s39, 1
        %s341 = sand.u32 %s39, 1
        %s342 = smul.addr %s341, 64
        %s343 = scalar_lea.vmem [#allocation4], %s342
        // Predicated region
        $region68: #{tpu_custom_call.1} parent=66 // pred_check
          %p344 = pneg %p52
        $region69: #{tpu_custom_call.1} parent=66 // pred_check_branch
          %346 = sbr.rel (%p344) target = $region71
        $region70: #{tpu_custom_call.1} parent=66 // pred_region
          _
        $region71: #{tpu_custom_call.1} parent=66 // pred_fallthru
          _
        %s347 = sand.u32 %s114, 1
        %s348 = scalar_lea.sflag [#allocation6], %s347
        %s349 = sand.u32 %s114, 1
        %s350 = smul.addr %s349, 96
        %s351 = scalar_lea.vmem [#allocation5], %s350
        // Predicated region
        $region72: #{tpu_custom_call.1} parent=66 // pred_check
          %p352 = pneg %p127
        $region73: #{tpu_custom_call.1} parent=66 // pred_check_branch
          %354 = sbr.rel (%p352) target = $region75
        $region74: #{tpu_custom_call.1} parent=66 // pred_region
          %355 = dma.done %s348, 1536
        $region75: #{tpu_custom_call.1} parent=66 // pred_fallthru
          _
        %s356 = sand.u32 %s39, 1
        %s357 = sand.u32 %s39, 1
        %s358 = smul.addr %s357, 64
        %s359 = scalar_lea.vmem [#allocation4], %s358
        %p360 = pneg %p52
        %p361 = pneg %p49
        %s362 = smul.u32 2, %s31
        %p363 = scmp.lt.s32.totalorder %s362, 5
        %s364 = scalar_select %p363, %s362, 5
        %s365 = smul.addr %s364, 8
        %s366 = scalar_lea.vmem %s2, %s365
        %p367 = pneg %p78
        %p368 = pneg %p75
        %p369 = pneg %p99
        %p370 = pneg %p96
        %s371 = sand.u32 %s114, 1
        %s372 = scalar_lea.sflag [#allocation6], %s371
        %s373 = sand.u32 %s114, 1
        %s374 = smul.addr %s373, 96
        %s375 = scalar_lea.vmem [#allocation5], %s374
        %p376 = pneg %p127
        %p377 = pneg %p124
        %s378 = sld [smem:[#allocation3 + %s31]]
        %p379 = scmp.lt.s32.totalorder %s378, 1
        %s380 = scalar_select %p379, %s378, 1
        %s381 = smul.addr %s380, 12
        %s382 = smul.addr %s381, 8
        %s383 = scalar_lea.vmem %s5, %s382
        %p384 = pneg %p155
        %p385 = pneg %p152
        %p386 = pneg %p176
        %p387 = pneg %p173
        %p388 = pneg %p197
        %p389 = pneg %p194
        %p390 = pneg %p223
        %p391 = pneg %p220
        %s392 = sand.u32 %s210, 1
        %s393 = scalar_lea.sflag [#allocation7], %s392
        %s394 = sand.u32 %s210, 1
        %s395 = smul.addr %s394, 80
        %s396 = scalar_lea.vmem [#allocation8], %s395
        %s397 = smul.u32 2, %s31
        %s398 = smul.u32 2, %s31
        %p399 = scmp.lt.s32.totalorder %s398, 5
        %s400 = scalar_select %p399, %s398, 5
        %s401 = smul.addr %s400, 8
        %s402 = scalar_lea.vmem %s2, %s401
        %s403 = smul.u32 2, %s31
        %s404 = sld [smem:[#allocation3 + %s31]]
        %s405 = sld [smem:[#allocation3 + %s31]]
        %p406 = scmp.lt.s32.totalorder %s405, 1
        %s407 = scalar_select %p406, %s405, 1
        %s408 = smul.addr %s407, 12
        %s409 = smul.addr %s408, 8
        %s410 = scalar_lea.vmem %s5, %s409
        %s411 = sld [smem:[#allocation3 + %s31]]
        %s412 = smul.u32 2, %s31
        %v413 = vld [vmem:[%s343] sm:$0xff]
        %v414 = vld [vmem:[%s343 + $0x8] sm:$0xff]
        %v415 = vld [vmem:[%s343 + $0x10] sm:$0xff]
        %v416 = vld [vmem:[%s343 + $0x18] sm:$0xff]
        %v417 = vld [vmem:[%s343 + $0x20] sm:$0xff]
        %v418 = vld [vmem:[%s343 + $0x28] sm:$0xff]
        %v419 = vld [vmem:[%s343 + $0x30] sm:$0xff]
        %v420 = vld [vmem:[%s343 + $0x38] sm:$0xff]
        %v421 = vld [vmem:[%s402] sm:$0xff]
        %v422 = vld [vmem:[%s402 + $0x8] sm:$0xff]
        %v423 = vld [vmem:[%s3] sm:$0xff]
        %v424 = vld [vmem:[%s3 + $0x8] sm:$0xff]
        %v425 = vld [vmem:[%s3 + $0x10] sm:$0xff]
        %v426 = vld [vmem:[%s3 + $0x18] sm:$0xff]
        %428 = vset.pattern.permute.xlu0 4
        %429 = vperm.xlu0 %428, %v423
        %v430 = vpop.permute.xlu0 %429
        %433 = vset.pattern.permute.xlu0 4
        %434 = vperm.xlu0 %433, %v424
        %v435 = vpop.permute.xlu0 %434
        %438 = vset.pattern.permute.xlu0 4
        %439 = vperm.xlu0 %438, %v425
        %v440 = vpop.permute.xlu0 %439
        %443 = vset.pattern.permute.xlu0 4
        %444 = vperm.xlu0 %443, %v426
        %v445 = vpop.permute.xlu0 %444
        %v447 = vmul.f32 %v413, %v430
        %v448 = vmul.f32 %v414, %v430
        %v449 = vmul.f32 %v415, %v435
        %v450 = vmul.f32 %v416, %v435
        %v451 = vmul.f32 %v417, %v440
        %v452 = vmul.f32 %v418, %v440
        %v453 = vmul.f32 %v419, %v445
        %v454 = vmul.f32 %v420, %v445
        %455 = vrot.lane.b32.xlu0 %v413, 17
        %v456 = vpop.permute.xlu0 %455
        %457 = vrot.lane.b32.xlu0 %v415, 17
        %v458 = vpop.permute.xlu0 %457
        %459 = vrot.lane.b32.xlu0 %v417, 17
        %v460 = vpop.permute.xlu0 %459
        %461 = vrot.lane.b32.xlu0 %v419, 17
        %v462 = vpop.permute.xlu0 %461
        %463 = vrot.lane.b32.xlu0 %v414, 17
        %v464 = vpop.permute.xlu0 %463
        %465 = vrot.lane.b32.xlu0 %v416, 17
        %v466 = vpop.permute.xlu0 %465
        %467 = vrot.lane.b32.xlu0 %v418, 17
        %v468 = vpop.permute.xlu0 %467
        %469 = vrot.lane.b32.xlu0 %v420, 17
        %v470 = vpop.permute.xlu0 %469
        %v471 = vlaneseq
        %v472 = vand.u32 %v471, 127
        %vm473 = vcmp.lt.s32.totalorder %v472, 17
        %v474 = vsel %vm473, %v456, %v464
        %v475 = vsel %vm473, %v458, %v466
        %v476 = vsel %vm473, %v460, %v468
        %v477 = vsel %vm473, %v462, %v470
        %v478 = vsel %vm473, %v464, %v456
        %v479 = vsel %vm473, %v466, %v458
        %v480 = vsel %vm473, %v468, %v460
        %v481 = vsel %vm473, %v470, %v462
        %v482 = vlaneseq
        %v483 = vshrl.u32 %v482, 7
        %v484 = vsub.s32 0, %v483
        %v485 = vrot.slane %v421, %v484
        %v486 = vlaneseq
        %v487 = vshrl.u32 %v486, 7
        %v488 = vsub.s32 0, %v487
        %v489 = vrot.slane %v422, %v488
        %v490 = vmul.f32 %v478, %v485
        %v491 = vmul.f32 %v474, %v489
        %v492 = vmul.f32 %v479, %v485
        %v493 = vmul.f32 %v475, %v489
        %v494 = vmul.f32 %v480, %v485
        %v495 = vmul.f32 %v476, %v489
        %v496 = vmul.f32 %v481, %v485
        %v497 = vmul.f32 %v477, %v489
        %498 = vset.pattern.permute.xlu0 0
        %499 = vperm.xlu0 %498, %v423
        %v500 = vpop.permute.xlu0 %499
        %502 = vset.pattern.permute.xlu0 0
        %503 = vperm.xlu0 %502, %v424
        %v504 = vpop.permute.xlu0 %503
        %506 = vset.pattern.permute.xlu0 0
        %507 = vperm.xlu0 %506, %v425
        %v508 = vpop.permute.xlu0 %507
        %510 = vset.pattern.permute.xlu0 0
        %511 = vperm.xlu0 %510, %v426
        %v512 = vpop.permute.xlu0 %511
        %v514 = vmul.f32 %v490, %v500
        %v515 = vmul.f32 %v491, %v500
        %v516 = vmul.f32 %v492, %v504
        %v517 = vmul.f32 %v493, %v504
        %v518 = vmul.f32 %v494, %v508
        %v519 = vmul.f32 %v495, %v508
        %v520 = vmul.f32 %v496, %v512
        %v521 = vmul.f32 %v497, %v512
        %v522 = vadd.f32 %v447, %v514
        %v523 = vadd.f32 %v448, %v515
        %v524 = vadd.f32 %v449, %v516
        %v525 = vadd.f32 %v450, %v517
        %v526 = vadd.f32 %v451, %v518
        %v527 = vadd.f32 %v452, %v519
        %v528 = vadd.f32 %v453, %v520
        %v529 = vadd.f32 %v454, %v521
        %530 = vrot.lane.b32.xlu0 %v413, 16
        %v531 = vpop.permute.xlu0 %530
        %532 = vrot.lane.b32.xlu0 %v415, 16
        %v533 = vpop.permute.xlu0 %532
        %534 = vrot.lane.b32.xlu0 %v417, 16
        %v535 = vpop.permute.xlu0 %534
        %536 = vrot.lane.b32.xlu0 %v419, 16
        %v537 = vpop.permute.xlu0 %536
        %538 = vrot.lane.b32.xlu0 %v414, 16
        %v539 = vpop.permute.xlu0 %538
        %540 = vrot.lane.b32.xlu0 %v416, 16
        %v541 = vpop.permute.xlu0 %540
        %542 = vrot.lane.b32.xlu0 %v418, 16
        %v543 = vpop.permute.xlu0 %542
        %544 = vrot.lane.b32.xlu0 %v420, 16
        %v545 = vpop.permute.xlu0 %544
        %vm546 = vcmp.lt.s32.totalorder %v472, 16
        %v547 = vsel %vm546, %v531, %v539
        %v548 = vsel %vm546, %v533, %v541
        %v549 = vsel %vm546, %v535, %v543
        %v550 = vsel %vm546, %v537, %v545
        %v551 = vsel %vm546, %v539, %v531
        %v552 = vsel %vm546, %v541, %v533
        %v553 = vsel %vm546, %v543, %v535
        %v554 = vsel %vm546, %v545, %v537
        %v555 = vlaneseq
        %v556 = vshrl.u32 %v555, 7
        %v557 = vsub.s32 1, %v556
        %v558 = vrot.slane %v421, %v557
        %v559 = vlaneseq
        %v560 = vshrl.u32 %v559, 7
        %v561 = vsub.s32 1, %v560
        %v562 = vrot.slane %v422, %v561
        %v563 = vmul.f32 %v551, %v558
        %v564 = vmul.f32 %v547, %v562
        %v565 = vmul.f32 %v552, %v558
        %v566 = vmul.f32 %v548, %v562
        %v567 = vmul.f32 %v553, %v558
        %v568 = vmul.f32 %v549, %v562
        %v569 = vmul.f32 %v554, %v558
        %v570 = vmul.f32 %v550, %v562
        %571 = vset.pattern.permute.xlu0 1
        %572 = vperm.xlu0 %571, %v423
        %v573 = vpop.permute.xlu0 %572
        %575 = vset.pattern.permute.xlu0 1
        %576 = vperm.xlu0 %575, %v424
        %v577 = vpop.permute.xlu0 %576
        %579 = vset.pattern.permute.xlu0 1
        %580 = vperm.xlu0 %579, %v425
        %v581 = vpop.permute.xlu0 %580
        %583 = vset.pattern.permute.xlu0 1
        %584 = vperm.xlu0 %583, %v426
        %v585 = vpop.permute.xlu0 %584
        %v587 = vmul.f32 %v563, %v573
        %v588 = vmul.f32 %v564, %v573
        %v589 = vmul.f32 %v565, %v577
        %v590 = vmul.f32 %v566, %v577
        %v591 = vmul.f32 %v567, %v581
        %v592 = vmul.f32 %v568, %v581
        %v593 = vmul.f32 %v569, %v585
        %v594 = vmul.f32 %v570, %v585
        %v595 = vadd.f32 %v522, %v587
        %v596 = vadd.f32 %v523, %v588
        %v597 = vadd.f32 %v524, %v589
        %v598 = vadd.f32 %v525, %v590
        %v599 = vadd.f32 %v526, %v591
        %v600 = vadd.f32 %v527, %v592
        %v601 = vadd.f32 %v528, %v593
        %v602 = vadd.f32 %v529, %v594
        %603 = vrot.lane.b32.xlu0 %v413, 15
        %v604 = vpop.permute.xlu0 %603
        %605 = vrot.lane.b32.xlu0 %v415, 15
        %v606 = vpop.permute.xlu0 %605
        %607 = vrot.lane.b32.xlu0 %v417, 15
        %v608 = vpop.permute.xlu0 %607
        %609 = vrot.lane.b32.xlu0 %v419, 15
        %v610 = vpop.permute.xlu0 %609
        %611 = vrot.lane.b32.xlu0 %v414, 15
        %v612 = vpop.permute.xlu0 %611
        %613 = vrot.lane.b32.xlu0 %v416, 15
        %v614 = vpop.permute.xlu0 %613
        %615 = vrot.lane.b32.xlu0 %v418, 15
        %v616 = vpop.permute.xlu0 %615
        %617 = vrot.lane.b32.xlu0 %v420, 15
        %v618 = vpop.permute.xlu0 %617
        %vm619 = vcmp.lt.s32.totalorder %v472, 15
        %v620 = vsel %vm619, %v604, %v612
        %v621 = vsel %vm619, %v606, %v614
        %v622 = vsel %vm619, %v608, %v616
        %v623 = vsel %vm619, %v610, %v618
        %v624 = vsel %vm619, %v612, %v604
        %v625 = vsel %vm619, %v614, %v606
        %v626 = vsel %vm619, %v616, %v608
        %v627 = vsel %vm619, %v618, %v610
        %v628 = vlaneseq
        %v629 = vshrl.u32 %v628, 7
        %v630 = vsub.s32 2, %v629
        %v631 = vrot.slane %v421, %v630
        %v632 = vlaneseq
        %v633 = vshrl.u32 %v632, 7
        %v634 = vsub.s32 2, %v633
        %v635 = vrot.slane %v422, %v634
        %v636 = vmul.f32 %v624, %v631
        %v637 = vmul.f32 %v620, %v635
        %v638 = vmul.f32 %v625, %v631
        %v639 = vmul.f32 %v621, %v635
        %v640 = vmul.f32 %v626, %v631
        %v641 = vmul.f32 %v622, %v635
        %v642 = vmul.f32 %v627, %v631
        %v643 = vmul.f32 %v623, %v635
        %644 = vset.pattern.permute.xlu0 2
        %645 = vperm.xlu0 %644, %v423
        %v646 = vpop.permute.xlu0 %645
        %648 = vset.pattern.permute.xlu0 2
        %649 = vperm.xlu0 %648, %v424
        %v650 = vpop.permute.xlu0 %649
        %652 = vset.pattern.permute.xlu0 2
        %653 = vperm.xlu0 %652, %v425
        %v654 = vpop.permute.xlu0 %653
        %656 = vset.pattern.permute.xlu0 2
        %657 = vperm.xlu0 %656, %v426
        %v658 = vpop.permute.xlu0 %657
        %v660 = vmul.f32 %v636, %v646
        %v661 = vmul.f32 %v637, %v646
        %v662 = vmul.f32 %v638, %v650
        %v663 = vmul.f32 %v639, %v650
        %v664 = vmul.f32 %v640, %v654
        %v665 = vmul.f32 %v641, %v654
        %v666 = vmul.f32 %v642, %v658
        %v667 = vmul.f32 %v643, %v658
        %v668 = vadd.f32 %v595, %v660
        %v669 = vadd.f32 %v596, %v661
        %v670 = vadd.f32 %v597, %v662
        %v671 = vadd.f32 %v598, %v663
        %v672 = vadd.f32 %v599, %v664
        %v673 = vadd.f32 %v600, %v665
        %v674 = vadd.f32 %v601, %v666
        %v675 = vadd.f32 %v602, %v667
        %676 = vrot.lane.b32.xlu0 %v413, 1
        %v677 = vpop.permute.xlu0 %676
        %678 = vrot.lane.b32.xlu0 %v415, 1
        %v679 = vpop.permute.xlu0 %678
        %680 = vrot.lane.b32.xlu0 %v417, 1
        %v681 = vpop.permute.xlu0 %680
        %682 = vrot.lane.b32.xlu0 %v419, 1
        %v683 = vpop.permute.xlu0 %682
        %684 = vrot.lane.b32.xlu0 %v414, 1
        %v685 = vpop.permute.xlu0 %684
        %686 = vrot.lane.b32.xlu0 %v416, 1
        %v687 = vpop.permute.xlu0 %686
        %688 = vrot.lane.b32.xlu0 %v418, 1
        %v689 = vpop.permute.xlu0 %688
        %690 = vrot.lane.b32.xlu0 %v420, 1
        %v691 = vpop.permute.xlu0 %690
        %vm692 = vcmp.lt.s32.totalorder %v472, 1
        %v693 = vsel %vm692, %v677, %v685
        %v694 = vsel %vm692, %v679, %v687
        %v695 = vsel %vm692, %v681, %v689
        %v696 = vsel %vm692, %v683, %v691
        %v697 = vsel %vm692, %v685, %v677
        %v698 = vsel %vm692, %v687, %v679
        %v699 = vsel %vm692, %v689, %v681
        %v700 = vsel %vm692, %v691, %v683
        %v701 = vlaneseq
        %v702 = vshrl.u32 %v701, 7
        %v703 = vsub.s32 3, %v702
        %v704 = vrot.slane %v421, %v703
        %v705 = vlaneseq
        %v706 = vshrl.u32 %v705, 7
        %v707 = vsub.s32 3, %v706
        %v708 = vrot.slane %v422, %v707
        %v709 = vmul.f32 %v697, %v704
        %v710 = vmul.f32 %v693, %v708
        %v711 = vmul.f32 %v698, %v704
        %v712 = vmul.f32 %v694, %v708
        %v713 = vmul.f32 %v699, %v704
        %v714 = vmul.f32 %v695, %v708
        %v715 = vmul.f32 %v700, %v704
        %v716 = vmul.f32 %v696, %v708
        %717 = vset.pattern.permute.xlu0 3
        %718 = vperm.xlu0 %717, %v423
        %v719 = vpop.permute.xlu0 %718
        %721 = vset.pattern.permute.xlu0 3
        %722 = vperm.xlu0 %721, %v424
        %v723 = vpop.permute.xlu0 %722
        %725 = vset.pattern.permute.xlu0 3
        %726 = vperm.xlu0 %725, %v425
        %v727 = vpop.permute.xlu0 %726
        %729 = vset.pattern.permute.xlu0 3
        %730 = vperm.xlu0 %729, %v426
        %v731 = vpop.permute.xlu0 %730
        %v733 = vmul.f32 %v709, %v719
        %v734 = vmul.f32 %v710, %v719
        %v735 = vmul.f32 %v711, %v723
        %v736 = vmul.f32 %v712, %v723
        %v737 = vmul.f32 %v713, %v727
        %v738 = vmul.f32 %v714, %v727
        %v739 = vmul.f32 %v715, %v731
        %v740 = vmul.f32 %v716, %v731
        %v741 = vadd.f32 %v668, %v733
        %v742 = vadd.f32 %v669, %v734
        %v743 = vadd.f32 %v670, %v735
        %v744 = vadd.f32 %v671, %v736
        %v745 = vadd.f32 %v672, %v737
        %v746 = vadd.f32 %v673, %v738
        %v747 = vadd.f32 %v674, %v739
        %v748 = vadd.f32 %v675, %v740
        %749 = vrot.lane.b32.xlu0 %v413, 127
        %v750 = vpop.permute.xlu0 %749
        %751 = vrot.lane.b32.xlu0 %v415, 127
        %v752 = vpop.permute.xlu0 %751
        %753 = vrot.lane.b32.xlu0 %v417, 127
        %v754 = vpop.permute.xlu0 %753
        %755 = vrot.lane.b32.xlu0 %v419, 127
        %v756 = vpop.permute.xlu0 %755
        %757 = vrot.lane.b32.xlu0 %v414, 127
        %v758 = vpop.permute.xlu0 %757
        %759 = vrot.lane.b32.xlu0 %v416, 127
        %v760 = vpop.permute.xlu0 %759
        %761 = vrot.lane.b32.xlu0 %v418, 127
        %v762 = vpop.permute.xlu0 %761
        %763 = vrot.lane.b32.xlu0 %v420, 127
        %v764 = vpop.permute.xlu0 %763
        %vm765 = vcmp.lt.s32.totalorder %v472, 127
        %v766 = vsel %vm765, %v750, %v758
        %v767 = vsel %vm765, %v752, %v760
        %v768 = vsel %vm765, %v754, %v762
        %v769 = vsel %vm765, %v756, %v764
        %v770 = vsel %vm765, %v758, %v750
        %v771 = vsel %vm765, %v760, %v752
        %v772 = vsel %vm765, %v762, %v754
        %v773 = vsel %vm765, %v764, %v756
        %v774 = vlaneseq
        %v775 = vshrl.u32 %v774, 7
        %v776 = vsub.s32 4, %v775
        %v777 = vrot.slane %v421, %v776
        %v778 = vlaneseq
        %v779 = vshrl.u32 %v778, 7
        %v780 = vsub.s32 4, %v779
        %v781 = vrot.slane %v422, %v780
        %v782 = vmul.f32 %v766, %v777
        %v783 = vmul.f32 %v770, %v781
        %v784 = vmul.f32 %v767, %v777
        %v785 = vmul.f32 %v771, %v781
        %v786 = vmul.f32 %v768, %v777
        %v787 = vmul.f32 %v772, %v781
        %v788 = vmul.f32 %v769, %v777
        %v789 = vmul.f32 %v773, %v781
        %790 = vset.pattern.permute.xlu0 5
        %791 = vperm.xlu0 %790, %v423
        %v792 = vpop.permute.xlu0 %791
        %794 = vset.pattern.permute.xlu0 5
        %795 = vperm.xlu0 %794, %v424
        %v796 = vpop.permute.xlu0 %795
        %798 = vset.pattern.permute.xlu0 5
        %799 = vperm.xlu0 %798, %v425
        %v800 = vpop.permute.xlu0 %799
        %802 = vset.pattern.permute.xlu0 5
        %803 = vperm.xlu0 %802, %v426
        %v804 = vpop.permute.xlu0 %803
        %v806 = vmul.f32 %v782, %v792
        %v807 = vmul.f32 %v783, %v792
        %v808 = vmul.f32 %v784, %v796
        %v809 = vmul.f32 %v785, %v796
        %v810 = vmul.f32 %v786, %v800
        %v811 = vmul.f32 %v787, %v800
        %v812 = vmul.f32 %v788, %v804
        %v813 = vmul.f32 %v789, %v804
        %v814 = vadd.f32 %v741, %v806
        %v815 = vadd.f32 %v742, %v807
        %v816 = vadd.f32 %v743, %v808
        %v817 = vadd.f32 %v744, %v809
        %v818 = vadd.f32 %v745, %v810
        %v819 = vadd.f32 %v746, %v811
        %v820 = vadd.f32 %v747, %v812
        %v821 = vadd.f32 %v748, %v813
        %822 = vrot.lane.b32.xlu0 %v413, 113
        %v823 = vpop.permute.xlu0 %822
        %824 = vrot.lane.b32.xlu0 %v415, 113
        %v825 = vpop.permute.xlu0 %824
        %826 = vrot.lane.b32.xlu0 %v417, 113
        %v827 = vpop.permute.xlu0 %826
        %828 = vrot.lane.b32.xlu0 %v419, 113
        %v829 = vpop.permute.xlu0 %828
        %830 = vrot.lane.b32.xlu0 %v414, 113
        %v831 = vpop.permute.xlu0 %830
        %832 = vrot.lane.b32.xlu0 %v416, 113
        %v833 = vpop.permute.xlu0 %832
        %834 = vrot.lane.b32.xlu0 %v418, 113
        %v835 = vpop.permute.xlu0 %834
        %836 = vrot.lane.b32.xlu0 %v420, 113
        %v837 = vpop.permute.xlu0 %836
        %vm838 = vcmp.lt.s32.totalorder %v472, 113
        %v839 = vsel %vm838, %v823, %v831
        %v840 = vsel %vm838, %v825, %v833
        %v841 = vsel %vm838, %v827, %v835
        %v842 = vsel %vm838, %v829, %v837
        %v843 = vsel %vm838, %v831, %v823
        %v844 = vsel %vm838, %v833, %v825
        %v845 = vsel %vm838, %v835, %v827
        %v846 = vsel %vm838, %v837, %v829
        %v847 = vlaneseq
        %v848 = vshrl.u32 %v847, 7
        %v849 = vsub.s32 5, %v848
        %v850 = vrot.slane %v421, %v849
        %v851 = vlaneseq
        %v852 = vshrl.u32 %v851, 7
        %v853 = vsub.s32 5, %v852
        %v854 = vrot.slane %v422, %v853
        %v855 = vmul.f32 %v839, %v850
        %v856 = vmul.f32 %v843, %v854
        %v857 = vmul.f32 %v840, %v850
        %v858 = vmul.f32 %v844, %v854
        %v859 = vmul.f32 %v841, %v850
        %v860 = vmul.f32 %v845, %v854
        %v861 = vmul.f32 %v842, %v850
        %v862 = vmul.f32 %v846, %v854
        %863 = vset.pattern.permute.xlu0 6
        %864 = vperm.xlu0 %863, %v423
        %v865 = vpop.permute.xlu0 %864
        %867 = vset.pattern.permute.xlu0 6
        %868 = vperm.xlu0 %867, %v424
        %v869 = vpop.permute.xlu0 %868
        %871 = vset.pattern.permute.xlu0 6
        %872 = vperm.xlu0 %871, %v425
        %v873 = vpop.permute.xlu0 %872
        %875 = vset.pattern.permute.xlu0 6
        %876 = vperm.xlu0 %875, %v426
        %v877 = vpop.permute.xlu0 %876
        %v879 = vmul.f32 %v855, %v865
        %v880 = vmul.f32 %v856, %v865
        %v881 = vmul.f32 %v857, %v869
        %v882 = vmul.f32 %v858, %v869
        %v883 = vmul.f32 %v859, %v873
        %v884 = vmul.f32 %v860, %v873
        %v885 = vmul.f32 %v861, %v877
        %v886 = vmul.f32 %v862, %v877
        %v887 = vadd.f32 %v814, %v879
        %v888 = vadd.f32 %v815, %v880
        %v889 = vadd.f32 %v816, %v881
        %v890 = vadd.f32 %v817, %v882
        %v891 = vadd.f32 %v818, %v883
        %v892 = vadd.f32 %v819, %v884
        %v893 = vadd.f32 %v820, %v885
        %v894 = vadd.f32 %v821, %v886
        %895 = vrot.lane.b32.xlu0 %v413, 112
        %v896 = vpop.permute.xlu0 %895
        %897 = vrot.lane.b32.xlu0 %v415, 112
        %v898 = vpop.permute.xlu0 %897
        %899 = vrot.lane.b32.xlu0 %v417, 112
        %v900 = vpop.permute.xlu0 %899
        %901 = vrot.lane.b32.xlu0 %v419, 112
        %v902 = vpop.permute.xlu0 %901
        %903 = vrot.lane.b32.xlu0 %v414, 112
        %v904 = vpop.permute.xlu0 %903
        %905 = vrot.lane.b32.xlu0 %v416, 112
        %v906 = vpop.permute.xlu0 %905
        %907 = vrot.lane.b32.xlu0 %v418, 112
        %v908 = vpop.permute.xlu0 %907
        %909 = vrot.lane.b32.xlu0 %v420, 112
        %v910 = vpop.permute.xlu0 %909
        %vm911 = vcmp.lt.s32.totalorder %v472, 112
        %v912 = vsel %vm911, %v896, %v904
        %v913 = vsel %vm911, %v898, %v906
        %v914 = vsel %vm911, %v900, %v908
        %v915 = vsel %vm911, %v902, %v910
        %v916 = vsel %vm911, %v904, %v896
        %v917 = vsel %vm911, %v906, %v898
        %v918 = vsel %vm911, %v908, %v900
        %v919 = vsel %vm911, %v910, %v902
        %v920 = vlaneseq
        %v921 = vshrl.u32 %v920, 7
        %v922 = vsub.s32 6, %v921
        %v923 = vrot.slane %v421, %v922
        %v924 = vlaneseq
        %v925 = vshrl.u32 %v924, 7
        %v926 = vsub.s32 6, %v925
        %v927 = vrot.slane %v422, %v926
        %v928 = vmul.f32 %v912, %v923
        %v929 = vmul.f32 %v916, %v927
        %v930 = vmul.f32 %v913, %v923
        %v931 = vmul.f32 %v917, %v927
        %v932 = vmul.f32 %v914, %v923
        %v933 = vmul.f32 %v918, %v927
        %v934 = vmul.f32 %v915, %v923
        %v935 = vmul.f32 %v919, %v927
        %936 = vset.pattern.permute.xlu0 7
        %937 = vperm.xlu0 %936, %v423
        %v938 = vpop.permute.xlu0 %937
        %940 = vset.pattern.permute.xlu0 7
        %941 = vperm.xlu0 %940, %v424
        %v942 = vpop.permute.xlu0 %941
        %944 = vset.pattern.permute.xlu0 7
        %945 = vperm.xlu0 %944, %v425
        %v946 = vpop.permute.xlu0 %945
        %948 = vset.pattern.permute.xlu0 7
        %949 = vperm.xlu0 %948, %v426
        %v950 = vpop.permute.xlu0 %949
        %v952 = vmul.f32 %v928, %v938
        %v953 = vmul.f32 %v929, %v938
        %v954 = vmul.f32 %v930, %v942
        %v955 = vmul.f32 %v931, %v942
        %v956 = vmul.f32 %v932, %v946
        %v957 = vmul.f32 %v933, %v946
        %v958 = vmul.f32 %v934, %v950
        %v959 = vmul.f32 %v935, %v950
        %v960 = vadd.f32 %v887, %v952
        %v961 = vadd.f32 %v888, %v953
        %v962 = vadd.f32 %v889, %v954
        %v963 = vadd.f32 %v890, %v955
        %v964 = vadd.f32 %v891, %v956
        %v965 = vadd.f32 %v892, %v957
        %v966 = vadd.f32 %v893, %v958
        %v967 = vadd.f32 %v894, %v959
        %968 = vrot.lane.b32.xlu0 %v413, 111
        %v969 = vpop.permute.xlu0 %968
        %970 = vrot.lane.b32.xlu0 %v415, 111
        %v971 = vpop.permute.xlu0 %970
        %972 = vrot.lane.b32.xlu0 %v417, 111
        %v973 = vpop.permute.xlu0 %972
        %974 = vrot.lane.b32.xlu0 %v419, 111
        %v975 = vpop.permute.xlu0 %974
        %976 = vrot.lane.b32.xlu0 %v414, 111
        %v977 = vpop.permute.xlu0 %976
        %978 = vrot.lane.b32.xlu0 %v416, 111
        %v979 = vpop.permute.xlu0 %978
        %980 = vrot.lane.b32.xlu0 %v418, 111
        %v981 = vpop.permute.xlu0 %980
        %982 = vrot.lane.b32.xlu0 %v420, 111
        %v983 = vpop.permute.xlu0 %982
        %vm984 = vcmp.lt.s32.totalorder %v472, 111
        %v985 = vsel %vm984, %v969, %v977
        %v986 = vsel %vm984, %v971, %v979
        %v987 = vsel %vm984, %v973, %v981
        %v988 = vsel %vm984, %v975, %v983
        %v989 = vsel %vm984, %v977, %v969
        %v990 = vsel %vm984, %v979, %v971
        %v991 = vsel %vm984, %v981, %v973
        %v992 = vsel %vm984, %v983, %v975
        %v993 = vlaneseq
        %v994 = vshrl.u32 %v993, 7
        %v995 = vsub.s32 7, %v994
        %v996 = vrot.slane %v421, %v995
        %v997 = vlaneseq
        %v998 = vshrl.u32 %v997, 7
        %v999 = vsub.s32 7, %v998
        %v1000 = vrot.slane %v422, %v999
        %v1001 = vmul.f32 %v985, %v996
        %v1002 = vmul.f32 %v989, %v1000
        %v1003 = vmul.f32 %v986, %v996
        %v1004 = vmul.f32 %v990, %v1000
        %v1005 = vmul.f32 %v987, %v996
        %v1006 = vmul.f32 %v991, %v1000
        %v1007 = vmul.f32 %v988, %v996
        %v1008 = vmul.f32 %v992, %v1000
        %1009 = vset.pattern.permute.xlu0 8
        %1010 = vperm.xlu0 %1009, %v423
        %v1011 = vpop.permute.xlu0 %1010
        %1013 = vset.pattern.permute.xlu0 8
        %1014 = vperm.xlu0 %1013, %v424
        %v1015 = vpop.permute.xlu0 %1014
        %1017 = vset.pattern.permute.xlu0 8
        %1018 = vperm.xlu0 %1017, %v425
        %v1019 = vpop.permute.xlu0 %1018
        %1021 = vset.pattern.permute.xlu0 8
        %1022 = vperm.xlu0 %1021, %v426
        %v1023 = vpop.permute.xlu0 %1022
        %v1025 = vmul.f32 %v1001, %v1011
        %v1026 = vmul.f32 %v1002, %v1011
        %v1027 = vmul.f32 %v1003, %v1015
        %v1028 = vmul.f32 %v1004, %v1015
        %v1029 = vmul.f32 %v1005, %v1019
        %v1030 = vmul.f32 %v1006, %v1019
        %v1031 = vmul.f32 %v1007, %v1023
        %v1032 = vmul.f32 %v1008, %v1023
        %v1033 = vadd.f32 %v960, %v1025
        %v1034 = vadd.f32 %v961, %v1026
        %v1035 = vadd.f32 %v962, %v1027
        %v1036 = vadd.f32 %v963, %v1028
        %v1037 = vadd.f32 %v964, %v1029
        %v1038 = vadd.f32 %v965, %v1030
        %v1039 = vadd.f32 %v966, %v1031
        %v1040 = vadd.f32 %v967, %v1032
        %v1041 = vld [vmem:[%s351] sm:$0xff]
        %v1042 = vld [vmem:[%s351 + $0x8] sm:$0xff]
        %v1043 = vld [vmem:[%s351 + $0x10] sm:$0xff]
        %v1044 = vld [vmem:[%s351 + $0x18] sm:$0xff]
        %v1045 = vld [vmem:[%s410] sm:$0xff]
        %v1046 = vld [vmem:[%s410 + $0x8] sm:$0xff]
        %v1047 = vld [vmem:[%s410 + $0x10] sm:$0xff]
        %v1048 = vld [vmem:[%s410 + $0x18] sm:$0xff]
        %1050 = vset.pattern.permute.xlu0 0
        %1051 = vperm.xlu0 %1050, %v1045
        %v1052 = vpop.permute.xlu0 %1051
        %1055 = vset.pattern.permute.xlu0 0
        %1056 = vperm.xlu0 %1055, %v1046
        %v1057 = vpop.permute.xlu0 %1056
        %1060 = vset.pattern.permute.xlu0 0
        %1061 = vperm.xlu0 %1060, %v1047
        %v1062 = vpop.permute.xlu0 %1061
        %1065 = vset.pattern.permute.xlu0 0
        %1066 = vperm.xlu0 %1065, %v1048
        %v1067 = vpop.permute.xlu0 %1066
        %vm1069 = vcmask 261120
        %v1071 = vsel %vm1069, %v1041, 0
        %v1074 = vsel %vm1069, %v1042, 0
        %v1077 = vsel %vm1069, %v1043, 0
        %v1080 = vsel %vm1069, %v1044, 0
        %1082 = vmatprep.subr.mxu0 %v1034
        %1083 = vmatpush1.msra.mxu0 %v1033
        %1084 = vmatprep.subr.mxu0 %v1036
        %1085 = vmatpush1.msra.mxu0 %v1035
        %1086 = vmatprep.subr.mxu0 %v1038
        %1087 = vmatpush1.msra.mxu0 %v1037
        %1088 = vmatprep.subr.mxu0 %v1040
        %1089 = vmatpush1.msra.mxu0 %v1039
        %1090 = vmatprep.subr.mxu0 0.0
        %1091 = vmatpush1.msra.mxu0 0.0
        %1092 = vmatprep.subr.mxu0 0.0
        %1093 = vmatpush1.msra.mxu0 0.0
        %1094 = vmatprep.subr.mxu0 0.0
        %1095 = vmatpush1.msra.mxu0 0.0
        %1096 = vmatprep.subr.mxu0 0.0
        %1097 = vmatpush1.msra.mxu0 0.0
        %1098 = vmatprep.subr.mxu0 0.0
        %1099 = vmatpush1.msra.mxu0 0.0
        %1100 = vmatprep.subr.mxu0 0.0
        %1101 = vmatpush1.msra.mxu0 0.0
        %1102 = vmatprep.subr.mxu0 0.0
        %1103 = vmatpush1.msra.mxu0 0.0
        %1104 = vmatprep.subr.mxu0 0.0
        %1105 = vmatpush1.msra.mxu0 0.0
        %1106 = vmatprep.subr.mxu0 0.0
        %1107 = vmatpush1.msra.mxu0 0.0
        %1108 = vmatprep.subr.mxu0 0.0
        %1109 = vmatpush1.msra.mxu0 0.0
        %1110 = vmatprep.subr.mxu0 0.0
        %1111 = vmatpush1.msra.mxu0 0.0
        %1112 = vmatprep.subr.mxu0 0.0
        %1113 = vmatpush1.msra.mxu0 0.0
        %1114 = vmatprep.subr.mxu0 0.0
        %1115 = vmatpush1.msra.mxu0 0.0
        %1116 = vmatprep.subr.mxu0 0.0
        %1117 = vmatpush1.msra.mxu0 0.0
        %1118 = vmatprep.subr.mxu0 0.0
        %1119 = vmatpush1.msra.mxu0 0.0
        %1120 = vmatprep.subr.mxu0 0.0
        %1121 = vmatpush1.msra.mxu0 0.0
        %1122 = vmatprep.subr.mxu0 0.0
        %1123 = vmatpush1.msra.mxu0 0.0
        %1124 = vmatprep.subr.mxu0 0.0
        %1125 = vmatpush1.msra.mxu0 0.0
        %1126 = vmatprep.subr.mxu0 0.0
        %1127 = vmatpush1.msra.mxu0 0.0
        %1128 = vmatprep.subr.mxu0 0.0
        %1129 = vmatpush1.msra.mxu0 0.0
        %1130 = vmatprep.subr.mxu0 0.0
        %1131 = vmatpush1.msra.mxu0 0.0
        %1132 = vmatprep.subr.mxu0 0.0
        %1133 = vmatpush1.msra.mxu0 0.0
        %1134 = vmatprep.subr.mxu0 0.0
        %1135 = vmatpush1.msra.mxu0 0.0
        %1136 = vmatprep.subr.mxu0 0.0
        %1137 = vmatpush1.msra.mxu0 0.0
        %1138 = vmatprep.subr.mxu0 0.0
        %1139 = vmatpush1.msra.mxu0 0.0
        %1140 = vmatprep.subr.mxu0 0.0
        %1141 = vmatpush1.msra.mxu0 0.0
        %1142 = vmatprep.subr.mxu0 0.0
        %1143 = vmatpush1.msra.mxu0 0.0
        %1144 = vmatprep.subr.mxu0 0.0
        %1145 = vmatpush1.msra.mxu0 0.0
        %1146 = vmatprep.mubr.f32.mxu0 0.0
        %1147 = vmatmul.mubr.f32.gmra.mrb[0].mxu0 %v1071
        %v1148 = vpop.f32.mrb[0].mxu0
        %v1149 = vadd.f32 %v1052, %v1148
        %v1150 = vpop.f32.mrb[0].mxu0
        %v1151 = vadd.f32 %v1052, %v1150
        %1152 = vmatprep.mubr.f32.mxu0 0.0
        %1153 = vmatmul.mubr.f32.gmra.mrb[0].mxu0 %v1074
        %v1154 = vpop.f32.mrb[0].mxu0
        %v1155 = vadd.f32 %v1057, %v1154
        %v1156 = vpop.f32.mrb[0].mxu0
        %v1157 = vadd.f32 %v1057, %v1156
        %1158 = vmatprep.mubr.f32.mxu0 0.0
        %1159 = vmatmul.mubr.f32.gmra.mrb[0].mxu0 %v1077
        %v1160 = vpop.f32.mrb[0].mxu0
        %v1161 = vadd.f32 %v1062, %v1160
        %v1162 = vpop.f32.mrb[0].mxu0
        %v1163 = vadd.f32 %v1062, %v1162
        %1164 = vmatprep.mubr.f32.mxu0 0.0
        %1165 = vmatmul.mubr.f32.gmra.mrb[0].mxu0 %v1080
        %v1166 = vpop.f32.mrb[0].mxu0
        %v1167 = vadd.f32 %v1067, %v1166
        %v1168 = vpop.f32.mrb[0].mxu0
        %v1169 = vadd.f32 %v1067, %v1168
        %1170 = vdwg.mxu0
        %v1171 = vxor.u32 %v1149, 2147483648
        %v1172 = vxor.u32 %v1151, 2147483648
        %v1173 = vxor.u32 %v1155, 2147483648
        %v1174 = vxor.u32 %v1157, 2147483648
        %v1175 = vxor.u32 %v1161, 2147483648
        %v1176 = vxor.u32 %v1163, 2147483648
        %v1177 = vxor.u32 %v1167, 2147483648
        %v1178 = vxor.u32 %v1169, 2147483648
        %v1179 = vmul.f32 %v1171, 1.442695
        %v1180 = vpow.pop %v1179
        %v1181 = vmul.f32 %v1172, 1.442695
        %v1182 = vpow.pop %v1181
        %v1183 = vmul.f32 %v1173, 1.442695
        %v1184 = vpow.pop %v1183
        %v1185 = vmul.f32 %v1174, 1.442695
        %v1186 = vpow.pop %v1185
        %v1187 = vmul.f32 %v1175, 1.442695
        %v1188 = vpow.pop %v1187
        %v1189 = vmul.f32 %v1176, 1.442695
        %v1190 = vpow.pop %v1189
        %v1191 = vmul.f32 %v1177, 1.442695
        %v1192 = vpow.pop %v1191
        %v1193 = vmul.f32 %v1178, 1.442695
        %v1194 = vpow.pop %v1193
        %v1195 = vadd.f32 %v1180, 1.0
        %v1196 = vadd.f32 %v1182, 1.0
        %v1197 = vadd.f32 %v1184, 1.0
        %v1198 = vadd.f32 %v1186, 1.0
        %v1199 = vadd.f32 %v1188, 1.0
        %v1200 = vadd.f32 %v1190, 1.0
        %v1201 = vadd.f32 %v1192, 1.0
        %v1202 = vadd.f32 %v1194, 1.0
        %v1203 = vrcp.pop %v1195
        %v1204 = vmul.f32 1.0, %v1203
        %v1205 = vrcp.pop %v1196
        %v1206 = vmul.f32 1.0, %v1205
        %v1207 = vrcp.pop %v1197
        %v1208 = vmul.f32 1.0, %v1207
        %v1209 = vrcp.pop %v1198
        %v1210 = vmul.f32 1.0, %v1209
        %v1211 = vrcp.pop %v1199
        %v1212 = vmul.f32 1.0, %v1211
        %v1213 = vrcp.pop %v1200
        %v1214 = vmul.f32 1.0, %v1213
        %v1215 = vrcp.pop %v1201
        %v1216 = vmul.f32 1.0, %v1215
        %v1217 = vrcp.pop %v1202
        %v1218 = vmul.f32 1.0, %v1217
        %v1219 = vmul.f32 %v1149, %v1204
        %v1220 = vmul.f32 %v1151, %v1206
        %v1221 = vmul.f32 %v1155, %v1208
        %v1222 = vmul.f32 %v1157, %v1210
        %v1223 = vmul.f32 %v1161, %v1212
        %v1224 = vmul.f32 %v1163, %v1214
        %v1225 = vmul.f32 %v1167, %v1216
        %v1226 = vmul.f32 %v1169, %v1218
        %1227 = vset.pattern.permute.xlu0 13
        %1228 = vperm.xlu0 %1227, %v423
        %v1229 = vpop.permute.xlu0 %1228
        %1231 = vset.pattern.permute.xlu0 13
        %1232 = vperm.xlu0 %1231, %v424
        %v1233 = vpop.permute.xlu0 %1232
        %1235 = vset.pattern.permute.xlu0 13
        %1236 = vperm.xlu0 %1235, %v425
        %v1237 = vpop.permute.xlu0 %1236
        %1239 = vset.pattern.permute.xlu0 13
        %1240 = vperm.xlu0 %1239, %v426
        %v1241 = vpop.permute.xlu0 %1240
        %v1243 = vmul.f32 %v1219, %v1229
        %v1244 = vmul.f32 %v1220, %v1229
        %v1245 = vmul.f32 %v1221, %v1233
        %v1246 = vmul.f32 %v1222, %v1233
        %v1247 = vmul.f32 %v1223, %v1237
        %v1248 = vmul.f32 %v1224, %v1237
        %v1249 = vmul.f32 %v1225, %v1241
        %v1250 = vmul.f32 %v1226, %v1241
        %1251 = vrot.lane.b32.xlu0 %v1219, 17
        %v1252 = vpop.permute.xlu0 %1251
        %1253 = vrot.lane.b32.xlu0 %v1221, 17
        %v1254 = vpop.permute.xlu0 %1253
        %1255 = vrot.lane.b32.xlu0 %v1223, 17
        %v1256 = vpop.permute.xlu0 %1255
        %1257 = vrot.lane.b32.xlu0 %v1225, 17
        %v1258 = vpop.permute.xlu0 %1257
        %1259 = vrot.lane.b32.xlu0 %v1220, 17
        %v1260 = vpop.permute.xlu0 %1259
        %1261 = vrot.lane.b32.xlu0 %v1222, 17
        %v1262 = vpop.permute.xlu0 %1261
        %1263 = vrot.lane.b32.xlu0 %v1224, 17
        %v1264 = vpop.permute.xlu0 %1263
        %1265 = vrot.lane.b32.xlu0 %v1226, 17
        %v1266 = vpop.permute.xlu0 %1265
        %v1267 = vsel %vm473, %v1252, %v1260
        %v1268 = vsel %vm473, %v1254, %v1262
        %v1269 = vsel %vm473, %v1256, %v1264
        %v1270 = vsel %vm473, %v1258, %v1266
        %v1271 = vsel %vm473, %v1260, %v1252
        %v1272 = vsel %vm473, %v1262, %v1254
        %v1273 = vsel %vm473, %v1264, %v1256
        %v1274 = vsel %vm473, %v1266, %v1258
        %v1275 = vmul.f32 %v1271, %v485
        %v1276 = vmul.f32 %v1267, %v489
        %v1277 = vmul.f32 %v1272, %v485
        %v1278 = vmul.f32 %v1268, %v489
        %v1279 = vmul.f32 %v1273, %v485
        %v1280 = vmul.f32 %v1269, %v489
        %v1281 = vmul.f32 %v1274, %v485
        %v1282 = vmul.f32 %v1270, %v489
        %1283 = vset.pattern.permute.xlu0 9
        %1284 = vperm.xlu0 %1283, %v423
        %v1285 = vpop.permute.xlu0 %1284
        %1287 = vset.pattern.permute.xlu0 9
        %1288 = vperm.xlu0 %1287, %v424
        %v1289 = vpop.permute.xlu0 %1288
        %1291 = vset.pattern.permute.xlu0 9
        %1292 = vperm.xlu0 %1291, %v425
        %v1293 = vpop.permute.xlu0 %1292
        %1295 = vset.pattern.permute.xlu0 9
        %1296 = vperm.xlu0 %1295, %v426
        %v1297 = vpop.permute.xlu0 %1296
        %v1299 = vmul.f32 %v1275, %v1285
        %v1300 = vmul.f32 %v1276, %v1285
        %v1301 = vmul.f32 %v1277, %v1289
        %v1302 = vmul.f32 %v1278, %v1289
        %v1303 = vmul.f32 %v1279, %v1293
        %v1304 = vmul.f32 %v1280, %v1293
        %v1305 = vmul.f32 %v1281, %v1297
        %v1306 = vmul.f32 %v1282, %v1297
        %v1307 = vadd.f32 %v1243, %v1299
        %v1308 = vadd.f32 %v1244, %v1300
        %v1309 = vadd.f32 %v1245, %v1301
        %v1310 = vadd.f32 %v1246, %v1302
        %v1311 = vadd.f32 %v1247, %v1303
        %v1312 = vadd.f32 %v1248, %v1304
        %v1313 = vadd.f32 %v1249, %v1305
        %v1314 = vadd.f32 %v1250, %v1306
        %1315 = vrot.lane.b32.xlu0 %v1219, 16
        %v1316 = vpop.permute.xlu0 %1315
        %1317 = vrot.lane.b32.xlu0 %v1221, 16
        %v1318 = vpop.permute.xlu0 %1317
        %1319 = vrot.lane.b32.xlu0 %v1223, 16
        %v1320 = vpop.permute.xlu0 %1319
        %1321 = vrot.lane.b32.xlu0 %v1225, 16
        %v1322 = vpop.permute.xlu0 %1321
        %1323 = vrot.lane.b32.xlu0 %v1220, 16
        %v1324 = vpop.permute.xlu0 %1323
        %1325 = vrot.lane.b32.xlu0 %v1222, 16
        %v1326 = vpop.permute.xlu0 %1325
        %1327 = vrot.lane.b32.xlu0 %v1224, 16
        %v1328 = vpop.permute.xlu0 %1327
        %1329 = vrot.lane.b32.xlu0 %v1226, 16
        %v1330 = vpop.permute.xlu0 %1329
        %v1331 = vsel %vm546, %v1316, %v1324
        %v1332 = vsel %vm546, %v1318, %v1326
        %v1333 = vsel %vm546, %v1320, %v1328
        %v1334 = vsel %vm546, %v1322, %v1330
        %v1335 = vsel %vm546, %v1324, %v1316
        %v1336 = vsel %vm546, %v1326, %v1318
        %v1337 = vsel %vm546, %v1328, %v1320
        %v1338 = vsel %vm546, %v1330, %v1322
        %v1339 = vmul.f32 %v1335, %v558
        %v1340 = vmul.f32 %v1331, %v562
        %v1341 = vmul.f32 %v1336, %v558
        %v1342 = vmul.f32 %v1332, %v562
        %v1343 = vmul.f32 %v1337, %v558
        %v1344 = vmul.f32 %v1333, %v562
        %v1345 = vmul.f32 %v1338, %v558
        %v1346 = vmul.f32 %v1334, %v562
        %1347 = vset.pattern.permute.xlu0 10
        %1348 = vperm.xlu0 %1347, %v423
        %v1349 = vpop.permute.xlu0 %1348
        %1351 = vset.pattern.permute.xlu0 10
        %1352 = vperm.xlu0 %1351, %v424
        %v1353 = vpop.permute.xlu0 %1352
        %1355 = vset.pattern.permute.xlu0 10
        %1356 = vperm.xlu0 %1355, %v425
        %v1357 = vpop.permute.xlu0 %1356
        %1359 = vset.pattern.permute.xlu0 10
        %1360 = vperm.xlu0 %1359, %v426
        %v1361 = vpop.permute.xlu0 %1360
        %v1363 = vmul.f32 %v1339, %v1349
        %v1364 = vmul.f32 %v1340, %v1349
        %v1365 = vmul.f32 %v1341, %v1353
        %v1366 = vmul.f32 %v1342, %v1353
        %v1367 = vmul.f32 %v1343, %v1357
        %v1368 = vmul.f32 %v1344, %v1357
        %v1369 = vmul.f32 %v1345, %v1361
        %v1370 = vmul.f32 %v1346, %v1361
        %v1371 = vadd.f32 %v1307, %v1363
        %v1372 = vadd.f32 %v1308, %v1364
        %v1373 = vadd.f32 %v1309, %v1365
        %v1374 = vadd.f32 %v1310, %v1366
        %v1375 = vadd.f32 %v1311, %v1367
        %v1376 = vadd.f32 %v1312, %v1368
        %v1377 = vadd.f32 %v1313, %v1369
        %v1378 = vadd.f32 %v1314, %v1370
        %1379 = vrot.lane.b32.xlu0 %v1219, 15
        %v1380 = vpop.permute.xlu0 %1379
        %1381 = vrot.lane.b32.xlu0 %v1221, 15
        %v1382 = vpop.permute.xlu0 %1381
        %1383 = vrot.lane.b32.xlu0 %v1223, 15
        %v1384 = vpop.permute.xlu0 %1383
        %1385 = vrot.lane.b32.xlu0 %v1225, 15
        %v1386 = vpop.permute.xlu0 %1385
        %1387 = vrot.lane.b32.xlu0 %v1220, 15
        %v1388 = vpop.permute.xlu0 %1387
        %1389 = vrot.lane.b32.xlu0 %v1222, 15
        %v1390 = vpop.permute.xlu0 %1389
        %1391 = vrot.lane.b32.xlu0 %v1224, 15
        %v1392 = vpop.permute.xlu0 %1391
        %1393 = vrot.lane.b32.xlu0 %v1226, 15
        %v1394 = vpop.permute.xlu0 %1393
        %v1395 = vsel %vm619, %v1380, %v1388
        %v1396 = vsel %vm619, %v1382, %v1390
        %v1397 = vsel %vm619, %v1384, %v1392
        %v1398 = vsel %vm619, %v1386, %v1394
        %v1399 = vsel %vm619, %v1388, %v1380
        %v1400 = vsel %vm619, %v1390, %v1382
        %v1401 = vsel %vm619, %v1392, %v1384
        %v1402 = vsel %vm619, %v1394, %v1386
        %v1403 = vmul.f32 %v1399, %v631
        %v1404 = vmul.f32 %v1395, %v635
        %v1405 = vmul.f32 %v1400, %v631
        %v1406 = vmul.f32 %v1396, %v635
        %v1407 = vmul.f32 %v1401, %v631
        %v1408 = vmul.f32 %v1397, %v635
        %v1409 = vmul.f32 %v1402, %v631
        %v1410 = vmul.f32 %v1398, %v635
        %1411 = vset.pattern.permute.xlu0 11
        %1412 = vperm.xlu0 %1411, %v423
        %v1413 = vpop.permute.xlu0 %1412
        %1415 = vset.pattern.permute.xlu0 11
        %1416 = vperm.xlu0 %1415, %v424
        %v1417 = vpop.permute.xlu0 %1416
        %1419 = vset.pattern.permute.xlu0 11
        %1420 = vperm.xlu0 %1419, %v425
        %v1421 = vpop.permute.xlu0 %1420
        %1423 = vset.pattern.permute.xlu0 11
        %1424 = vperm.xlu0 %1423, %v426
        %v1425 = vpop.permute.xlu0 %1424
        %v1427 = vmul.f32 %v1403, %v1413
        %v1428 = vmul.f32 %v1404, %v1413
        %v1429 = vmul.f32 %v1405, %v1417
        %v1430 = vmul.f32 %v1406, %v1417
        %v1431 = vmul.f32 %v1407, %v1421
        %v1432 = vmul.f32 %v1408, %v1421
        %v1433 = vmul.f32 %v1409, %v1425
        %v1434 = vmul.f32 %v1410, %v1425
        %v1435 = vadd.f32 %v1371, %v1427
        %v1436 = vadd.f32 %v1372, %v1428
        %v1437 = vadd.f32 %v1373, %v1429
        %v1438 = vadd.f32 %v1374, %v1430
        %v1439 = vadd.f32 %v1375, %v1431
        %v1440 = vadd.f32 %v1376, %v1432
        %v1441 = vadd.f32 %v1377, %v1433
        %v1442 = vadd.f32 %v1378, %v1434
        %1443 = vrot.lane.b32.xlu0 %v1219, 1
        %v1444 = vpop.permute.xlu0 %1443
        %1445 = vrot.lane.b32.xlu0 %v1221, 1
        %v1446 = vpop.permute.xlu0 %1445
        %1447 = vrot.lane.b32.xlu0 %v1223, 1
        %v1448 = vpop.permute.xlu0 %1447
        %1449 = vrot.lane.b32.xlu0 %v1225, 1
        %v1450 = vpop.permute.xlu0 %1449
        %1451 = vrot.lane.b32.xlu0 %v1220, 1
        %v1452 = vpop.permute.xlu0 %1451
        %1453 = vrot.lane.b32.xlu0 %v1222, 1
        %v1454 = vpop.permute.xlu0 %1453
        %1455 = vrot.lane.b32.xlu0 %v1224, 1
        %v1456 = vpop.permute.xlu0 %1455
        %1457 = vrot.lane.b32.xlu0 %v1226, 1
        %v1458 = vpop.permute.xlu0 %1457
        %v1459 = vsel %vm692, %v1444, %v1452
        %v1460 = vsel %vm692, %v1446, %v1454
        %v1461 = vsel %vm692, %v1448, %v1456
        %v1462 = vsel %vm692, %v1450, %v1458
        %v1463 = vsel %vm692, %v1452, %v1444
        %v1464 = vsel %vm692, %v1454, %v1446
        %v1465 = vsel %vm692, %v1456, %v1448
        %v1466 = vsel %vm692, %v1458, %v1450
        %v1467 = vmul.f32 %v1463, %v704
        %v1468 = vmul.f32 %v1459, %v708
        %v1469 = vmul.f32 %v1464, %v704
        %v1470 = vmul.f32 %v1460, %v708
        %v1471 = vmul.f32 %v1465, %v704
        %v1472 = vmul.f32 %v1461, %v708
        %v1473 = vmul.f32 %v1466, %v704
        %v1474 = vmul.f32 %v1462, %v708
        %1475 = vset.pattern.permute.xlu0 12
        %1476 = vperm.xlu0 %1475, %v423
        %v1477 = vpop.permute.xlu0 %1476
        %1479 = vset.pattern.permute.xlu0 12
        %1480 = vperm.xlu0 %1479, %v424
        %v1481 = vpop.permute.xlu0 %1480
        %1483 = vset.pattern.permute.xlu0 12
        %1484 = vperm.xlu0 %1483, %v425
        %v1485 = vpop.permute.xlu0 %1484
        %1487 = vset.pattern.permute.xlu0 12
        %1488 = vperm.xlu0 %1487, %v426
        %v1489 = vpop.permute.xlu0 %1488
        %v1491 = vmul.f32 %v1467, %v1477
        %v1492 = vmul.f32 %v1468, %v1477
        %v1493 = vmul.f32 %v1469, %v1481
        %v1494 = vmul.f32 %v1470, %v1481
        %v1495 = vmul.f32 %v1471, %v1485
        %v1496 = vmul.f32 %v1472, %v1485
        %v1497 = vmul.f32 %v1473, %v1489
        %v1498 = vmul.f32 %v1474, %v1489
        %v1499 = vadd.f32 %v1435, %v1491
        %v1500 = vadd.f32 %v1436, %v1492
        %v1501 = vadd.f32 %v1437, %v1493
        %v1502 = vadd.f32 %v1438, %v1494
        %v1503 = vadd.f32 %v1439, %v1495
        %v1504 = vadd.f32 %v1440, %v1496
        %v1505 = vadd.f32 %v1441, %v1497
        %v1506 = vadd.f32 %v1442, %v1498
        %1507 = vrot.lane.b32.xlu0 %v1219, 127
        %v1508 = vpop.permute.xlu0 %1507
        %1509 = vrot.lane.b32.xlu0 %v1221, 127
        %v1510 = vpop.permute.xlu0 %1509
        %1511 = vrot.lane.b32.xlu0 %v1223, 127
        %v1512 = vpop.permute.xlu0 %1511
        %1513 = vrot.lane.b32.xlu0 %v1225, 127
        %v1514 = vpop.permute.xlu0 %1513
        %1515 = vrot.lane.b32.xlu0 %v1220, 127
        %v1516 = vpop.permute.xlu0 %1515
        %1517 = vrot.lane.b32.xlu0 %v1222, 127
        %v1518 = vpop.permute.xlu0 %1517
        %1519 = vrot.lane.b32.xlu0 %v1224, 127
        %v1520 = vpop.permute.xlu0 %1519
        %1521 = vrot.lane.b32.xlu0 %v1226, 127
        %v1522 = vpop.permute.xlu0 %1521
        %v1523 = vsel %vm765, %v1508, %v1516
        %v1524 = vsel %vm765, %v1510, %v1518
        %v1525 = vsel %vm765, %v1512, %v1520
        %v1526 = vsel %vm765, %v1514, %v1522
        %v1527 = vsel %vm765, %v1516, %v1508
        %v1528 = vsel %vm765, %v1518, %v1510
        %v1529 = vsel %vm765, %v1520, %v1512
        %v1530 = vsel %vm765, %v1522, %v1514
        %v1531 = vmul.f32 %v1523, %v777
        %v1532 = vmul.f32 %v1527, %v781
        %v1533 = vmul.f32 %v1524, %v777
        %v1534 = vmul.f32 %v1528, %v781
        %v1535 = vmul.f32 %v1525, %v777
        %v1536 = vmul.f32 %v1529, %v781
        %v1537 = vmul.f32 %v1526, %v777
        %v1538 = vmul.f32 %v1530, %v781
        %1539 = vset.pattern.permute.xlu0 14
        %1540 = vperm.xlu0 %1539, %v423
        %v1541 = vpop.permute.xlu0 %1540
        %1543 = vset.pattern.permute.xlu0 14
        %1544 = vperm.xlu0 %1543, %v424
        %v1545 = vpop.permute.xlu0 %1544
        %1547 = vset.pattern.permute.xlu0 14
        %1548 = vperm.xlu0 %1547, %v425
        %v1549 = vpop.permute.xlu0 %1548
        %1551 = vset.pattern.permute.xlu0 14
        %1552 = vperm.xlu0 %1551, %v426
        %v1553 = vpop.permute.xlu0 %1552
        %v1555 = vmul.f32 %v1531, %v1541
        %v1556 = vmul.f32 %v1532, %v1541
        %v1557 = vmul.f32 %v1533, %v1545
        %v1558 = vmul.f32 %v1534, %v1545
        %v1559 = vmul.f32 %v1535, %v1549
        %v1560 = vmul.f32 %v1536, %v1549
        %v1561 = vmul.f32 %v1537, %v1553
        %v1562 = vmul.f32 %v1538, %v1553
        %v1563 = vadd.f32 %v1499, %v1555
        %v1564 = vadd.f32 %v1500, %v1556
        %v1565 = vadd.f32 %v1501, %v1557
        %v1566 = vadd.f32 %v1502, %v1558
        %v1567 = vadd.f32 %v1503, %v1559
        %v1568 = vadd.f32 %v1504, %v1560
        %v1569 = vadd.f32 %v1505, %v1561
        %v1570 = vadd.f32 %v1506, %v1562
        %1571 = vrot.lane.b32.xlu0 %v1219, 113
        %v1572 = vpop.permute.xlu0 %1571
        %1573 = vrot.lane.b32.xlu0 %v1221, 113
        %v1574 = vpop.permute.xlu0 %1573
        %1575 = vrot.lane.b32.xlu0 %v1223, 113
        %v1576 = vpop.permute.xlu0 %1575
        %1577 = vrot.lane.b32.xlu0 %v1225, 113
        %v1578 = vpop.permute.xlu0 %1577
        %1579 = vrot.lane.b32.xlu0 %v1220, 113
        %v1580 = vpop.permute.xlu0 %1579
        %1581 = vrot.lane.b32.xlu0 %v1222, 113
        %v1582 = vpop.permute.xlu0 %1581
        %1583 = vrot.lane.b32.xlu0 %v1224, 113
        %v1584 = vpop.permute.xlu0 %1583
        %1585 = vrot.lane.b32.xlu0 %v1226, 113
        %v1586 = vpop.permute.xlu0 %1585
        %v1587 = vsel %vm838, %v1572, %v1580
        %v1588 = vsel %vm838, %v1574, %v1582
        %v1589 = vsel %vm838, %v1576, %v1584
        %v1590 = vsel %vm838, %v1578, %v1586
        %v1591 = vsel %vm838, %v1580, %v1572
        %v1592 = vsel %vm838, %v1582, %v1574
        %v1593 = vsel %vm838, %v1584, %v1576
        %v1594 = vsel %vm838, %v1586, %v1578
        %v1595 = vmul.f32 %v1587, %v850
        %v1596 = vmul.f32 %v1591, %v854
        %v1597 = vmul.f32 %v1588, %v850
        %v1598 = vmul.f32 %v1592, %v854
        %v1599 = vmul.f32 %v1589, %v850
        %v1600 = vmul.f32 %v1593, %v854
        %v1601 = vmul.f32 %v1590, %v850
        %v1602 = vmul.f32 %v1594, %v854
        %1603 = vset.pattern.permute.xlu0 15
        %1604 = vperm.xlu0 %1603, %v423
        %v1605 = vpop.permute.xlu0 %1604
        %1607 = vset.pattern.permute.xlu0 15
        %1608 = vperm.xlu0 %1607, %v424
        %v1609 = vpop.permute.xlu0 %1608
        %1611 = vset.pattern.permute.xlu0 15
        %1612 = vperm.xlu0 %1611, %v425
        %v1613 = vpop.permute.xlu0 %1612
        %1615 = vset.pattern.permute.xlu0 15
        %1616 = vperm.xlu0 %1615, %v426
        %v1617 = vpop.permute.xlu0 %1616
        %v1619 = vmul.f32 %v1595, %v1605
        %v1620 = vmul.f32 %v1596, %v1605
        %v1621 = vmul.f32 %v1597, %v1609
        %v1622 = vmul.f32 %v1598, %v1609
        %v1623 = vmul.f32 %v1599, %v1613
        %v1624 = vmul.f32 %v1600, %v1613
        %v1625 = vmul.f32 %v1601, %v1617
        %v1626 = vmul.f32 %v1602, %v1617
        %v1627 = vadd.f32 %v1563, %v1619
        %v1628 = vadd.f32 %v1564, %v1620
        %v1629 = vadd.f32 %v1565, %v1621
        %v1630 = vadd.f32 %v1566, %v1622
        %v1631 = vadd.f32 %v1567, %v1623
        %v1632 = vadd.f32 %v1568, %v1624
        %v1633 = vadd.f32 %v1569, %v1625
        %v1634 = vadd.f32 %v1570, %v1626
        %1635 = vrot.lane.b32.xlu0 %v1219, 112
        %v1636 = vpop.permute.xlu0 %1635
        %1637 = vrot.lane.b32.xlu0 %v1221, 112
        %v1638 = vpop.permute.xlu0 %1637
        %1639 = vrot.lane.b32.xlu0 %v1223, 112
        %v1640 = vpop.permute.xlu0 %1639
        %1641 = vrot.lane.b32.xlu0 %v1225, 112
        %v1642 = vpop.permute.xlu0 %1641
        %1643 = vrot.lane.b32.xlu0 %v1220, 112
        %v1644 = vpop.permute.xlu0 %1643
        %1645 = vrot.lane.b32.xlu0 %v1222, 112
        %v1646 = vpop.permute.xlu0 %1645
        %1647 = vrot.lane.b32.xlu0 %v1224, 112
        %v1648 = vpop.permute.xlu0 %1647
        %1649 = vrot.lane.b32.xlu0 %v1226, 112
        %v1650 = vpop.permute.xlu0 %1649
        %v1651 = vsel %vm911, %v1636, %v1644
        %v1652 = vsel %vm911, %v1638, %v1646
        %v1653 = vsel %vm911, %v1640, %v1648
        %v1654 = vsel %vm911, %v1642, %v1650
        %v1655 = vsel %vm911, %v1644, %v1636
        %v1656 = vsel %vm911, %v1646, %v1638
        %v1657 = vsel %vm911, %v1648, %v1640
        %v1658 = vsel %vm911, %v1650, %v1642
        %v1659 = vmul.f32 %v1651, %v923
        %v1660 = vmul.f32 %v1655, %v927
        %v1661 = vmul.f32 %v1652, %v923
        %v1662 = vmul.f32 %v1656, %v927
        %v1663 = vmul.f32 %v1653, %v923
        %v1664 = vmul.f32 %v1657, %v927
        %v1665 = vmul.f32 %v1654, %v923
        %v1666 = vmul.f32 %v1658, %v927
        %1667 = vset.pattern.permute.xlu0 16
        %1668 = vperm.xlu0 %1667, %v423
        %v1669 = vpop.permute.xlu0 %1668
        %1671 = vset.pattern.permute.xlu0 16
        %1672 = vperm.xlu0 %1671, %v424
        %v1673 = vpop.permute.xlu0 %1672
        %1675 = vset.pattern.permute.xlu0 16
        %1676 = vperm.xlu0 %1675, %v425
        %v1677 = vpop.permute.xlu0 %1676
        %1679 = vset.pattern.permute.xlu0 16
        %1680 = vperm.xlu0 %1679, %v426
        %v1681 = vpop.permute.xlu0 %1680
        %v1683 = vmul.f32 %v1659, %v1669
        %v1684 = vmul.f32 %v1660, %v1669
        %v1685 = vmul.f32 %v1661, %v1673
        %v1686 = vmul.f32 %v1662, %v1673
        %v1687 = vmul.f32 %v1663, %v1677
        %v1688 = vmul.f32 %v1664, %v1677
        %v1689 = vmul.f32 %v1665, %v1681
        %v1690 = vmul.f32 %v1666, %v1681
        %v1691 = vadd.f32 %v1627, %v1683
        %v1692 = vadd.f32 %v1628, %v1684
        %v1693 = vadd.f32 %v1629, %v1685
        %v1694 = vadd.f32 %v1630, %v1686
        %v1695 = vadd.f32 %v1631, %v1687
        %v1696 = vadd.f32 %v1632, %v1688
        %v1697 = vadd.f32 %v1633, %v1689
        %v1698 = vadd.f32 %v1634, %v1690
        %1699 = vrot.lane.b32.xlu0 %v1219, 111
        %v1700 = vpop.permute.xlu0 %1699
        %1701 = vrot.lane.b32.xlu0 %v1221, 111
        %v1702 = vpop.permute.xlu0 %1701
        %1703 = vrot.lane.b32.xlu0 %v1223, 111
        %v1704 = vpop.permute.xlu0 %1703
        %1705 = vrot.lane.b32.xlu0 %v1225, 111
        %v1706 = vpop.permute.xlu0 %1705
        %1707 = vrot.lane.b32.xlu0 %v1220, 111
        %v1708 = vpop.permute.xlu0 %1707
        %1709 = vrot.lane.b32.xlu0 %v1222, 111
        %v1710 = vpop.permute.xlu0 %1709
        %1711 = vrot.lane.b32.xlu0 %v1224, 111
        %v1712 = vpop.permute.xlu0 %1711
        %1713 = vrot.lane.b32.xlu0 %v1226, 111
        %v1714 = vpop.permute.xlu0 %1713
        %v1715 = vsel %vm984, %v1700, %v1708
        %v1716 = vsel %vm984, %v1702, %v1710
        %v1717 = vsel %vm984, %v1704, %v1712
        %v1718 = vsel %vm984, %v1706, %v1714
        %v1719 = vsel %vm984, %v1708, %v1700
        %v1720 = vsel %vm984, %v1710, %v1702
        %v1721 = vsel %vm984, %v1712, %v1704
        %v1722 = vsel %vm984, %v1714, %v1706
        %v1723 = vmul.f32 %v1715, %v996
        %v1724 = vmul.f32 %v1719, %v1000
        %v1725 = vmul.f32 %v1716, %v996
        %v1726 = vmul.f32 %v1720, %v1000
        %v1727 = vmul.f32 %v1717, %v996
        %v1728 = vmul.f32 %v1721, %v1000
        %v1729 = vmul.f32 %v1718, %v996
        %v1730 = vmul.f32 %v1722, %v1000
        %1731 = vset.pattern.permute.xlu0 17
        %1732 = vperm.xlu0 %1731, %v423
        %v1733 = vpop.permute.xlu0 %1732
        %1735 = vset.pattern.permute.xlu0 17
        %1736 = vperm.xlu0 %1735, %v424
        %v1737 = vpop.permute.xlu0 %1736
        %1739 = vset.pattern.permute.xlu0 17
        %1740 = vperm.xlu0 %1739, %v425
        %v1741 = vpop.permute.xlu0 %1740
        %1743 = vset.pattern.permute.xlu0 17
        %1744 = vperm.xlu0 %1743, %v426
        %v1745 = vpop.permute.xlu0 %1744
        %v1747 = vmul.f32 %v1723, %v1733
        %v1748 = vmul.f32 %v1724, %v1733
        %v1749 = vmul.f32 %v1725, %v1737
        %v1750 = vmul.f32 %v1726, %v1737
        %v1751 = vmul.f32 %v1727, %v1741
        %v1752 = vmul.f32 %v1728, %v1741
        %v1753 = vmul.f32 %v1729, %v1745
        %v1754 = vmul.f32 %v1730, %v1745
        %v1755 = vadd.f32 %v1691, %v1747
        %v1756 = vadd.f32 %v1692, %v1748
        %v1757 = vadd.f32 %v1693, %v1749
        %v1758 = vadd.f32 %v1694, %v1750
        %v1759 = vadd.f32 %v1695, %v1751
        %v1760 = vadd.f32 %v1696, %v1752
        %v1761 = vadd.f32 %v1697, %v1753
        %v1762 = vadd.f32 %v1698, %v1754
        %s1763 = scalar_lea.vmem %s351, 32 [#allocation5]
        %v1764 = vld [vmem:[%s1763] sm:$0xff]
        %v1765 = vld [vmem:[%s1763 + $0x8] sm:$0xff]
        %v1766 = vld [vmem:[%s1763 + $0x10] sm:$0xff]
        %v1767 = vld [vmem:[%s1763 + $0x18] sm:$0xff]
        %s1768 = scalar_lea.vmem %s410, 32
        %v1769 = vld [vmem:[%s1768] sm:$0xff]
        %v1770 = vld [vmem:[%s1768 + $0x8] sm:$0xff]
        %v1771 = vld [vmem:[%s1768 + $0x10] sm:$0xff]
        %v1772 = vld [vmem:[%s1768 + $0x18] sm:$0xff]
        %1774 = vset.pattern.permute.xlu0 0
        %1775 = vperm.xlu0 %1774, %v1769
        %v1776 = vpop.permute.xlu0 %1775
        %1779 = vset.pattern.permute.xlu0 0
        %1780 = vperm.xlu0 %1779, %v1770
        %v1781 = vpop.permute.xlu0 %1780
        %1784 = vset.pattern.permute.xlu0 0
        %1785 = vperm.xlu0 %1784, %v1771
        %v1786 = vpop.permute.xlu0 %1785
        %1789 = vset.pattern.permute.xlu0 0
        %1790 = vperm.xlu0 %1789, %v1772
        %v1791 = vpop.permute.xlu0 %1790
        %v1794 = vsel %vm1069, %v1764, 0
        %v1797 = vsel %vm1069, %v1765, 0
        %v1800 = vsel %vm1069, %v1766, 0
        %v1803 = vsel %vm1069, %v1767, 0
        %1805 = vmatprep.subr.mxu0 %v1756
        %1806 = vmatpush1.msra.mxu0 %v1755
        %1807 = vmatprep.subr.mxu0 %v1758
        %1808 = vmatpush1.msra.mxu0 %v1757
        %1809 = vmatprep.subr.mxu0 %v1760
        %1810 = vmatpush1.msra.mxu0 %v1759
        %1811 = vmatprep.subr.mxu0 %v1762
        %1812 = vmatpush1.msra.mxu0 %v1761
        %1813 = vmatprep.subr.mxu0 0.0
        %1814 = vmatpush1.msra.mxu0 0.0
        %1815 = vmatprep.subr.mxu0 0.0
        %1816 = vmatpush1.msra.mxu0 0.0
        %1817 = vmatprep.subr.mxu0 0.0
        %1818 = vmatpush1.msra.mxu0 0.0
        %1819 = vmatprep.subr.mxu0 0.0
        %1820 = vmatpush1.msra.mxu0 0.0
        %1821 = vmatprep.subr.mxu0 0.0
        %1822 = vmatpush1.msra.mxu0 0.0
        %1823 = vmatprep.subr.mxu0 0.0
        %1824 = vmatpush1.msra.mxu0 0.0
        %1825 = vmatprep.subr.mxu0 0.0
        %1826 = vmatpush1.msra.mxu0 0.0
        %1827 = vmatprep.subr.mxu0 0.0
        %1828 = vmatpush1.msra.mxu0 0.0
        %1829 = vmatprep.subr.mxu0 0.0
        %1830 = vmatpush1.msra.mxu0 0.0
        %1831 = vmatprep.subr.mxu0 0.0
        %1832 = vmatpush1.msra.mxu0 0.0
        %1833 = vmatprep.subr.mxu0 0.0
        %1834 = vmatpush1.msra.mxu0 0.0
        %1835 = vmatprep.subr.mxu0 0.0
        %1836 = vmatpush1.msra.mxu0 0.0
        %1837 = vmatprep.subr.mxu0 0.0
        %1838 = vmatpush1.msra.mxu0 0.0
        %1839 = vmatprep.subr.mxu0 0.0
        %1840 = vmatpush1.msra.mxu0 0.0
        %1841 = vmatprep.subr.mxu0 0.0
        %1842 = vmatpush1.msra.mxu0 0.0
        %1843 = vmatprep.subr.mxu0 0.0
        %1844 = vmatpush1.msra.mxu0 0.0
        %1845 = vmatprep.subr.mxu0 0.0
        %1846 = vmatpush1.msra.mxu0 0.0
        %1847 = vmatprep.subr.mxu0 0.0
        %1848 = vmatpush1.msra.mxu0 0.0
        %1849 = vmatprep.subr.mxu0 0.0
        %1850 = vmatpush1.msra.mxu0 0.0
        %1851 = vmatprep.subr.mxu0 0.0
        %1852 = vmatpush1.msra.mxu0 0.0
        %1853 = vmatprep.subr.mxu0 0.0
        %1854 = vmatpush1.msra.mxu0 0.0
        %1855 = vmatprep.subr.mxu0 0.0
        %1856 = vmatpush1.msra.mxu0 0.0
        %1857 = vmatprep.subr.mxu0 0.0
        %1858 = vmatpush1.msra.mxu0 0.0
        %1859 = vmatprep.subr.mxu0 0.0
        %1860 = vmatpush1.msra.mxu0 0.0
        %1861 = vmatprep.subr.mxu0 0.0
        %1862 = vmatpush1.msra.mxu0 0.0
        %1863 = vmatprep.subr.mxu0 0.0
        %1864 = vmatpush1.msra.mxu0 0.0
        %1865 = vmatprep.subr.mxu0 0.0
        %1866 = vmatpush1.msra.mxu0 0.0
        %1867 = vmatprep.subr.mxu0 0.0
        %1868 = vmatpush1.msra.mxu0 0.0
        %1869 = vmatprep.mubr.f32.mxu0 0.0
        %1870 = vmatmul.mubr.f32.gmra.mrb[0].mxu0 %v1794
        %v1871 = vpop.f32.mrb[0].mxu0
        %v1872 = vadd.f32 %v1776, %v1871
        %v1873 = vpop.f32.mrb[0].mxu0
        %v1874 = vadd.f32 %v1776, %v1873
        %1875 = vmatprep.mubr.f32.mxu0 0.0
        %1876 = vmatmul.mubr.f32.gmra.mrb[0].mxu0 %v1797
        %v1877 = vpop.f32.mrb[0].mxu0
        %v1878 = vadd.f32 %v1781, %v1877
        %v1879 = vpop.f32.mrb[0].mxu0
        %v1880 = vadd.f32 %v1781, %v1879
        %1881 = vmatprep.mubr.f32.mxu0 0.0
        %1882 = vmatmul.mubr.f32.gmra.mrb[0].mxu0 %v1800
        %v1883 = vpop.f32.mrb[0].mxu0
        %v1884 = vadd.f32 %v1786, %v1883
        %v1885 = vpop.f32.mrb[0].mxu0
        %v1886 = vadd.f32 %v1786, %v1885
        %1887 = vmatprep.mubr.f32.mxu0 0.0
        %1888 = vmatmul.mubr.f32.gmra.mrb[0].mxu0 %v1803
        %v1889 = vpop.f32.mrb[0].mxu0
        %v1890 = vadd.f32 %v1791, %v1889
        %v1891 = vpop.f32.mrb[0].mxu0
        %v1892 = vadd.f32 %v1791, %v1891
        %1893 = vdwg.mxu0
        %v1894 = vxor.u32 %v1872, 2147483648
        %v1895 = vxor.u32 %v1874, 2147483648
        %v1896 = vxor.u32 %v1878, 2147483648
        %v1897 = vxor.u32 %v1880, 2147483648
        %v1898 = vxor.u32 %v1884, 2147483648
        %v1899 = vxor.u32 %v1886, 2147483648
        %v1900 = vxor.u32 %v1890, 2147483648
        %v1901 = vxor.u32 %v1892, 2147483648
        %v1902 = vmul.f32 %v1894, 1.442695
        %v1903 = vpow.pop %v1902
        %v1904 = vmul.f32 %v1895, 1.442695
        %v1905 = vpow.pop %v1904
        %v1906 = vmul.f32 %v1896, 1.442695
        %v1907 = vpow.pop %v1906
        %v1908 = vmul.f32 %v1897, 1.442695
        %v1909 = vpow.pop %v1908
        %v1910 = vmul.f32 %v1898, 1.442695
        %v1911 = vpow.pop %v1910
        %v1912 = vmul.f32 %v1899, 1.442695
        %v1913 = vpow.pop %v1912
        %v1914 = vmul.f32 %v1900, 1.442695
        %v1915 = vpow.pop %v1914
        %v1916 = vmul.f32 %v1901, 1.442695
        %v1917 = vpow.pop %v1916
        %v1918 = vadd.f32 %v1903, 1.0
        %v1919 = vadd.f32 %v1905, 1.0
        %v1920 = vadd.f32 %v1907, 1.0
        %v1921 = vadd.f32 %v1909, 1.0
        %v1922 = vadd.f32 %v1911, 1.0
        %v1923 = vadd.f32 %v1913, 1.0
        %v1924 = vadd.f32 %v1915, 1.0
        %v1925 = vadd.f32 %v1917, 1.0
        %v1926 = vrcp.pop %v1918
        %v1927 = vmul.f32 1.0, %v1926
        %v1928 = vrcp.pop %v1919
        %v1929 = vmul.f32 1.0, %v1928
        %v1930 = vrcp.pop %v1920
        %v1931 = vmul.f32 1.0, %v1930
        %v1932 = vrcp.pop %v1921
        %v1933 = vmul.f32 1.0, %v1932
        %v1934 = vrcp.pop %v1922
        %v1935 = vmul.f32 1.0, %v1934
        %v1936 = vrcp.pop %v1923
        %v1937 = vmul.f32 1.0, %v1936
        %v1938 = vrcp.pop %v1924
        %v1939 = vmul.f32 1.0, %v1938
        %v1940 = vrcp.pop %v1925
        %v1941 = vmul.f32 1.0, %v1940
        %v1942 = vmul.f32 %v1872, %v1927
        %v1943 = vmul.f32 %v1874, %v1929
        %v1944 = vmul.f32 %v1878, %v1931
        %v1945 = vmul.f32 %v1880, %v1933
        %v1946 = vmul.f32 %v1884, %v1935
        %v1947 = vmul.f32 %v1886, %v1937
        %v1948 = vmul.f32 %v1890, %v1939
        %v1949 = vmul.f32 %v1892, %v1941
        %1950 = vset.pattern.permute.xlu0 22
        %1951 = vperm.xlu0 %1950, %v423
        %v1952 = vpop.permute.xlu0 %1951
        %1954 = vset.pattern.permute.xlu0 22
        %1955 = vperm.xlu0 %1954, %v424
        %v1956 = vpop.permute.xlu0 %1955
        %1958 = vset.pattern.permute.xlu0 22
        %1959 = vperm.xlu0 %1958, %v425
        %v1960 = vpop.permute.xlu0 %1959
        %1962 = vset.pattern.permute.xlu0 22
        %1963 = vperm.xlu0 %1962, %v426
        %v1964 = vpop.permute.xlu0 %1963
        %v1966 = vmul.f32 %v1942, %v1952
        %v1967 = vmul.f32 %v1943, %v1952
        %v1968 = vmul.f32 %v1944, %v1956
        %v1969 = vmul.f32 %v1945, %v1956
        %v1970 = vmul.f32 %v1946, %v1960
        %v1971 = vmul.f32 %v1947, %v1960
        %v1972 = vmul.f32 %v1948, %v1964
        %v1973 = vmul.f32 %v1949, %v1964
        %1974 = vrot.lane.b32.xlu0 %v1942, 17
        %v1975 = vpop.permute.xlu0 %1974
        %1976 = vrot.lane.b32.xlu0 %v1944, 17
        %v1977 = vpop.permute.xlu0 %1976
        %1978 = vrot.lane.b32.xlu0 %v1946, 17
        %v1979 = vpop.permute.xlu0 %1978
        %1980 = vrot.lane.b32.xlu0 %v1948, 17
        %v1981 = vpop.permute.xlu0 %1980
        %1982 = vrot.lane.b32.xlu0 %v1943, 17
        %v1983 = vpop.permute.xlu0 %1982
        %1984 = vrot.lane.b32.xlu0 %v1945, 17
        %v1985 = vpop.permute.xlu0 %1984
        %1986 = vrot.lane.b32.xlu0 %v1947, 17
        %v1987 = vpop.permute.xlu0 %1986
        %1988 = vrot.lane.b32.xlu0 %v1949, 17
        %v1989 = vpop.permute.xlu0 %1988
        %v1990 = vsel %vm473, %v1975, %v1983
        %v1991 = vsel %vm473, %v1977, %v1985
        %v1992 = vsel %vm473, %v1979, %v1987
        %v1993 = vsel %vm473, %v1981, %v1989
        %v1994 = vsel %vm473, %v1983, %v1975
        %v1995 = vsel %vm473, %v1985, %v1977
        %v1996 = vsel %vm473, %v1987, %v1979
        %v1997 = vsel %vm473, %v1989, %v1981
        %v1998 = vmul.f32 %v1994, %v485
        %v1999 = vmul.f32 %v1990, %v489
        %v2000 = vmul.f32 %v1995, %v485
        %v2001 = vmul.f32 %v1991, %v489
        %v2002 = vmul.f32 %v1996, %v485
        %v2003 = vmul.f32 %v1992, %v489
        %v2004 = vmul.f32 %v1997, %v485
        %v2005 = vmul.f32 %v1993, %v489
        %2006 = vset.pattern.permute.xlu0 18
        %2007 = vperm.xlu0 %2006, %v423
        %v2008 = vpop.permute.xlu0 %2007
        %2010 = vset.pattern.permute.xlu0 18
        %2011 = vperm.xlu0 %2010, %v424
        %v2012 = vpop.permute.xlu0 %2011
        %2014 = vset.pattern.permute.xlu0 18
        %2015 = vperm.xlu0 %2014, %v425
        %v2016 = vpop.permute.xlu0 %2015
        %2018 = vset.pattern.permute.xlu0 18
        %2019 = vperm.xlu0 %2018, %v426
        %v2020 = vpop.permute.xlu0 %2019
        %v2022 = vmul.f32 %v1998, %v2008
        %v2023 = vmul.f32 %v1999, %v2008
        %v2024 = vmul.f32 %v2000, %v2012
        %v2025 = vmul.f32 %v2001, %v2012
        %v2026 = vmul.f32 %v2002, %v2016
        %v2027 = vmul.f32 %v2003, %v2016
        %v2028 = vmul.f32 %v2004, %v2020
        %v2029 = vmul.f32 %v2005, %v2020
        %v2030 = vadd.f32 %v1966, %v2022
        %v2031 = vadd.f32 %v1967, %v2023
        %v2032 = vadd.f32 %v1968, %v2024
        %v2033 = vadd.f32 %v1969, %v2025
        %v2034 = vadd.f32 %v1970, %v2026
        %v2035 = vadd.f32 %v1971, %v2027
        %v2036 = vadd.f32 %v1972, %v2028
        %v2037 = vadd.f32 %v1973, %v2029
        %2038 = vrot.lane.b32.xlu0 %v1942, 16
        %v2039 = vpop.permute.xlu0 %2038
        %2040 = vrot.lane.b32.xlu0 %v1944, 16
        %v2041 = vpop.permute.xlu0 %2040
        %2042 = vrot.lane.b32.xlu0 %v1946, 16
        %v2043 = vpop.permute.xlu0 %2042
        %2044 = vrot.lane.b32.xlu0 %v1948, 16
        %v2045 = vpop.permute.xlu0 %2044
        %2046 = vrot.lane.b32.xlu0 %v1943, 16
        %v2047 = vpop.permute.xlu0 %2046
        %2048 = vrot.lane.b32.xlu0 %v1945, 16
        %v2049 = vpop.permute.xlu0 %2048
        %2050 = vrot.lane.b32.xlu0 %v1947, 16
        %v2051 = vpop.permute.xlu0 %2050
        %2052 = vrot.lane.b32.xlu0 %v1949, 16
        %v2053 = vpop.permute.xlu0 %2052
        %v2054 = vsel %vm546, %v2039, %v2047
        %v2055 = vsel %vm546, %v2041, %v2049
        %v2056 = vsel %vm546, %v2043, %v2051
        %v2057 = vsel %vm546, %v2045, %v2053
        %v2058 = vsel %vm546, %v2047, %v2039
        %v2059 = vsel %vm546, %v2049, %v2041
        %v2060 = vsel %vm546, %v2051, %v2043
        %v2061 = vsel %vm546, %v2053, %v2045
        %v2062 = vmul.f32 %v2058, %v558
        %v2063 = vmul.f32 %v2054, %v562
        %v2064 = vmul.f32 %v2059, %v558
        %v2065 = vmul.f32 %v2055, %v562
        %v2066 = vmul.f32 %v2060, %v558
        %v2067 = vmul.f32 %v2056, %v562
        %v2068 = vmul.f32 %v2061, %v558
        %v2069 = vmul.f32 %v2057, %v562
        %2070 = vset.pattern.permute.xlu0 19
        %2071 = vperm.xlu0 %2070, %v423
        %v2072 = vpop.permute.xlu0 %2071
        %2074 = vset.pattern.permute.xlu0 19
        %2075 = vperm.xlu0 %2074, %v424
        %v2076 = vpop.permute.xlu0 %2075
        %2078 = vset.pattern.permute.xlu0 19
        %2079 = vperm.xlu0 %2078, %v425
        %v2080 = vpop.permute.xlu0 %2079
        %2082 = vset.pattern.permute.xlu0 19
        %2083 = vperm.xlu0 %2082, %v426
        %v2084 = vpop.permute.xlu0 %2083
        %v2086 = vmul.f32 %v2062, %v2072
        %v2087 = vmul.f32 %v2063, %v2072
        %v2088 = vmul.f32 %v2064, %v2076
        %v2089 = vmul.f32 %v2065, %v2076
        %v2090 = vmul.f32 %v2066, %v2080
        %v2091 = vmul.f32 %v2067, %v2080
        %v2092 = vmul.f32 %v2068, %v2084
        %v2093 = vmul.f32 %v2069, %v2084
        %v2094 = vadd.f32 %v2030, %v2086
        %v2095 = vadd.f32 %v2031, %v2087
        %v2096 = vadd.f32 %v2032, %v2088
        %v2097 = vadd.f32 %v2033, %v2089
        %v2098 = vadd.f32 %v2034, %v2090
        %v2099 = vadd.f32 %v2035, %v2091
        %v2100 = vadd.f32 %v2036, %v2092
        %v2101 = vadd.f32 %v2037, %v2093
        %2102 = vrot.lane.b32.xlu0 %v1942, 15
        %v2103 = vpop.permute.xlu0 %2102
        %2104 = vrot.lane.b32.xlu0 %v1944, 15
        %v2105 = vpop.permute.xlu0 %2104
        %2106 = vrot.lane.b32.xlu0 %v1946, 15
        %v2107 = vpop.permute.xlu0 %2106
        %2108 = vrot.lane.b32.xlu0 %v1948, 15
        %v2109 = vpop.permute.xlu0 %2108
        %2110 = vrot.lane.b32.xlu0 %v1943, 15
        %v2111 = vpop.permute.xlu0 %2110
        %2112 = vrot.lane.b32.xlu0 %v1945, 15
        %v2113 = vpop.permute.xlu0 %2112
        %2114 = vrot.lane.b32.xlu0 %v1947, 15
        %v2115 = vpop.permute.xlu0 %2114
        %2116 = vrot.lane.b32.xlu0 %v1949, 15
        %v2117 = vpop.permute.xlu0 %2116
        %v2118 = vsel %vm619, %v2103, %v2111
        %v2119 = vsel %vm619, %v2105, %v2113
        %v2120 = vsel %vm619, %v2107, %v2115
        %v2121 = vsel %vm619, %v2109, %v2117
        %v2122 = vsel %vm619, %v2111, %v2103
        %v2123 = vsel %vm619, %v2113, %v2105
        %v2124 = vsel %vm619, %v2115, %v2107
        %v2125 = vsel %vm619, %v2117, %v2109
        %v2126 = vmul.f32 %v2122, %v631
        %v2127 = vmul.f32 %v2118, %v635
        %v2128 = vmul.f32 %v2123, %v631
        %v2129 = vmul.f32 %v2119, %v635
        %v2130 = vmul.f32 %v2124, %v631
        %v2131 = vmul.f32 %v2120, %v635
        %v2132 = vmul.f32 %v2125, %v631
        %v2133 = vmul.f32 %v2121, %v635
        %2134 = vset.pattern.permute.xlu0 20
        %2135 = vperm.xlu0 %2134, %v423
        %v2136 = vpop.permute.xlu0 %2135
        %2138 = vset.pattern.permute.xlu0 20
        %2139 = vperm.xlu0 %2138, %v424
        %v2140 = vpop.permute.xlu0 %2139
        %2142 = vset.pattern.permute.xlu0 20
        %2143 = vperm.xlu0 %2142, %v425
        %v2144 = vpop.permute.xlu0 %2143
        %2146 = vset.pattern.permute.xlu0 20
        %2147 = vperm.xlu0 %2146, %v426
        %v2148 = vpop.permute.xlu0 %2147
        %v2150 = vmul.f32 %v2126, %v2136
        %v2151 = vmul.f32 %v2127, %v2136
        %v2152 = vmul.f32 %v2128, %v2140
        %v2153 = vmul.f32 %v2129, %v2140
        %v2154 = vmul.f32 %v2130, %v2144
        %v2155 = vmul.f32 %v2131, %v2144
        %v2156 = vmul.f32 %v2132, %v2148
        %v2157 = vmul.f32 %v2133, %v2148
        %v2158 = vadd.f32 %v2094, %v2150
        %v2159 = vadd.f32 %v2095, %v2151
        %v2160 = vadd.f32 %v2096, %v2152
        %v2161 = vadd.f32 %v2097, %v2153
        %v2162 = vadd.f32 %v2098, %v2154
        %v2163 = vadd.f32 %v2099, %v2155
        %v2164 = vadd.f32 %v2100, %v2156
        %v2165 = vadd.f32 %v2101, %v2157
        %2166 = vrot.lane.b32.xlu0 %v1942, 1
        %v2167 = vpop.permute.xlu0 %2166
        %2168 = vrot.lane.b32.xlu0 %v1944, 1
        %v2169 = vpop.permute.xlu0 %2168
        %2170 = vrot.lane.b32.xlu0 %v1946, 1
        %v2171 = vpop.permute.xlu0 %2170
        %2172 = vrot.lane.b32.xlu0 %v1948, 1
        %v2173 = vpop.permute.xlu0 %2172
        %2174 = vrot.lane.b32.xlu0 %v1943, 1
        %v2175 = vpop.permute.xlu0 %2174
        %2176 = vrot.lane.b32.xlu0 %v1945, 1
        %v2177 = vpop.permute.xlu0 %2176
        %2178 = vrot.lane.b32.xlu0 %v1947, 1
        %v2179 = vpop.permute.xlu0 %2178
        %2180 = vrot.lane.b32.xlu0 %v1949, 1
        %v2181 = vpop.permute.xlu0 %2180
        %v2182 = vsel %vm692, %v2167, %v2175
        %v2183 = vsel %vm692, %v2169, %v2177
        %v2184 = vsel %vm692, %v2171, %v2179
        %v2185 = vsel %vm692, %v2173, %v2181
        %v2186 = vsel %vm692, %v2175, %v2167
        %v2187 = vsel %vm692, %v2177, %v2169
        %v2188 = vsel %vm692, %v2179, %v2171
        %v2189 = vsel %vm692, %v2181, %v2173
        %v2190 = vmul.f32 %v2186, %v704
        %v2191 = vmul.f32 %v2182, %v708
        %v2192 = vmul.f32 %v2187, %v704
        %v2193 = vmul.f32 %v2183, %v708
        %v2194 = vmul.f32 %v2188, %v704
        %v2195 = vmul.f32 %v2184, %v708
        %v2196 = vmul.f32 %v2189, %v704
        %v2197 = vmul.f32 %v2185, %v708
        %2198 = vset.pattern.permute.xlu0 21
        %2199 = vperm.xlu0 %2198, %v423
        %v2200 = vpop.permute.xlu0 %2199
        %2202 = vset.pattern.permute.xlu0 21
        %2203 = vperm.xlu0 %2202, %v424
        %v2204 = vpop.permute.xlu0 %2203
        %2206 = vset.pattern.permute.xlu0 21
        %2207 = vperm.xlu0 %2206, %v425
        %v2208 = vpop.permute.xlu0 %2207
        %2210 = vset.pattern.permute.xlu0 21
        %2211 = vperm.xlu0 %2210, %v426
        %v2212 = vpop.permute.xlu0 %2211
        %v2214 = vmul.f32 %v2190, %v2200
        %v2215 = vmul.f32 %v2191, %v2200
        %v2216 = vmul.f32 %v2192, %v2204
        %v2217 = vmul.f32 %v2193, %v2204
        %v2218 = vmul.f32 %v2194, %v2208
        %v2219 = vmul.f32 %v2195, %v2208
        %v2220 = vmul.f32 %v2196, %v2212
        %v2221 = vmul.f32 %v2197, %v2212
        %v2222 = vadd.f32 %v2158, %v2214
        %v2223 = vadd.f32 %v2159, %v2215
        %v2224 = vadd.f32 %v2160, %v2216
        %v2225 = vadd.f32 %v2161, %v2217
        %v2226 = vadd.f32 %v2162, %v2218
        %v2227 = vadd.f32 %v2163, %v2219
        %v2228 = vadd.f32 %v2164, %v2220
        %v2229 = vadd.f32 %v2165, %v2221
        %2230 = vrot.lane.b32.xlu0 %v1942, 127
        %v2231 = vpop.permute.xlu0 %2230
        %2232 = vrot.lane.b32.xlu0 %v1944, 127
        %v2233 = vpop.permute.xlu0 %2232
        %2234 = vrot.lane.b32.xlu0 %v1946, 127
        %v2235 = vpop.permute.xlu0 %2234
        %2236 = vrot.lane.b32.xlu0 %v1948, 127
        %v2237 = vpop.permute.xlu0 %2236
        %2238 = vrot.lane.b32.xlu0 %v1943, 127
        %v2239 = vpop.permute.xlu0 %2238
        %2240 = vrot.lane.b32.xlu0 %v1945, 127
        %v2241 = vpop.permute.xlu0 %2240
        %2242 = vrot.lane.b32.xlu0 %v1947, 127
        %v2243 = vpop.permute.xlu0 %2242
        %2244 = vrot.lane.b32.xlu0 %v1949, 127
        %v2245 = vpop.permute.xlu0 %2244
        %v2246 = vsel %vm765, %v2231, %v2239
        %v2247 = vsel %vm765, %v2233, %v2241
        %v2248 = vsel %vm765, %v2235, %v2243
        %v2249 = vsel %vm765, %v2237, %v2245
        %v2250 = vsel %vm765, %v2239, %v2231
        %v2251 = vsel %vm765, %v2241, %v2233
        %v2252 = vsel %vm765, %v2243, %v2235
        %v2253 = vsel %vm765, %v2245, %v2237
        %v2254 = vmul.f32 %v2246, %v777
        %v2255 = vmul.f32 %v2250, %v781
        %v2256 = vmul.f32 %v2247, %v777
        %v2257 = vmul.f32 %v2251, %v781
        %v2258 = vmul.f32 %v2248, %v777
        %v2259 = vmul.f32 %v2252, %v781
        %v2260 = vmul.f32 %v2249, %v777
        %v2261 = vmul.f32 %v2253, %v781
        %2262 = vset.pattern.permute.xlu0 23
        %2263 = vperm.xlu0 %2262, %v423
        %v2264 = vpop.permute.xlu0 %2263
        %2266 = vset.pattern.permute.xlu0 23
        %2267 = vperm.xlu0 %2266, %v424
        %v2268 = vpop.permute.xlu0 %2267
        %2270 = vset.pattern.permute.xlu0 23
        %2271 = vperm.xlu0 %2270, %v425
        %v2272 = vpop.permute.xlu0 %2271
        %2274 = vset.pattern.permute.xlu0 23
        %2275 = vperm.xlu0 %2274, %v426
        %v2276 = vpop.permute.xlu0 %2275
        %v2278 = vmul.f32 %v2254, %v2264
        %v2279 = vmul.f32 %v2255, %v2264
        %v2280 = vmul.f32 %v2256, %v2268
        %v2281 = vmul.f32 %v2257, %v2268
        %v2282 = vmul.f32 %v2258, %v2272
        %v2283 = vmul.f32 %v2259, %v2272
        %v2284 = vmul.f32 %v2260, %v2276
        %v2285 = vmul.f32 %v2261, %v2276
        %v2286 = vadd.f32 %v2222, %v2278
        %v2287 = vadd.f32 %v2223, %v2279
        %v2288 = vadd.f32 %v2224, %v2280
        %v2289 = vadd.f32 %v2225, %v2281
        %v2290 = vadd.f32 %v2226, %v2282
        %v2291 = vadd.f32 %v2227, %v2283
        %v2292 = vadd.f32 %v2228, %v2284
        %v2293 = vadd.f32 %v2229, %v2285
        %2294 = vrot.lane.b32.xlu0 %v1942, 113
        %v2295 = vpop.permute.xlu0 %2294
        %2296 = vrot.lane.b32.xlu0 %v1944, 113
        %v2297 = vpop.permute.xlu0 %2296
        %2298 = vrot.lane.b32.xlu0 %v1946, 113
        %v2299 = vpop.permute.xlu0 %2298
        %2300 = vrot.lane.b32.xlu0 %v1948, 113
        %v2301 = vpop.permute.xlu0 %2300
        %2302 = vrot.lane.b32.xlu0 %v1943, 113
        %v2303 = vpop.permute.xlu0 %2302
        %2304 = vrot.lane.b32.xlu0 %v1945, 113
        %v2305 = vpop.permute.xlu0 %2304
        %2306 = vrot.lane.b32.xlu0 %v1947, 113
        %v2307 = vpop.permute.xlu0 %2306
        %2308 = vrot.lane.b32.xlu0 %v1949, 113
        %v2309 = vpop.permute.xlu0 %2308
        %v2310 = vsel %vm838, %v2295, %v2303
        %v2311 = vsel %vm838, %v2297, %v2305
        %v2312 = vsel %vm838, %v2299, %v2307
        %v2313 = vsel %vm838, %v2301, %v2309
        %v2314 = vsel %vm838, %v2303, %v2295
        %v2315 = vsel %vm838, %v2305, %v2297
        %v2316 = vsel %vm838, %v2307, %v2299
        %v2317 = vsel %vm838, %v2309, %v2301
        %v2318 = vmul.f32 %v2310, %v850
        %v2319 = vmul.f32 %v2314, %v854
        %v2320 = vmul.f32 %v2311, %v850
        %v2321 = vmul.f32 %v2315, %v854
        %v2322 = vmul.f32 %v2312, %v850
        %v2323 = vmul.f32 %v2316, %v854
        %v2324 = vmul.f32 %v2313, %v850
        %v2325 = vmul.f32 %v2317, %v854
        %2326 = vset.pattern.permute.xlu0 24
        %2327 = vperm.xlu0 %2326, %v423
        %v2328 = vpop.permute.xlu0 %2327
        %2330 = vset.pattern.permute.xlu0 24
        %2331 = vperm.xlu0 %2330, %v424
        %v2332 = vpop.permute.xlu0 %2331
        %2334 = vset.pattern.permute.xlu0 24
        %2335 = vperm.xlu0 %2334, %v425
        %v2336 = vpop.permute.xlu0 %2335
        %2338 = vset.pattern.permute.xlu0 24
        %2339 = vperm.xlu0 %2338, %v426
        %v2340 = vpop.permute.xlu0 %2339
        %v2342 = vmul.f32 %v2318, %v2328
        %v2343 = vmul.f32 %v2319, %v2328
        %v2344 = vmul.f32 %v2320, %v2332
        %v2345 = vmul.f32 %v2321, %v2332
        %v2346 = vmul.f32 %v2322, %v2336
        %v2347 = vmul.f32 %v2323, %v2336
        %v2348 = vmul.f32 %v2324, %v2340
        %v2349 = vmul.f32 %v2325, %v2340
        %v2350 = vadd.f32 %v2286, %v2342
        %v2351 = vadd.f32 %v2287, %v2343
        %v2352 = vadd.f32 %v2288, %v2344
        %v2353 = vadd.f32 %v2289, %v2345
        %v2354 = vadd.f32 %v2290, %v2346
        %v2355 = vadd.f32 %v2291, %v2347
        %v2356 = vadd.f32 %v2292, %v2348
        %v2357 = vadd.f32 %v2293, %v2349
        %2358 = vrot.lane.b32.xlu0 %v1942, 112
        %v2359 = vpop.permute.xlu0 %2358
        %2360 = vrot.lane.b32.xlu0 %v1944, 112
        %v2361 = vpop.permute.xlu0 %2360
        %2362 = vrot.lane.b32.xlu0 %v1946, 112
        %v2363 = vpop.permute.xlu0 %2362
        %2364 = vrot.lane.b32.xlu0 %v1948, 112
        %v2365 = vpop.permute.xlu0 %2364
        %2366 = vrot.lane.b32.xlu0 %v1943, 112
        %v2367 = vpop.permute.xlu0 %2366
        %2368 = vrot.lane.b32.xlu0 %v1945, 112
        %v2369 = vpop.permute.xlu0 %2368
        %2370 = vrot.lane.b32.xlu0 %v1947, 112
        %v2371 = vpop.permute.xlu0 %2370
        %2372 = vrot.lane.b32.xlu0 %v1949, 112
        %v2373 = vpop.permute.xlu0 %2372
        %v2374 = vsel %vm911, %v2359, %v2367
        %v2375 = vsel %vm911, %v2361, %v2369
        %v2376 = vsel %vm911, %v2363, %v2371
        %v2377 = vsel %vm911, %v2365, %v2373
        %v2378 = vsel %vm911, %v2367, %v2359
        %v2379 = vsel %vm911, %v2369, %v2361
        %v2380 = vsel %vm911, %v2371, %v2363
        %v2381 = vsel %vm911, %v2373, %v2365
        %v2382 = vmul.f32 %v2374, %v923
        %v2383 = vmul.f32 %v2378, %v927
        %v2384 = vmul.f32 %v2375, %v923
        %v2385 = vmul.f32 %v2379, %v927
        %v2386 = vmul.f32 %v2376, %v923
        %v2387 = vmul.f32 %v2380, %v927
        %v2388 = vmul.f32 %v2377, %v923
        %v2389 = vmul.f32 %v2381, %v927
        %2390 = vset.pattern.permute.xlu0 25
        %2391 = vperm.xlu0 %2390, %v423
        %v2392 = vpop.permute.xlu0 %2391
        %2394 = vset.pattern.permute.xlu0 25
        %2395 = vperm.xlu0 %2394, %v424
        %v2396 = vpop.permute.xlu0 %2395
        %2398 = vset.pattern.permute.xlu0 25
        %2399 = vperm.xlu0 %2398, %v425
        %v2400 = vpop.permute.xlu0 %2399
        %2402 = vset.pattern.permute.xlu0 25
        %2403 = vperm.xlu0 %2402, %v426
        %v2404 = vpop.permute.xlu0 %2403
        %v2406 = vmul.f32 %v2382, %v2392
        %v2407 = vmul.f32 %v2383, %v2392
        %v2408 = vmul.f32 %v2384, %v2396
        %v2409 = vmul.f32 %v2385, %v2396
        %v2410 = vmul.f32 %v2386, %v2400
        %v2411 = vmul.f32 %v2387, %v2400
        %v2412 = vmul.f32 %v2388, %v2404
        %v2413 = vmul.f32 %v2389, %v2404
        %v2414 = vadd.f32 %v2350, %v2406
        %v2415 = vadd.f32 %v2351, %v2407
        %v2416 = vadd.f32 %v2352, %v2408
        %v2417 = vadd.f32 %v2353, %v2409
        %v2418 = vadd.f32 %v2354, %v2410
        %v2419 = vadd.f32 %v2355, %v2411
        %v2420 = vadd.f32 %v2356, %v2412
        %v2421 = vadd.f32 %v2357, %v2413
        %2422 = vrot.lane.b32.xlu0 %v1942, 111
        %v2423 = vpop.permute.xlu0 %2422
        %2424 = vrot.lane.b32.xlu0 %v1944, 111
        %v2425 = vpop.permute.xlu0 %2424
        %2426 = vrot.lane.b32.xlu0 %v1946, 111
        %v2427 = vpop.permute.xlu0 %2426
        %2428 = vrot.lane.b32.xlu0 %v1948, 111
        %v2429 = vpop.permute.xlu0 %2428
        %2430 = vrot.lane.b32.xlu0 %v1943, 111
        %v2431 = vpop.permute.xlu0 %2430
        %2432 = vrot.lane.b32.xlu0 %v1945, 111
        %v2433 = vpop.permute.xlu0 %2432
        %2434 = vrot.lane.b32.xlu0 %v1947, 111
        %v2435 = vpop.permute.xlu0 %2434
        %2436 = vrot.lane.b32.xlu0 %v1949, 111
        %v2437 = vpop.permute.xlu0 %2436
        %v2438 = vsel %vm984, %v2423, %v2431
        %v2439 = vsel %vm984, %v2425, %v2433
        %v2440 = vsel %vm984, %v2427, %v2435
        %v2441 = vsel %vm984, %v2429, %v2437
        %v2442 = vsel %vm984, %v2431, %v2423
        %v2443 = vsel %vm984, %v2433, %v2425
        %v2444 = vsel %vm984, %v2435, %v2427
        %v2445 = vsel %vm984, %v2437, %v2429
        %v2446 = vmul.f32 %v2438, %v996
        %v2447 = vmul.f32 %v2442, %v1000
        %v2448 = vmul.f32 %v2439, %v996
        %v2449 = vmul.f32 %v2443, %v1000
        %v2450 = vmul.f32 %v2440, %v996
        %v2451 = vmul.f32 %v2444, %v1000
        %v2452 = vmul.f32 %v2441, %v996
        %v2453 = vmul.f32 %v2445, %v1000
        %2454 = vset.pattern.permute.xlu0 26
        %2455 = vperm.xlu0 %2454, %v423
        %v2456 = vpop.permute.xlu0 %2455
        %2458 = vset.pattern.permute.xlu0 26
        %2459 = vperm.xlu0 %2458, %v424
        %v2460 = vpop.permute.xlu0 %2459
        %2462 = vset.pattern.permute.xlu0 26
        %2463 = vperm.xlu0 %2462, %v425
        %v2464 = vpop.permute.xlu0 %2463
        %2466 = vset.pattern.permute.xlu0 26
        %2467 = vperm.xlu0 %2466, %v426
        %v2468 = vpop.permute.xlu0 %2467
        %v2470 = vmul.f32 %v2446, %v2456
        %v2471 = vmul.f32 %v2447, %v2456
        %v2472 = vmul.f32 %v2448, %v2460
        %v2473 = vmul.f32 %v2449, %v2460
        %v2474 = vmul.f32 %v2450, %v2464
        %v2475 = vmul.f32 %v2451, %v2464
        %v2476 = vmul.f32 %v2452, %v2468
        %v2477 = vmul.f32 %v2453, %v2468
        %v2478 = vadd.f32 %v2414, %v2470
        %v2479 = vadd.f32 %v2415, %v2471
        %v2480 = vadd.f32 %v2416, %v2472
        %v2481 = vadd.f32 %v2417, %v2473
        %v2482 = vadd.f32 %v2418, %v2474
        %v2483 = vadd.f32 %v2419, %v2475
        %v2484 = vadd.f32 %v2420, %v2476
        %v2485 = vadd.f32 %v2421, %v2477
        %s2486 = scalar_lea.vmem %s351, 64 [#allocation5]
        %v2487 = vld [vmem:[%s2486] sm:$0xff]
        %v2488 = vld [vmem:[%s2486 + $0x8] sm:$0xff]
        %v2489 = vld [vmem:[%s2486 + $0x10] sm:$0xff]
        %v2490 = vld [vmem:[%s2486 + $0x18] sm:$0xff]
        %s2491 = scalar_lea.vmem %s410, 64
        %v2492 = vld [vmem:[%s2491] sm:$0xff]
        %v2493 = vld [vmem:[%s2491 + $0x8] sm:$0xff]
        %v2494 = vld [vmem:[%s2491 + $0x10] sm:$0xff]
        %v2495 = vld [vmem:[%s2491 + $0x18] sm:$0xff]
        %2497 = vset.pattern.permute.xlu0 0
        %2498 = vperm.xlu0 %2497, %v2492
        %v2499 = vpop.permute.xlu0 %2498
        %2502 = vset.pattern.permute.xlu0 0
        %2503 = vperm.xlu0 %2502, %v2493
        %v2504 = vpop.permute.xlu0 %2503
        %2507 = vset.pattern.permute.xlu0 0
        %2508 = vperm.xlu0 %2507, %v2494
        %v2509 = vpop.permute.xlu0 %2508
        %2512 = vset.pattern.permute.xlu0 0
        %2513 = vperm.xlu0 %2512, %v2495
        %v2514 = vpop.permute.xlu0 %2513
        %v2517 = vsel %vm1069, %v2487, 0
        %v2520 = vsel %vm1069, %v2488, 0
        %v2523 = vsel %vm1069, %v2489, 0
        %v2526 = vsel %vm1069, %v2490, 0
        %2528 = vmatprep.subr.mxu0 %v2479
        %2529 = vmatpush1.msra.mxu0 %v2478
        %2530 = vmatprep.subr.mxu0 %v2481
        %2531 = vmatpush1.msra.mxu0 %v2480
        %2532 = vmatprep.subr.mxu0 %v2483
        %2533 = vmatpush1.msra.mxu0 %v2482
        %2534 = vmatprep.subr.mxu0 %v2485
        %2535 = vmatpush1.msra.mxu0 %v2484
        %2536 = vmatprep.subr.mxu0 0.0
        %2537 = vmatpush1.msra.mxu0 0.0
        %2538 = vmatprep.subr.mxu0 0.0
        %2539 = vmatpush1.msra.mxu0 0.0
        %2540 = vmatprep.subr.mxu0 0.0
        %2541 = vmatpush1.msra.mxu0 0.0
        %2542 = vmatprep.subr.mxu0 0.0
        %2543 = vmatpush1.msra.mxu0 0.0
        %2544 = vmatprep.subr.mxu0 0.0
        %2545 = vmatpush1.msra.mxu0 0.0
        %2546 = vmatprep.subr.mxu0 0.0
        %2547 = vmatpush1.msra.mxu0 0.0
        %2548 = vmatprep.subr.mxu0 0.0
        %2549 = vmatpush1.msra.mxu0 0.0
        %2550 = vmatprep.subr.mxu0 0.0
        %2551 = vmatpush1.msra.mxu0 0.0
        %2552 = vmatprep.subr.mxu0 0.0
        %2553 = vmatpush1.msra.mxu0 0.0
        %2554 = vmatprep.subr.mxu0 0.0
        %2555 = vmatpush1.msra.mxu0 0.0
        %2556 = vmatprep.subr.mxu0 0.0
        %2557 = vmatpush1.msra.mxu0 0.0
        %2558 = vmatprep.subr.mxu0 0.0
        %2559 = vmatpush1.msra.mxu0 0.0
        %2560 = vmatprep.subr.mxu0 0.0
        %2561 = vmatpush1.msra.mxu0 0.0
        %2562 = vmatprep.subr.mxu0 0.0
        %2563 = vmatpush1.msra.mxu0 0.0
        %2564 = vmatprep.subr.mxu0 0.0
        %2565 = vmatpush1.msra.mxu0 0.0
        %2566 = vmatprep.subr.mxu0 0.0
        %2567 = vmatpush1.msra.mxu0 0.0
        %2568 = vmatprep.subr.mxu0 0.0
        %2569 = vmatpush1.msra.mxu0 0.0
        %2570 = vmatprep.subr.mxu0 0.0
        %2571 = vmatpush1.msra.mxu0 0.0
        %2572 = vmatprep.subr.mxu0 0.0
        %2573 = vmatpush1.msra.mxu0 0.0
        %2574 = vmatprep.subr.mxu0 0.0
        %2575 = vmatpush1.msra.mxu0 0.0
        %2576 = vmatprep.subr.mxu0 0.0
        %2577 = vmatpush1.msra.mxu0 0.0
        %2578 = vmatprep.subr.mxu0 0.0
        %2579 = vmatpush1.msra.mxu0 0.0
        %2580 = vmatprep.subr.mxu0 0.0
        %2581 = vmatpush1.msra.mxu0 0.0
        %2582 = vmatprep.subr.mxu0 0.0
        %2583 = vmatpush1.msra.mxu0 0.0
        %2584 = vmatprep.subr.mxu0 0.0
        %2585 = vmatpush1.msra.mxu0 0.0
        %2586 = vmatprep.subr.mxu0 0.0
        %2587 = vmatpush1.msra.mxu0 0.0
        %2588 = vmatprep.subr.mxu0 0.0
        %2589 = vmatpush1.msra.mxu0 0.0
        %2590 = vmatprep.subr.mxu0 0.0
        %2591 = vmatpush1.msra.mxu0 0.0
        %2592 = vmatprep.mubr.f32.mxu0 0.0
        %2593 = vmatmul.mubr.f32.gmra.mrb[0].mxu0 %v2517
        %v2594 = vpop.f32.mrb[0].mxu0
        %v2595 = vadd.f32 %v2499, %v2594
        %v2596 = vpop.f32.mrb[0].mxu0
        %v2597 = vadd.f32 %v2499, %v2596
        %2598 = vmatprep.mubr.f32.mxu0 0.0
        %2599 = vmatmul.mubr.f32.gmra.mrb[0].mxu0 %v2520
        %v2600 = vpop.f32.mrb[0].mxu0
        %v2601 = vadd.f32 %v2504, %v2600
        %v2602 = vpop.f32.mrb[0].mxu0
        %v2603 = vadd.f32 %v2504, %v2602
        %2604 = vmatprep.mubr.f32.mxu0 0.0
        %2605 = vmatmul.mubr.f32.gmra.mrb[0].mxu0 %v2523
        %v2606 = vpop.f32.mrb[0].mxu0
        %v2607 = vadd.f32 %v2509, %v2606
        %v2608 = vpop.f32.mrb[0].mxu0
        %v2609 = vadd.f32 %v2509, %v2608
        %2610 = vmatprep.mubr.f32.mxu0 0.0
        %2611 = vmatmul.mubr.f32.gmra.mrb[0].mxu0 %v2526
        %v2612 = vpop.f32.mrb[0].mxu0
        %v2613 = vadd.f32 %v2514, %v2612
        %v2614 = vpop.f32.mrb[0].mxu0
        %v2615 = vadd.f32 %v2514, %v2614
        %2616 = vdwg.mxu0
        %v2617 = vxor.u32 %v2595, 2147483648
        %v2618 = vxor.u32 %v2597, 2147483648
        %v2619 = vxor.u32 %v2601, 2147483648
        %v2620 = vxor.u32 %v2603, 2147483648
        %v2621 = vxor.u32 %v2607, 2147483648
        %v2622 = vxor.u32 %v2609, 2147483648
        %v2623 = vxor.u32 %v2613, 2147483648
        %v2624 = vxor.u32 %v2615, 2147483648
        %v2625 = vmul.f32 %v2617, 1.442695
        %v2626 = vpow.pop %v2625
        %v2627 = vmul.f32 %v2618, 1.442695
        %v2628 = vpow.pop %v2627
        %v2629 = vmul.f32 %v2619, 1.442695
        %v2630 = vpow.pop %v2629
        %v2631 = vmul.f32 %v2620, 1.442695
        %v2632 = vpow.pop %v2631
        %v2633 = vmul.f32 %v2621, 1.442695
        %v2634 = vpow.pop %v2633
        %v2635 = vmul.f32 %v2622, 1.442695
        %v2636 = vpow.pop %v2635
        %v2637 = vmul.f32 %v2623, 1.442695
        %v2638 = vpow.pop %v2637
        %v2639 = vmul.f32 %v2624, 1.442695
        %v2640 = vpow.pop %v2639
        %v2641 = vadd.f32 %v2626, 1.0
        %v2642 = vadd.f32 %v2628, 1.0
        %v2643 = vadd.f32 %v2630, 1.0
        %v2644 = vadd.f32 %v2632, 1.0
        %v2645 = vadd.f32 %v2634, 1.0
        %v2646 = vadd.f32 %v2636, 1.0
        %v2647 = vadd.f32 %v2638, 1.0
        %v2648 = vadd.f32 %v2640, 1.0
        %v2649 = vrcp.pop %v2641
        %v2650 = vmul.f32 1.0, %v2649
        %v2651 = vrcp.pop %v2642
        %v2652 = vmul.f32 1.0, %v2651
        %v2653 = vrcp.pop %v2643
        %v2654 = vmul.f32 1.0, %v2653
        %v2655 = vrcp.pop %v2644
        %v2656 = vmul.f32 1.0, %v2655
        %v2657 = vrcp.pop %v2645
        %v2658 = vmul.f32 1.0, %v2657
        %v2659 = vrcp.pop %v2646
        %v2660 = vmul.f32 1.0, %v2659
        %v2661 = vrcp.pop %v2647
        %v2662 = vmul.f32 1.0, %v2661
        %v2663 = vrcp.pop %v2648
        %v2664 = vmul.f32 1.0, %v2663
        %v2665 = vmul.f32 %v2595, %v2650
        %v2666 = vmul.f32 %v2597, %v2652
        %v2667 = vmul.f32 %v2601, %v2654
        %v2668 = vmul.f32 %v2603, %v2656
        %v2669 = vmul.f32 %v2607, %v2658
        %v2670 = vmul.f32 %v2609, %v2660
        %v2671 = vmul.f32 %v2613, %v2662
        %v2672 = vmul.f32 %v2615, %v2664
        %2673 = vset.pattern.permute.xlu0 31
        %2674 = vperm.xlu0 %2673, %v423
        %v2675 = vpop.permute.xlu0 %2674
        %2677 = vset.pattern.permute.xlu0 31
        %2678 = vperm.xlu0 %2677, %v424
        %v2679 = vpop.permute.xlu0 %2678
        %2681 = vset.pattern.permute.xlu0 31
        %2682 = vperm.xlu0 %2681, %v425
        %v2683 = vpop.permute.xlu0 %2682
        %2685 = vset.pattern.permute.xlu0 31
        %2686 = vperm.xlu0 %2685, %v426
        %v2687 = vpop.permute.xlu0 %2686
        %v2689 = vmul.f32 %v2665, %v2675
        %v2690 = vmul.f32 %v2666, %v2675
        %v2691 = vmul.f32 %v2667, %v2679
        %v2692 = vmul.f32 %v2668, %v2679
        %v2693 = vmul.f32 %v2669, %v2683
        %v2694 = vmul.f32 %v2670, %v2683
        %v2695 = vmul.f32 %v2671, %v2687
        %v2696 = vmul.f32 %v2672, %v2687
        %2697 = vrot.lane.b32.xlu0 %v2665, 17
        %v2698 = vpop.permute.xlu0 %2697
        %2699 = vrot.lane.b32.xlu0 %v2667, 17
        %v2700 = vpop.permute.xlu0 %2699
        %2701 = vrot.lane.b32.xlu0 %v2669, 17
        %v2702 = vpop.permute.xlu0 %2701
        %2703 = vrot.lane.b32.xlu0 %v2671, 17
        %v2704 = vpop.permute.xlu0 %2703
        %2705 = vrot.lane.b32.xlu0 %v2666, 17
        %v2706 = vpop.permute.xlu0 %2705
        %2707 = vrot.lane.b32.xlu0 %v2668, 17
        %v2708 = vpop.permute.xlu0 %2707
        %2709 = vrot.lane.b32.xlu0 %v2670, 17
        %v2710 = vpop.permute.xlu0 %2709
        %2711 = vrot.lane.b32.xlu0 %v2672, 17
        %v2712 = vpop.permute.xlu0 %2711
        %v2713 = vsel %vm473, %v2698, %v2706
        %v2714 = vsel %vm473, %v2700, %v2708
        %v2715 = vsel %vm473, %v2702, %v2710
        %v2716 = vsel %vm473, %v2704, %v2712
        %v2717 = vsel %vm473, %v2706, %v2698
        %v2718 = vsel %vm473, %v2708, %v2700
        %v2719 = vsel %vm473, %v2710, %v2702
        %v2720 = vsel %vm473, %v2712, %v2704
        %v2721 = vmul.f32 %v2717, %v485
        %v2722 = vmul.f32 %v2713, %v489
        %v2723 = vmul.f32 %v2718, %v485
        %v2724 = vmul.f32 %v2714, %v489
        %v2725 = vmul.f32 %v2719, %v485
        %v2726 = vmul.f32 %v2715, %v489
        %v2727 = vmul.f32 %v2720, %v485
        %v2728 = vmul.f32 %v2716, %v489
        %2729 = vset.pattern.permute.xlu0 27
        %2730 = vperm.xlu0 %2729, %v423
        %v2731 = vpop.permute.xlu0 %2730
        %2733 = vset.pattern.permute.xlu0 27
        %2734 = vperm.xlu0 %2733, %v424
        %v2735 = vpop.permute.xlu0 %2734
        %2737 = vset.pattern.permute.xlu0 27
        %2738 = vperm.xlu0 %2737, %v425
        %v2739 = vpop.permute.xlu0 %2738
        %2741 = vset.pattern.permute.xlu0 27
        %2742 = vperm.xlu0 %2741, %v426
        %v2743 = vpop.permute.xlu0 %2742
        %v2745 = vmul.f32 %v2721, %v2731
        %v2746 = vmul.f32 %v2722, %v2731
        %v2747 = vmul.f32 %v2723, %v2735
        %v2748 = vmul.f32 %v2724, %v2735
        %v2749 = vmul.f32 %v2725, %v2739
        %v2750 = vmul.f32 %v2726, %v2739
        %v2751 = vmul.f32 %v2727, %v2743
        %v2752 = vmul.f32 %v2728, %v2743
        %v2753 = vadd.f32 %v2689, %v2745
        %v2754 = vadd.f32 %v2690, %v2746
        %v2755 = vadd.f32 %v2691, %v2747
        %v2756 = vadd.f32 %v2692, %v2748
        %v2757 = vadd.f32 %v2693, %v2749
        %v2758 = vadd.f32 %v2694, %v2750
        %v2759 = vadd.f32 %v2695, %v2751
        %v2760 = vadd.f32 %v2696, %v2752
        %2761 = vrot.lane.b32.xlu0 %v2665, 16
        %v2762 = vpop.permute.xlu0 %2761
        %2763 = vrot.lane.b32.xlu0 %v2667, 16
        %v2764 = vpop.permute.xlu0 %2763
        %2765 = vrot.lane.b32.xlu0 %v2669, 16
        %v2766 = vpop.permute.xlu0 %2765
        %2767 = vrot.lane.b32.xlu0 %v2671, 16
        %v2768 = vpop.permute.xlu0 %2767
        %2769 = vrot.lane.b32.xlu0 %v2666, 16
        %v2770 = vpop.permute.xlu0 %2769
        %2771 = vrot.lane.b32.xlu0 %v2668, 16
        %v2772 = vpop.permute.xlu0 %2771
        %2773 = vrot.lane.b32.xlu0 %v2670, 16
        %v2774 = vpop.permute.xlu0 %2773
        %2775 = vrot.lane.b32.xlu0 %v2672, 16
        %v2776 = vpop.permute.xlu0 %2775
        %v2777 = vsel %vm546, %v2762, %v2770
        %v2778 = vsel %vm546, %v2764, %v2772
        %v2779 = vsel %vm546, %v2766, %v2774
        %v2780 = vsel %vm546, %v2768, %v2776
        %v2781 = vsel %vm546, %v2770, %v2762
        %v2782 = vsel %vm546, %v2772, %v2764
        %v2783 = vsel %vm546, %v2774, %v2766
        %v2784 = vsel %vm546, %v2776, %v2768
        %v2785 = vmul.f32 %v2781, %v558
        %v2786 = vmul.f32 %v2777, %v562
        %v2787 = vmul.f32 %v2782, %v558
        %v2788 = vmul.f32 %v2778, %v562
        %v2789 = vmul.f32 %v2783, %v558
        %v2790 = vmul.f32 %v2779, %v562
        %v2791 = vmul.f32 %v2784, %v558
        %v2792 = vmul.f32 %v2780, %v562
        %2793 = vset.pattern.permute.xlu0 28
        %2794 = vperm.xlu0 %2793, %v423
        %v2795 = vpop.permute.xlu0 %2794
        %2797 = vset.pattern.permute.xlu0 28
        %2798 = vperm.xlu0 %2797, %v424
        %v2799 = vpop.permute.xlu0 %2798
        %2801 = vset.pattern.permute.xlu0 28
        %2802 = vperm.xlu0 %2801, %v425
        %v2803 = vpop.permute.xlu0 %2802
        %2805 = vset.pattern.permute.xlu0 28
        %2806 = vperm.xlu0 %2805, %v426
        %v2807 = vpop.permute.xlu0 %2806
        %v2809 = vmul.f32 %v2785, %v2795
        %v2810 = vmul.f32 %v2786, %v2795
        %v2811 = vmul.f32 %v2787, %v2799
        %v2812 = vmul.f32 %v2788, %v2799
        %v2813 = vmul.f32 %v2789, %v2803
        %v2814 = vmul.f32 %v2790, %v2803
        %v2815 = vmul.f32 %v2791, %v2807
        %v2816 = vmul.f32 %v2792, %v2807
        %v2817 = vadd.f32 %v2753, %v2809
        %v2818 = vadd.f32 %v2754, %v2810
        %v2819 = vadd.f32 %v2755, %v2811
        %v2820 = vadd.f32 %v2756, %v2812
        %v2821 = vadd.f32 %v2757, %v2813
        %v2822 = vadd.f32 %v2758, %v2814
        %v2823 = vadd.f32 %v2759, %v2815
        %v2824 = vadd.f32 %v2760, %v2816
        %2825 = vrot.lane.b32.xlu0 %v2665, 15
        %v2826 = vpop.permute.xlu0 %2825
        %2827 = vrot.lane.b32.xlu0 %v2667, 15
        %v2828 = vpop.permute.xlu0 %2827
        %2829 = vrot.lane.b32.xlu0 %v2669, 15
        %v2830 = vpop.permute.xlu0 %2829
        %2831 = vrot.lane.b32.xlu0 %v2671, 15
        %v2832 = vpop.permute.xlu0 %2831
        %2833 = vrot.lane.b32.xlu0 %v2666, 15
        %v2834 = vpop.permute.xlu0 %2833
        %2835 = vrot.lane.b32.xlu0 %v2668, 15
        %v2836 = vpop.permute.xlu0 %2835
        %2837 = vrot.lane.b32.xlu0 %v2670, 15
        %v2838 = vpop.permute.xlu0 %2837
        %2839 = vrot.lane.b32.xlu0 %v2672, 15
        %v2840 = vpop.permute.xlu0 %2839
        %v2841 = vsel %vm619, %v2826, %v2834
        %v2842 = vsel %vm619, %v2828, %v2836
        %v2843 = vsel %vm619, %v2830, %v2838
        %v2844 = vsel %vm619, %v2832, %v2840
        %v2845 = vsel %vm619, %v2834, %v2826
        %v2846 = vsel %vm619, %v2836, %v2828
        %v2847 = vsel %vm619, %v2838, %v2830
        %v2848 = vsel %vm619, %v2840, %v2832
        %v2849 = vmul.f32 %v2845, %v631
        %v2850 = vmul.f32 %v2841, %v635
        %v2851 = vmul.f32 %v2846, %v631
        %v2852 = vmul.f32 %v2842, %v635
        %v2853 = vmul.f32 %v2847, %v631
        %v2854 = vmul.f32 %v2843, %v635
        %v2855 = vmul.f32 %v2848, %v631
        %v2856 = vmul.f32 %v2844, %v635
        %2857 = vset.pattern.permute.xlu0 29
        %2858 = vperm.xlu0 %2857, %v423
        %v2859 = vpop.permute.xlu0 %2858
        %2861 = vset.pattern.permute.xlu0 29
        %2862 = vperm.xlu0 %2861, %v424
        %v2863 = vpop.permute.xlu0 %2862
        %2865 = vset.pattern.permute.xlu0 29
        %2866 = vperm.xlu0 %2865, %v425
        %v2867 = vpop.permute.xlu0 %2866
        %2869 = vset.pattern.permute.xlu0 29
        %2870 = vperm.xlu0 %2869, %v426
        %v2871 = vpop.permute.xlu0 %2870
        %v2873 = vmul.f32 %v2849, %v2859
        %v2874 = vmul.f32 %v2850, %v2859
        %v2875 = vmul.f32 %v2851, %v2863
        %v2876 = vmul.f32 %v2852, %v2863
        %v2877 = vmul.f32 %v2853, %v2867
        %v2878 = vmul.f32 %v2854, %v2867
        %v2879 = vmul.f32 %v2855, %v2871
        %v2880 = vmul.f32 %v2856, %v2871
        %v2881 = vadd.f32 %v2817, %v2873
        %v2882 = vadd.f32 %v2818, %v2874
        %v2883 = vadd.f32 %v2819, %v2875
        %v2884 = vadd.f32 %v2820, %v2876
        %v2885 = vadd.f32 %v2821, %v2877
        %v2886 = vadd.f32 %v2822, %v2878
        %v2887 = vadd.f32 %v2823, %v2879
        %v2888 = vadd.f32 %v2824, %v2880
        %2889 = vrot.lane.b32.xlu0 %v2665, 1
        %v2890 = vpop.permute.xlu0 %2889
        %2891 = vrot.lane.b32.xlu0 %v2667, 1
        %v2892 = vpop.permute.xlu0 %2891
        %2893 = vrot.lane.b32.xlu0 %v2669, 1
        %v2894 = vpop.permute.xlu0 %2893
        %2895 = vrot.lane.b32.xlu0 %v2671, 1
        %v2896 = vpop.permute.xlu0 %2895
        %2897 = vrot.lane.b32.xlu0 %v2666, 1
        %v2898 = vpop.permute.xlu0 %2897
        %2899 = vrot.lane.b32.xlu0 %v2668, 1
        %v2900 = vpop.permute.xlu0 %2899
        %2901 = vrot.lane.b32.xlu0 %v2670, 1
        %v2902 = vpop.permute.xlu0 %2901
        %2903 = vrot.lane.b32.xlu0 %v2672, 1
        %v2904 = vpop.permute.xlu0 %2903
        %v2905 = vsel %vm692, %v2890, %v2898
        %v2906 = vsel %vm692, %v2892, %v2900
        %v2907 = vsel %vm692, %v2894, %v2902
        %v2908 = vsel %vm692, %v2896, %v2904
        %v2909 = vsel %vm692, %v2898, %v2890
        %v2910 = vsel %vm692, %v2900, %v2892
        %v2911 = vsel %vm692, %v2902, %v2894
        %v2912 = vsel %vm692, %v2904, %v2896
        %v2913 = vmul.f32 %v2909, %v704
        %v2914 = vmul.f32 %v2905, %v708
        %v2915 = vmul.f32 %v2910, %v704
        %v2916 = vmul.f32 %v2906, %v708
        %v2917 = vmul.f32 %v2911, %v704
        %v2918 = vmul.f32 %v2907, %v708
        %v2919 = vmul.f32 %v2912, %v704
        %v2920 = vmul.f32 %v2908, %v708
        %2921 = vset.pattern.permute.xlu0 30
        %2922 = vperm.xlu0 %2921, %v423
        %v2923 = vpop.permute.xlu0 %2922
        %2925 = vset.pattern.permute.xlu0 30
        %2926 = vperm.xlu0 %2925, %v424
        %v2927 = vpop.permute.xlu0 %2926
        %2929 = vset.pattern.permute.xlu0 30
        %2930 = vperm.xlu0 %2929, %v425
        %v2931 = vpop.permute.xlu0 %2930
        %2933 = vset.pattern.permute.xlu0 30
        %2934 = vperm.xlu0 %2933, %v426
        %v2935 = vpop.permute.xlu0 %2934
        %v2937 = vmul.f32 %v2913, %v2923
        %v2938 = vmul.f32 %v2914, %v2923
        %v2939 = vmul.f32 %v2915, %v2927
        %v2940 = vmul.f32 %v2916, %v2927
        %v2941 = vmul.f32 %v2917, %v2931
        %v2942 = vmul.f32 %v2918, %v2931
        %v2943 = vmul.f32 %v2919, %v2935
        %v2944 = vmul.f32 %v2920, %v2935
        %v2945 = vadd.f32 %v2881, %v2937
        %v2946 = vadd.f32 %v2882, %v2938
        %v2947 = vadd.f32 %v2883, %v2939
        %v2948 = vadd.f32 %v2884, %v2940
        %v2949 = vadd.f32 %v2885, %v2941
        %v2950 = vadd.f32 %v2886, %v2942
        %v2951 = vadd.f32 %v2887, %v2943
        %v2952 = vadd.f32 %v2888, %v2944
        %2953 = vrot.lane.b32.xlu0 %v2665, 127
        %v2954 = vpop.permute.xlu0 %2953
        %2955 = vrot.lane.b32.xlu0 %v2667, 127
        %v2956 = vpop.permute.xlu0 %2955
        %2957 = vrot.lane.b32.xlu0 %v2669, 127
        %v2958 = vpop.permute.xlu0 %2957
        %2959 = vrot.lane.b32.xlu0 %v2671, 127
        %v2960 = vpop.permute.xlu0 %2959
        %2961 = vrot.lane.b32.xlu0 %v2666, 127
        %v2962 = vpop.permute.xlu0 %2961
        %2963 = vrot.lane.b32.xlu0 %v2668, 127
        %v2964 = vpop.permute.xlu0 %2963
        %2965 = vrot.lane.b32.xlu0 %v2670, 127
        %v2966 = vpop.permute.xlu0 %2965
        %2967 = vrot.lane.b32.xlu0 %v2672, 127
        %v2968 = vpop.permute.xlu0 %2967
        %v2969 = vsel %vm765, %v2954, %v2962
        %v2970 = vsel %vm765, %v2956, %v2964
        %v2971 = vsel %vm765, %v2958, %v2966
        %v2972 = vsel %vm765, %v2960, %v2968
        %v2973 = vsel %vm765, %v2962, %v2954
        %v2974 = vsel %vm765, %v2964, %v2956
        %v2975 = vsel %vm765, %v2966, %v2958
        %v2976 = vsel %vm765, %v2968, %v2960
        %v2977 = vmul.f32 %v2969, %v777
        %v2978 = vmul.f32 %v2973, %v781
        %v2979 = vmul.f32 %v2970, %v777
        %v2980 = vmul.f32 %v2974, %v781
        %v2981 = vmul.f32 %v2971, %v777
        %v2982 = vmul.f32 %v2975, %v781
        %v2983 = vmul.f32 %v2972, %v777
        %v2984 = vmul.f32 %v2976, %v781
        %2985 = vset.pattern.permute.xlu0 32
        %2986 = vperm.xlu0 %2985, %v423
        %v2987 = vpop.permute.xlu0 %2986
        %2989 = vset.pattern.permute.xlu0 32
        %2990 = vperm.xlu0 %2989, %v424
        %v2991 = vpop.permute.xlu0 %2990
        %2993 = vset.pattern.permute.xlu0 32
        %2994 = vperm.xlu0 %2993, %v425
        %v2995 = vpop.permute.xlu0 %2994
        %2997 = vset.pattern.permute.xlu0 32
        %2998 = vperm.xlu0 %2997, %v426
        %v2999 = vpop.permute.xlu0 %2998
        %v3001 = vmul.f32 %v2977, %v2987
        %v3002 = vmul.f32 %v2978, %v2987
        %v3003 = vmul.f32 %v2979, %v2991
        %v3004 = vmul.f32 %v2980, %v2991
        %v3005 = vmul.f32 %v2981, %v2995
        %v3006 = vmul.f32 %v2982, %v2995
        %v3007 = vmul.f32 %v2983, %v2999
        %v3008 = vmul.f32 %v2984, %v2999
        %v3009 = vadd.f32 %v2945, %v3001
        %v3010 = vadd.f32 %v2946, %v3002
        %v3011 = vadd.f32 %v2947, %v3003
        %v3012 = vadd.f32 %v2948, %v3004
        %v3013 = vadd.f32 %v2949, %v3005
        %v3014 = vadd.f32 %v2950, %v3006
        %v3015 = vadd.f32 %v2951, %v3007
        %v3016 = vadd.f32 %v2952, %v3008
        %3017 = vrot.lane.b32.xlu0 %v2665, 113
        %v3018 = vpop.permute.xlu0 %3017
        %3019 = vrot.lane.b32.xlu0 %v2667, 113
        %v3020 = vpop.permute.xlu0 %3019
        %3021 = vrot.lane.b32.xlu0 %v2669, 113
        %v3022 = vpop.permute.xlu0 %3021
        %3023 = vrot.lane.b32.xlu0 %v2671, 113
        %v3024 = vpop.permute.xlu0 %3023
        %3025 = vrot.lane.b32.xlu0 %v2666, 113
        %v3026 = vpop.permute.xlu0 %3025
        %3027 = vrot.lane.b32.xlu0 %v2668, 113
        %v3028 = vpop.permute.xlu0 %3027
        %3029 = vrot.lane.b32.xlu0 %v2670, 113
        %v3030 = vpop.permute.xlu0 %3029
        %3031 = vrot.lane.b32.xlu0 %v2672, 113
        %v3032 = vpop.permute.xlu0 %3031
        %v3033 = vsel %vm838, %v3018, %v3026
        %v3034 = vsel %vm838, %v3020, %v3028
        %v3035 = vsel %vm838, %v3022, %v3030
        %v3036 = vsel %vm838, %v3024, %v3032
        %v3037 = vsel %vm838, %v3026, %v3018
        %v3038 = vsel %vm838, %v3028, %v3020
        %v3039 = vsel %vm838, %v3030, %v3022
        %v3040 = vsel %vm838, %v3032, %v3024
        %v3041 = vmul.f32 %v3033, %v850
        %v3042 = vmul.f32 %v3037, %v854
        %v3043 = vmul.f32 %v3034, %v850
        %v3044 = vmul.f32 %v3038, %v854
        %v3045 = vmul.f32 %v3035, %v850
        %v3046 = vmul.f32 %v3039, %v854
        %v3047 = vmul.f32 %v3036, %v850
        %v3048 = vmul.f32 %v3040, %v854
        %3049 = vset.pattern.permute.xlu0 33
        %3050 = vperm.xlu0 %3049, %v423
        %v3051 = vpop.permute.xlu0 %3050
        %3053 = vset.pattern.permute.xlu0 33
        %3054 = vperm.xlu0 %3053, %v424
        %v3055 = vpop.permute.xlu0 %3054
        %3057 = vset.pattern.permute.xlu0 33
        %3058 = vperm.xlu0 %3057, %v425
        %v3059 = vpop.permute.xlu0 %3058
        %3061 = vset.pattern.permute.xlu0 33
        %3062 = vperm.xlu0 %3061, %v426
        %v3063 = vpop.permute.xlu0 %3062
        %v3065 = vmul.f32 %v3041, %v3051
        %v3066 = vmul.f32 %v3042, %v3051
        %v3067 = vmul.f32 %v3043, %v3055
        %v3068 = vmul.f32 %v3044, %v3055
        %v3069 = vmul.f32 %v3045, %v3059
        %v3070 = vmul.f32 %v3046, %v3059
        %v3071 = vmul.f32 %v3047, %v3063
        %v3072 = vmul.f32 %v3048, %v3063
        %v3073 = vadd.f32 %v3009, %v3065
        %v3074 = vadd.f32 %v3010, %v3066
        %v3075 = vadd.f32 %v3011, %v3067
        %v3076 = vadd.f32 %v3012, %v3068
        %v3077 = vadd.f32 %v3013, %v3069
        %v3078 = vadd.f32 %v3014, %v3070
        %v3079 = vadd.f32 %v3015, %v3071
        %v3080 = vadd.f32 %v3016, %v3072
        %3081 = vrot.lane.b32.xlu0 %v2665, 112
        %v3082 = vpop.permute.xlu0 %3081
        %3083 = vrot.lane.b32.xlu0 %v2667, 112
        %v3084 = vpop.permute.xlu0 %3083
        %3085 = vrot.lane.b32.xlu0 %v2669, 112
        %v3086 = vpop.permute.xlu0 %3085
        %3087 = vrot.lane.b32.xlu0 %v2671, 112
        %v3088 = vpop.permute.xlu0 %3087
        %3089 = vrot.lane.b32.xlu0 %v2666, 112
        %v3090 = vpop.permute.xlu0 %3089
        %3091 = vrot.lane.b32.xlu0 %v2668, 112
        %v3092 = vpop.permute.xlu0 %3091
        %3093 = vrot.lane.b32.xlu0 %v2670, 112
        %v3094 = vpop.permute.xlu0 %3093
        %3095 = vrot.lane.b32.xlu0 %v2672, 112
        %v3096 = vpop.permute.xlu0 %3095
        %v3097 = vsel %vm911, %v3082, %v3090
        %v3098 = vsel %vm911, %v3084, %v3092
        %v3099 = vsel %vm911, %v3086, %v3094
        %v3100 = vsel %vm911, %v3088, %v3096
        %v3101 = vsel %vm911, %v3090, %v3082
        %v3102 = vsel %vm911, %v3092, %v3084
        %v3103 = vsel %vm911, %v3094, %v3086
        %v3104 = vsel %vm911, %v3096, %v3088
        %v3105 = vmul.f32 %v3097, %v923
        %v3106 = vmul.f32 %v3101, %v927
        %v3107 = vmul.f32 %v3098, %v923
        %v3108 = vmul.f32 %v3102, %v927
        %v3109 = vmul.f32 %v3099, %v923
        %v3110 = vmul.f32 %v3103, %v927
        %v3111 = vmul.f32 %v3100, %v923
        %v3112 = vmul.f32 %v3104, %v927
        %3113 = vset.pattern.permute.xlu0 34
        %3114 = vperm.xlu0 %3113, %v423
        %v3115 = vpop.permute.xlu0 %3114
        %3117 = vset.pattern.permute.xlu0 34
        %3118 = vperm.xlu0 %3117, %v424
        %v3119 = vpop.permute.xlu0 %3118
        %3121 = vset.pattern.permute.xlu0 34
        %3122 = vperm.xlu0 %3121, %v425
        %v3123 = vpop.permute.xlu0 %3122
        %3125 = vset.pattern.permute.xlu0 34
        %3126 = vperm.xlu0 %3125, %v426
        %v3127 = vpop.permute.xlu0 %3126
        %v3129 = vmul.f32 %v3105, %v3115
        %v3130 = vmul.f32 %v3106, %v3115
        %v3131 = vmul.f32 %v3107, %v3119
        %v3132 = vmul.f32 %v3108, %v3119
        %v3133 = vmul.f32 %v3109, %v3123
        %v3134 = vmul.f32 %v3110, %v3123
        %v3135 = vmul.f32 %v3111, %v3127
        %v3136 = vmul.f32 %v3112, %v3127
        %v3137 = vadd.f32 %v3073, %v3129
        %v3138 = vadd.f32 %v3074, %v3130
        %v3139 = vadd.f32 %v3075, %v3131
        %v3140 = vadd.f32 %v3076, %v3132
        %v3141 = vadd.f32 %v3077, %v3133
        %v3142 = vadd.f32 %v3078, %v3134
        %v3143 = vadd.f32 %v3079, %v3135
        %v3144 = vadd.f32 %v3080, %v3136
        %3145 = vrot.lane.b32.xlu0 %v2665, 111
        %v3146 = vpop.permute.xlu0 %3145
        %3147 = vrot.lane.b32.xlu0 %v2667, 111
        %v3148 = vpop.permute.xlu0 %3147
        %3149 = vrot.lane.b32.xlu0 %v2669, 111
        %v3150 = vpop.permute.xlu0 %3149
        %3151 = vrot.lane.b32.xlu0 %v2671, 111
        %v3152 = vpop.permute.xlu0 %3151
        %3153 = vrot.lane.b32.xlu0 %v2666, 111
        %v3154 = vpop.permute.xlu0 %3153
        %3155 = vrot.lane.b32.xlu0 %v2668, 111
        %v3156 = vpop.permute.xlu0 %3155
        %3157 = vrot.lane.b32.xlu0 %v2670, 111
        %v3158 = vpop.permute.xlu0 %3157
        %3159 = vrot.lane.b32.xlu0 %v2672, 111
        %v3160 = vpop.permute.xlu0 %3159
        %v3161 = vsel %vm984, %v3146, %v3154
        %v3162 = vsel %vm984, %v3148, %v3156
        %v3163 = vsel %vm984, %v3150, %v3158
        %v3164 = vsel %vm984, %v3152, %v3160
        %v3165 = vsel %vm984, %v3154, %v3146
        %v3166 = vsel %vm984, %v3156, %v3148
        %v3167 = vsel %vm984, %v3158, %v3150
        %v3168 = vsel %vm984, %v3160, %v3152
        %v3169 = vmul.f32 %v3161, %v996
        %v3170 = vmul.f32 %v3165, %v1000
        %v3171 = vmul.f32 %v3162, %v996
        %v3172 = vmul.f32 %v3166, %v1000
        %v3173 = vmul.f32 %v3163, %v996
        %v3174 = vmul.f32 %v3167, %v1000
        %v3175 = vmul.f32 %v3164, %v996
        %v3176 = vmul.f32 %v3168, %v1000
        %3177 = vset.pattern.permute.xlu0 35
        %3178 = vperm.xlu0 %3177, %v423
        %v3179 = vpop.permute.xlu0 %3178
        %3181 = vset.pattern.permute.xlu0 35
        %3182 = vperm.xlu0 %3181, %v424
        %v3183 = vpop.permute.xlu0 %3182
        %3185 = vset.pattern.permute.xlu0 35
        %3186 = vperm.xlu0 %3185, %v425
        %v3187 = vpop.permute.xlu0 %3186
        %3189 = vset.pattern.permute.xlu0 35
        %3190 = vperm.xlu0 %3189, %v426
        %v3191 = vpop.permute.xlu0 %3190
        %v3193 = vmul.f32 %v3169, %v3179
        %v3194 = vmul.f32 %v3170, %v3179
        %v3195 = vmul.f32 %v3171, %v3183
        %v3196 = vmul.f32 %v3172, %v3183
        %v3197 = vmul.f32 %v3173, %v3187
        %v3198 = vmul.f32 %v3174, %v3187
        %v3199 = vmul.f32 %v3175, %v3191
        %v3200 = vmul.f32 %v3176, %v3191
        %v3201 = vadd.f32 %v3137, %v3193
        %v3202 = vadd.f32 %v3138, %v3194
        %v3203 = vadd.f32 %v3139, %v3195
        %v3204 = vadd.f32 %v3140, %v3196
        %v3205 = vadd.f32 %v3141, %v3197
        %v3206 = vadd.f32 %v3142, %v3198
        %v3207 = vadd.f32 %v3143, %v3199
        %v3208 = vadd.f32 %v3144, %v3200
        %v3209 = vld [vmem:[%s6] sm:$0xff]
        %v3210 = vld [vmem:[%s6 + $0x8] sm:$0xff]
        %v3211 = vld [vmem:[%s6 + $0x10] sm:$0xff]
        %v3212 = vld [vmem:[%s6 + $0x18] sm:$0xff]
        %v3213 = vld [vmem:[%s6 + $0x20] sm:$0xff]
        %v3214 = vld [vmem:[%s7] sm:$0xff]
        %v3215 = vld [vmem:[%s7 + $0x8] sm:$0xff]
        %v3216 = vld [vmem:[%s7 + $0x10] sm:$0xff]
        %v3217 = vld [vmem:[%s7 + $0x18] sm:$0xff]
        %v3218 = vld [vmem:[%s7 + $0x20] sm:$0xff]
        %3220 = vset.pattern.permute.xlu0 0
        %3221 = vperm.xlu0 %3220, %v3214
        %v3222 = vpop.permute.xlu0 %3221
        %3225 = vset.pattern.permute.xlu0 0
        %3226 = vperm.xlu0 %3225, %v3215
        %v3227 = vpop.permute.xlu0 %3226
        %3230 = vset.pattern.permute.xlu0 0
        %3231 = vperm.xlu0 %3230, %v3216
        %v3232 = vpop.permute.xlu0 %3231
        %3235 = vset.pattern.permute.xlu0 0
        %3236 = vperm.xlu0 %3235, %v3217
        %v3237 = vpop.permute.xlu0 %3236
        %3240 = vset.pattern.permute.xlu0 0
        %3241 = vperm.xlu0 %3240, %v3218
        %v3242 = vpop.permute.xlu0 %3241
        %v3245 = vsel %vm1069, %v3209, 0
        %v3248 = vsel %vm1069, %v3210, 0
        %v3251 = vsel %vm1069, %v3211, 0
        %v3254 = vsel %vm1069, %v3212, 0
        %v3257 = vsel %vm1069, %v3213, 0
        %3259 = vmatprep.subr.mxu0 %v3202
        %3260 = vmatpush1.msra.mxu0 %v3201
        %3261 = vmatprep.subr.mxu0 %v3204
        %3262 = vmatpush1.msra.mxu0 %v3203
        %3263 = vmatprep.subr.mxu0 %v3206
        %3264 = vmatpush1.msra.mxu0 %v3205
        %3265 = vmatprep.subr.mxu0 %v3208
        %3266 = vmatpush1.msra.mxu0 %v3207
        %3267 = vmatprep.subr.mxu0 0.0
        %3268 = vmatpush1.msra.mxu0 0.0
        %3269 = vmatprep.subr.mxu0 0.0
        %3270 = vmatpush1.msra.mxu0 0.0
        %3271 = vmatprep.subr.mxu0 0.0
        %3272 = vmatpush1.msra.mxu0 0.0
        %3273 = vmatprep.subr.mxu0 0.0
        %3274 = vmatpush1.msra.mxu0 0.0
        %3275 = vmatprep.subr.mxu0 0.0
        %3276 = vmatpush1.msra.mxu0 0.0
        %3277 = vmatprep.subr.mxu0 0.0
        %3278 = vmatpush1.msra.mxu0 0.0
        %3279 = vmatprep.subr.mxu0 0.0
        %3280 = vmatpush1.msra.mxu0 0.0
        %3281 = vmatprep.subr.mxu0 0.0
        %3282 = vmatpush1.msra.mxu0 0.0
        %3283 = vmatprep.subr.mxu0 0.0
        %3284 = vmatpush1.msra.mxu0 0.0
        %3285 = vmatprep.subr.mxu0 0.0
        %3286 = vmatpush1.msra.mxu0 0.0
        %3287 = vmatprep.subr.mxu0 0.0
        %3288 = vmatpush1.msra.mxu0 0.0
        %3289 = vmatprep.subr.mxu0 0.0
        %3290 = vmatpush1.msra.mxu0 0.0
        %3291 = vmatprep.subr.mxu0 0.0
        %3292 = vmatpush1.msra.mxu0 0.0
        %3293 = vmatprep.subr.mxu0 0.0
        %3294 = vmatpush1.msra.mxu0 0.0
        %3295 = vmatprep.subr.mxu0 0.0
        %3296 = vmatpush1.msra.mxu0 0.0
        %3297 = vmatprep.subr.mxu0 0.0
        %3298 = vmatpush1.msra.mxu0 0.0
        %3299 = vmatprep.subr.mxu0 0.0
        %3300 = vmatpush1.msra.mxu0 0.0
        %3301 = vmatprep.subr.mxu0 0.0
        %3302 = vmatpush1.msra.mxu0 0.0
        %3303 = vmatprep.subr.mxu0 0.0
        %3304 = vmatpush1.msra.mxu0 0.0
        %3305 = vmatprep.subr.mxu0 0.0
        %3306 = vmatpush1.msra.mxu0 0.0
        %3307 = vmatprep.subr.mxu0 0.0
        %3308 = vmatpush1.msra.mxu0 0.0
        %3309 = vmatprep.subr.mxu0 0.0
        %3310 = vmatpush1.msra.mxu0 0.0
        %3311 = vmatprep.subr.mxu0 0.0
        %3312 = vmatpush1.msra.mxu0 0.0
        %3313 = vmatprep.subr.mxu0 0.0
        %3314 = vmatpush1.msra.mxu0 0.0
        %3315 = vmatprep.subr.mxu0 0.0
        %3316 = vmatpush1.msra.mxu0 0.0
        %3317 = vmatprep.subr.mxu0 0.0
        %3318 = vmatpush1.msra.mxu0 0.0
        %3319 = vmatprep.subr.mxu0 0.0
        %3320 = vmatpush1.msra.mxu0 0.0
        %3321 = vmatprep.subr.mxu0 0.0
        %3322 = vmatpush1.msra.mxu0 0.0
        %3323 = vmatprep.mubr.f32.mxu0 0.0
        %3324 = vmatmul.mubr.f32.gmra.mrb[0].mxu0 %v3245
        %v3325 = vpop.f32.mrb[0].mxu0
        %v3326 = vadd.f32 %v3222, %v3325
        %v3327 = vpop.f32.mrb[0].mxu0
        %v3328 = vadd.f32 %v3222, %v3327
        %3329 = vmatprep.mubr.f32.mxu0 0.0
        %3330 = vmatmul.mubr.f32.gmra.mrb[0].mxu0 %v3248
        %v3331 = vpop.f32.mrb[0].mxu0
        %v3332 = vadd.f32 %v3227, %v3331
        %v3333 = vpop.f32.mrb[0].mxu0
        %v3334 = vadd.f32 %v3227, %v3333
        %3335 = vmatprep.mubr.f32.mxu0 0.0
        %3336 = vmatmul.mubr.f32.gmra.mrb[0].mxu0 %v3251
        %v3337 = vpop.f32.mrb[0].mxu0
        %v3338 = vadd.f32 %v3232, %v3337
        %v3339 = vpop.f32.mrb[0].mxu0
        %v3340 = vadd.f32 %v3232, %v3339
        %3341 = vmatprep.mubr.f32.mxu0 0.0
        %3342 = vmatmul.mubr.f32.gmra.mrb[0].mxu0 %v3254
        %v3343 = vpop.f32.mrb[0].mxu0
        %v3344 = vadd.f32 %v3237, %v3343
        %v3345 = vpop.f32.mrb[0].mxu0
        %v3346 = vadd.f32 %v3237, %v3345
        %3347 = vmatprep.mubr.f32.mxu0 0.0
        %3348 = vmatmul.mubr.f32.gmra.mrb[0].mxu0 %v3257
        %v3349 = vpop.f32.mrb[0].mxu0
        %v3350 = vadd.f32 %v3242, %v3349
        %v3351 = vpop.f32.mrb[0].mxu0
        %v3352 = vadd.f32 %v3242, %v3351
        %3353 = vdwg.mxu0
        %3354 = vst [vmem:[%s396] sm:$0xff] %v3326
        %3355 = vst [vmem:[%s396 + $0x8] sm:$0xff] %v3328
        %3356 = vst [vmem:[%s396 + $0x10] sm:$0xff] %v3332
        %3357 = vst [vmem:[%s396 + $0x18] sm:$0xff] %v3334
        %3358 = vst [vmem:[%s396 + $0x20] sm:$0xff] %v3338
        %3359 = vst [vmem:[%s396 + $0x28] sm:$0xff] %v3340
        %3360 = vst [vmem:[%s396 + $0x30] sm:$0xff] %v3344
        %3361 = vst [vmem:[%s396 + $0x38] sm:$0xff] %v3346
        %3362 = vst [vmem:[%s396 + $0x40] sm:$0xff] %v3350
        %3363 = vst [vmem:[%s396 + $0x48] sm:$0xff] %v3352
        %s3364 = sand.u32 %s210, 1
        %s3365 = scalar_lea.sflag [#allocation7], %s3364
        %s3366 = sand.u32 %s210, 1
        %s3367 = smul.addr %s3366, 80
        %s3368 = scalar_lea.vmem [#allocation8], %s3367
        // Predicated region
        $region76: #{tpu_custom_call.1} parent=66 // pred_check
          %p3369 = pneg %p220
        $region77: #{tpu_custom_call.1} parent=66 // pred_check_branch
          %3371 = sbr.rel (%p3369) target = $region79
        $region78: #{tpu_custom_call.1} parent=66 // pred_region
          %s3372 = smul.u32 2, %s31
          %s3374 = ssub.s32 1280, 1280
          %3375 = vsyncadd %s3365, %s3374
          %s3376 = smul.addr %s3372, 128
          %s3377 = scalar_lea.hbm %s8, %s3376
          %s3378 = sshll.u32 %s3368, 4
          %s3379 = int_to_ptr.vmem [resolvable:$true] %s3378
          %3384 = dma.vmem_to_hbm [thread:$0]  %s3379, 1280, %s3377, %s3365, 256, 768, 16
        $region79: #{tpu_custom_call.1} parent=66 // pred_fallthru
          _
      $region67: #{tpu_custom_call.1} parent=5 // pred_fallthru
        _
      %p3385 = scmp.le.s32.totalorder 2, %s26
      // Predicated region
      $region80: #{tpu_custom_call.1} parent=5 // pred_check
        %p3386 = pneg %p3385
      $region81: #{tpu_custom_call.1} parent=5 // pred_check_branch
        %3388 = sbr.rel (%p3386) target = $region83
      $region82: #{tpu_custom_call.1} parent=5 // pred_region
        %s3389 = ssub.s32 %s26, 2
        // Predicated region
        $region84: #{tpu_custom_call.1} parent=82 // pred_check
          %p3390 = pneg %p226
        $region85: #{tpu_custom_call.1} parent=82 // pred_check_branch
          %3392 = sbr.rel (%p3390) target = $region87
        $region86: #{tpu_custom_call.1} parent=82 // pred_region
          %s3393 = sand.u32 %s211, 1
          %s3394 = scalar_lea.sflag [#allocation7], %s3393
          %s3395 = sand.u32 %s211, 1
          %s3396 = smul.addr %s3395, 80
          %s3397 = scalar_lea.vmem [#allocation8], %s3396
          %3398 = dma.done %s3394, 1280
        $region87: #{tpu_custom_call.1} parent=82 // pred_fallthru
          _
      $region83: #{tpu_custom_call.1} parent=5 // pred_fallthru
        _
    $region6: #{tpu_custom_call.1} parent=1 // loop_footer
      %s30 = sadd.s32 1, %s26
    $region7: #{tpu_custom_call.1} parent=1 // loop_footer_branch
      %25 = sbr.rel target = $region3
    $region8: #{tpu_custom_call.1} parent=1 // loop_exit
      _
    %3399 = vsyncpa [#allocation6], 1
    %s3400 = scalar_lea.sflag [#allocation6], 1
    %3401 = vsyncpa %s3400, 1
    %3402 = vsyncpa [#allocation7], 1
    %s3403 = scalar_lea.sflag [#allocation7], 1
    %3404 = vsyncpa %s3403, 1

</llo_original>
